<compile_context>
chip_gen: v6e
topology: v6e:2x2x1
jax: 0.10.0
libtpu: 0.0.40
codegen_flags: <defaults>
</compile_context>

<pallas_src>
import jax
import jax.numpy as jnp
from jax.experimental import pallas as pl
from jax.experimental.pallas import tpu as pltpu

HIDDEN = 64
BOTTLENECK = 32


def ae_clf_kernel(x_ref,
                  w1_ref, b1_ref, w2_ref, b2_ref,
                  w3_ref, b3_ref, w4_ref, b4_ref,
                  wc8_ref, bc_ref,
                  y_ref, recon_ref):
    # x tile [TB, D]; bf16 MXU operands, f32 accumulation.
    x = x_ref[...].astype(jnp.bfloat16)

    # ---- encoder ----------------------------------------------------------
    h1 = jnp.dot(x, w1_ref[...], preferred_element_type=jnp.float32) + b1_ref[...]
    h1 = jnp.maximum(h1, 0.0)
    z = jnp.dot(h1.astype(jnp.bfloat16), w2_ref[...],
                preferred_element_type=jnp.float32) + b2_ref[...]
    z = jnp.maximum(z, 0.0)
    z_bf = z.astype(jnp.bfloat16)

    # ---- classifier head (lane-dense) -------------------------------------
    # (8, bott) @ (TB, bott)^T -> (8, TB); every row of wc8 is Wc^T, take row 0.
    # Output is a (1, TB) row -> unmasked, lane-dense stores + contiguous DMA.
    y8 = jnp.einsum('md,nd->mn', wc8_ref[...], z_bf,
                    preferred_element_type=jnp.float32)
    y_ref[...] = (y8[0:1, :] + bc_ref[...]).astype(y_ref.dtype)

    # ---- decoder -----------------------------------------------------------
    d1 = jnp.dot(z_bf, w3_ref[...], preferred_element_type=jnp.float32) + b3_ref[...]
    d1 = jnp.maximum(d1, 0.0)
    recon = jnp.dot(d1.astype(jnp.bfloat16), w4_ref[...],
                    preferred_element_type=jnp.float32) + b4_ref[...]
    recon_ref[...] = recon.astype(recon_ref.dtype)


def autoencoder_classifier(x, params, *, block_rows=1024, recon_dtype=jnp.float32):
    """x: [B, D] float32.  params: dict of [in, out] weights / [1, out] biases.

    block_rows: batch tile (multiple of 128).  Sweep 512/1024/2048; use
    2048-4096 on v7x (pick jointly with B so each TensorCore gets several
    grid steps).
    """
    B, D = x.shape
    hidden = params["w1"].shape[1]
    bott = params["w2"].shape[1]
    assert hidden == HIDDEN and bott == BOTTLENECK

    # --- weights: bf16 MXU operands; classifier as an 8-row lhs ---------------
    w1 = params["w1"].astype(jnp.bfloat16)
    w2 = params["w2"].astype(jnp.bfloat16)
    w3 = params["w3"].astype(jnp.bfloat16)
    w4 = params["w4"].astype(jnp.bfloat16)
    b1 = params["b1"].astype(jnp.float32)
    b2 = params["b2"].astype(jnp.float32)
    b3 = params["b3"].astype(jnp.float32)
    b4 = params["b4"].astype(jnp.float32)
    wc8 = jnp.tile(params["wc"].astype(jnp.bfloat16).T, (8, 1))   # (8, bott)
    bc = params["bc"].astype(jnp.float32).reshape(1, 1)           # (1, 1)

    # --- batch tiling ----------------------------------------------------------
    TB = int(block_rows)
    assert TB % 128 == 0, "block_rows must be a multiple of 128"
    Bp = ((B + TB - 1) // TB) * TB
    xp = x if Bp == B else jnp.pad(x, ((0, Bp - B), (0, 0)))
    grid = (Bp // TB,)

    flops = 2 * Bp * (D * hidden + hidden * bott + bott * hidden
                      + hidden * D + bott * 8)
    bytes_accessed = (
        Bp * D * 4                                     # x in
        + Bp * D * jnp.dtype(recon_dtype).itemsize     # recon out
        + Bp * 4                                       # logits out
        + sum(int(a.size) * a.dtype.itemsize
              for a in (w1, b1, w2, b2, w3, b3, w4, b4, wc8, bc))
    )

    def ws(shape):
        return pl.BlockSpec(shape, lambda i: (0, 0))   # VMEM-resident weights

    y_row, recon = pl.pallas_call(
        ae_clf_kernel,
        out_shape=(
            jax.ShapeDtypeStruct((1, Bp), jnp.float32),   # classifier logits (row)
            jax.ShapeDtypeStruct((Bp, D), recon_dtype),   # reconstruction
        ),
        grid=grid,
        in_specs=[
            pl.BlockSpec((TB, D), lambda i: (i, 0)),          # x tile
            ws((D, hidden)), ws((1, hidden)),                 # W1, b1
            ws((hidden, bott)), ws((1, bott)),                # W2, b2
            ws((bott, hidden)), ws((1, hidden)),              # W3, b3
            ws((hidden, D)), ws((1, D)),                      # W4, b4
            ws((8, bott)), ws((1, 1)),                        # Wc^T (x8), bc
        ],
        out_specs=(
            pl.BlockSpec((1, TB), lambda i: (0, i)),          # lane-dense logits
            pl.BlockSpec((TB, D), lambda i: (i, 0)),
        ),
        compiler_params=pltpu.CompilerParams(
            dimension_semantics=("parallel",),       # 2 TCs on v7x, no-op v5e/v6e
            vmem_limit_bytes=32 * 1024 * 1024,
        ),
        cost_estimate=pl.CostEstimate(
            flops=flops, transcendentals=0, bytes_accessed=bytes_accessed),
    )(xp, w1, b1, w2, b2, w3, b3, w4, b4, wc8, bc)

    # squeeze(-1) as in the PyTorch forward; drop batch padding
    return y_row[0, :B], recon[:B]


def init_params(key, input_dim, bottleneck=32, hidden=64):
    """PyTorch-style nn.Linear init, weights pre-transposed to [in, out], f32."""
    def lin(k, fan_in, fan_out):
        kw, kb = jax.random.split(k)
        bound = 1.0 / jnp.sqrt(fan_in)
        w = jax.random.uniform(kw, (fan_in, fan_out), jnp.float32, -bound, bound)
        b = jax.random.uniform(kb, (1, fan_out), jnp.float32, -bound, bound)
        return w, b

    k1, k2, k3, k4, k5 = jax.random.split(key, 5)
    w1, b1 = lin(k1, input_dim, hidden)      # encoder.0
    w2, b2 = lin(k2, hidden, bottleneck)     # encoder.2
    w3, b3 = lin(k3, bottleneck, hidden)     # decoder.0
    w4, b4 = lin(k4, hidden, input_dim)      # decoder.2
    wc, bc = lin(k5, bottleneck, 1)          # classifier
    return dict(w1=w1, b1=b1, w2=w2, b2=b2, w3=w3, b3=b3,
                w4=w4, b4=b4, wc=wc, bc=bc)


def reference(x, p):
    """Pure-JAX f32 reference of the PyTorch forward."""
    h1 = jnp.maximum(x @ p["w1"] + p["b1"], 0.0)
    z = jnp.maximum(h1 @ p["w2"] + p["b2"], 0.0)
    d1 = jnp.maximum(z @ p["w3"] + p["b3"], 0.0)
    recon = d1 @ p["w4"] + p["b4"]
    y = (z @ p["wc"] + p["bc"])[:, 0]
    return y, recon


if __name__ == "__main__":
    key = jax.random.PRNGKey(0)
    kx, kp = jax.random.split(key)

    B, D = 512, 128          # batch, input_dim
    x = jax.random.normal(kx, (B, D), jnp.float32)
    params = init_params(kp, input_dim=D, bottleneck=BOTTLENECK, hidden=HIDDEN)

    # Default tile (1024): single padded batch tile.
    y, recon = autoencoder_classifier(x, params)
    jax.block_until_ready((y, recon))

    # Smaller tile: exercises the multi-step grid / index_maps.
    y2, recon2 = autoencoder_classifier(x, params, block_rows=256)
    jax.block_until_ready((y2, recon2))

    y_ref, recon_ref = reference(x, params)
    assert y.shape == (B,) and recon.shape == (B, D)
    # bf16 MXU operands vs f32 reference -> loosened tolerance
    assert jnp.allclose(y, y_ref, atol=2e-2, rtol=2e-2)
    assert jnp.allclose(recon, recon_ref, atol=2e-2, rtol=2e-2)
    assert jnp.allclose(y2, y_ref, atol=2e-2, rtol=2e-2)
    assert jnp.allclose(recon2, recon_ref, atol=2e-2, rtol=2e-2)

    print("KERNEL_OK")
</pallas_src>

<mosaic_0001>
module attributes {stable_mosaic.version = 11 : i64} {
  func.func @ae_clf_kernel(%arg0: i32, %arg1: memref<1024x128xf32, #tpu.memory_space<vmem>>, %arg2: memref<128x64xbf16, #tpu.memory_space<vmem>>, %arg3: memref<1x64xf32, #tpu.memory_space<vmem>>, %arg4: memref<64x32xbf16, #tpu.memory_space<vmem>>, %arg5: memref<1x32xf32, #tpu.memory_space<vmem>>, %arg6: memref<32x64xbf16, #tpu.memory_space<vmem>>, %arg7: memref<1x64xf32, #tpu.memory_space<vmem>>, %arg8: memref<64x128xbf16, #tpu.memory_space<vmem>>, %arg9: memref<1x128xf32, #tpu.memory_space<vmem>>, %arg10: memref<8x32xbf16, #tpu.memory_space<vmem>>, %arg11: memref<1x1xf32, #tpu.memory_space<vmem>>, %arg12: memref<1x1024xf32, #tpu.memory_space<vmem>>, %arg13: memref<1024x128xf32, #tpu.memory_space<vmem>>) attributes {dimension_semantics = [#tpu.dimension_semantics<parallel>], iteration_bounds = array<i64: 1>, scalar_prefetch = 0 : i64, scratch_operands = 0 : i64, tpu.core_type = #tpu.core_type<tc>, window_params = [{transform_indices = @transform_0, window_bounds = array<i64: 1024, 128>}, {pipeline_mode = #tpu.pipeline_mode<synchronous>, transform_indices = @transform_1, window_bounds = array<i64: 128, 64>}, {pipeline_mode = #tpu.pipeline_mode<synchronous>, transform_indices = @transform_2, window_bounds = array<i64: 1, 64>}, {pipeline_mode = #tpu.pipeline_mode<synchronous>, transform_indices = @transform_3, window_bounds = array<i64: 64, 32>}, {pipeline_mode = #tpu.pipeline_mode<synchronous>, transform_indices = @transform_4, window_bounds = array<i64: 1, 32>}, {pipeline_mode = #tpu.pipeline_mode<synchronous>, transform_indices = @transform_5, window_bounds = array<i64: 32, 64>}, {pipeline_mode = #tpu.pipeline_mode<synchronous>, transform_indices = @transform_6, window_bounds = array<i64: 1, 64>}, {pipeline_mode = #tpu.pipeline_mode<synchronous>, transform_indices = @transform_7, window_bounds = array<i64: 64, 128>}, {pipeline_mode = #tpu.pipeline_mode<synchronous>, transform_indices = @transform_8, window_bounds = array<i64: 1, 128>}, {pipeline_mode = #tpu.pipeline_mode<synchronous>, transform_indices = @transform_9, window_bounds = array<i64: 8, 32>}, {pipeline_mode = #tpu.pipeline_mode<synchronous>, transform_indices = @transform_10, window_bounds = array<i64: 1, 1>}, {transform_indices = @transform_11, window_bounds = array<i64: 1, 1024>}, {transform_indices = @transform_12, window_bounds = array<i64: 1024, 128>}]} {
    %c0 = arith.constant 0 : index
    %c0_0 = arith.constant 0 : index
    %0 = vector.load %arg1[%c0, %c0_0] : memref<1024x128xf32, #tpu.memory_space<vmem>>, vector<1024x128xf32>
    %1 = arith.truncf %0 : vector<1024x128xf32> to vector<1024x128xbf16>
    %c0_1 = arith.constant 0 : index
    %c0_2 = arith.constant 0 : index
    %2 = vector.load %arg2[%c0_1, %c0_2] : memref<128x64xbf16, #tpu.memory_space<vmem>>, vector<128x64xbf16>
    %cst = arith.constant dense<0.000000e+00> : vector<1024x64xf32>
    %3 = tpu.matmul %1, %2, %cst {dimension_numbers = #tpu.dot_dimension_numbers<[1], [0], [0], [1], [0, 0, 1, 1], [], []>} : vector<1024x128xbf16>, vector<128x64xbf16>, vector<1024x64xf32> -> vector<1024x64xf32>
    %c0_3 = arith.constant 0 : index
    %c0_4 = arith.constant 0 : index
    %4 = vector.load %arg3[%c0_3, %c0_4] : memref<1x64xf32, #tpu.memory_space<vmem>>, vector<1x64xf32>
    %5 = vector.broadcast %4 : vector<1x64xf32> to vector<1024x64xf32>
    %6 = arith.addf %3, %5 : vector<1024x64xf32>
    %cst_5 = arith.constant 0.000000e+00 : f32
    %7 = vector.broadcast %cst_5 : f32 to vector<1024x64xf32>
    %8 = arith.maximumf %6, %7 : vector<1024x64xf32>
    %9 = arith.truncf %8 : vector<1024x64xf32> to vector<1024x64xbf16>
    %c0_6 = arith.constant 0 : index
    %c0_7 = arith.constant 0 : index
    %10 = vector.load %arg4[%c0_6, %c0_7] : memref<64x32xbf16, #tpu.memory_space<vmem>>, vector<64x32xbf16>
    %cst_8 = arith.constant dense<0.000000e+00> : vector<1024x32xf32>
    %11 = tpu.matmul %9, %10, %cst_8 {dimension_numbers = #tpu.dot_dimension_numbers<[1], [0], [0], [1], [0, 0, 1, 1], [], []>} : vector<1024x64xbf16>, vector<64x32xbf16>, vector<1024x32xf32> -> vector<1024x32xf32>
    %c0_9 = arith.constant 0 : index
    %c0_10 = arith.constant 0 : index
    %12 = vector.load %arg5[%c0_9, %c0_10] : memref<1x32xf32, #tpu.memory_space<vmem>>, vector<1x32xf32>
    %13 = vector.broadcast %12 : vector<1x32xf32> to vector<1024x32xf32>
    %14 = arith.addf %11, %13 : vector<1024x32xf32>
    %cst_11 = arith.constant 0.000000e+00 : f32
    %15 = vector.broadcast %cst_11 : f32 to vector<1024x32xf32>
    %16 = arith.maximumf %14, %15 : vector<1024x32xf32>
    %17 = arith.truncf %16 : vector<1024x32xf32> to vector<1024x32xbf16>
    %c0_12 = arith.constant 0 : index
    %c0_13 = arith.constant 0 : index
    %18 = vector.load %arg10[%c0_12, %c0_13] : memref<8x32xbf16, #tpu.memory_space<vmem>>, vector<8x32xbf16>
    "tpu.trace_start"() <{level = 10 : i32, message = "md,nd->mn"}> : () -> ()
    %cst_14 = arith.constant dense<0.000000e+00> : vector<8x1024xf32>
    %19 = tpu.matmul %18, %17, %cst_14 {dimension_numbers = #tpu.dot_dimension_numbers<[1], [1], [0], [0], [0, 0, 1, 0], [], []>} : vector<8x32xbf16>, vector<1024x32xbf16>, vector<8x1024xf32> -> vector<8x1024xf32>
    "tpu.trace_stop"() : () -> ()
    %20 = vector.extract_strided_slice %19 {offsets = [0, 0], sizes = [1, 1024], strides = [1, 1]} : vector<8x1024xf32> to vector<1x1024xf32>
    %c0_15 = arith.constant 0 : index
    %c0_16 = arith.constant 0 : index
    %21 = vector.load %arg11[%c0_15, %c0_16] : memref<1x1xf32, #tpu.memory_space<vmem>>, vector<1x1xf32>
    %22 = vector.broadcast %21 : vector<1x1xf32> to vector<1x1024xf32>
    %23 = arith.addf %20, %22 : vector<1x1024xf32>
    %c0_17 = arith.constant 0 : index
    %c0_18 = arith.constant 0 : index
    %24 = vector.load %arg12[%c0_17, %c0_18] : memref<1x1024xf32, #tpu.memory_space<vmem>>, vector<1x1024xf32>
    tpu.vector_store %arg12[%c0_17, %c0_18], %23 {strides = array<i32>} : memref<1x1024xf32, #tpu.memory_space<vmem>>, vector<1x1024xf32>,
    %c0_19 = arith.constant 0 : index
    %c0_20 = arith.constant 0 : index
    %25 = vector.load %arg6[%c0_19, %c0_20] : memref<32x64xbf16, #tpu.memory_space<vmem>>, vector<32x64xbf16>
    %cst_21 = arith.constant dense<0.000000e+00> : vector<1024x64xf32>
    %26 = tpu.matmul %17, %25, %cst_21 {dimension_numbers = #tpu.dot_dimension_numbers<[1], [0], [0], [1], [0, 0, 1, 1], [], []>} : vector<1024x32xbf16>, vector<32x64xbf16>, vector<1024x64xf32> -> vector<1024x64xf32>
    %c0_22 = arith.constant 0 : index
    %c0_23 = arith.constant 0 : index
    %27 = vector.load %arg7[%c0_22, %c0_23] : memref<1x64xf32, #tpu.memory_space<vmem>>, vector<1x64xf32>
    %28 = vector.broadcast %27 : vector<1x64xf32> to vector<1024x64xf32>
    %29 = arith.addf %26, %28 : vector<1024x64xf32>
    %cst_24 = arith.constant 0.000000e+00 : f32
    %30 = vector.broadcast %cst_24 : f32 to vector<1024x64xf32>
    %31 = arith.maximumf %29, %30 : vector<1024x64xf32>
    %32 = arith.truncf %31 : vector<1024x64xf32> to vector<1024x64xbf16>
    %c0_25 = arith.constant 0 : index
    %c0_26 = arith.constant 0 : index
    %33 = vector.load %arg8[%c0_25, %c0_26] : memref<64x128xbf16, #tpu.memory_space<vmem>>, vector<64x128xbf16>
    %cst_27 = arith.constant dense<0.000000e+00> : vector<1024x128xf32>
    %34 = tpu.matmul %32, %33, %cst_27 {dimension_numbers = #tpu.dot_dimension_numbers<[1], [0], [0], [1], [0, 0, 1, 1], [], []>} : vector<1024x64xbf16>, vector<64x128xbf16>, vector<1024x128xf32> -> vector<1024x128xf32>
    %c0_28 = arith.constant 0 : index
    %c0_29 = arith.constant 0 : index
    %35 = vector.load %arg9[%c0_28, %c0_29] : memref<1x128xf32, #tpu.memory_space<vmem>>, vector<1x128xf32>
    %36 = vector.broadcast %35 : vector<1x128xf32> to vector<1024x128xf32>
    %37 = arith.addf %34, %36 : vector<1024x128xf32>
    %c0_30 = arith.constant 0 : index
    %c0_31 = arith.constant 0 : index
    %38 = vector.load %arg13[%c0_30, %c0_31] : memref<1024x128xf32, #tpu.memory_space<vmem>>, vector<1024x128xf32>
    tpu.vector_store %arg13[%c0_30, %c0_31], %37 {strides = array<i32>} : memref<1024x128xf32, #tpu.memory_space<vmem>>, vector<1024x128xf32>,
    return
  }
  func.func @transform_0(%arg0: i32) -> (i32, i32) {
    %c0_i32 = arith.constant 0 : i32
    %c0_i32_0 = arith.constant 0 : i32
    return %arg0, %c0_i32 : i32, i32
  }
  func.func @transform_1(%arg0: i32) -> (i32, i32) {
    %c0_i32 = arith.constant 0 : i32
    %c0_i32_0 = arith.constant 0 : i32
    %c0_i32_1 = arith.constant 0 : i32
    return %c0_i32, %c0_i32_0 : i32, i32
  }
  func.func @transform_2(%arg0: i32) -> (i32, i32) {
    %c0_i32 = arith.constant 0 : i32
    %c0_i32_0 = arith.constant 0 : i32
    %c0_i32_1 = arith.constant 0 : i32
    return %c0_i32, %c0_i32_0 : i32, i32
  }
  func.func @transform_3(%arg0: i32) -> (i32, i32) {
    %c0_i32 = arith.constant 0 : i32
    %c0_i32_0 = arith.constant 0 : i32
    %c0_i32_1 = arith.constant 0 : i32
    return %c0_i32, %c0_i32_0 : i32, i32
  }
  func.func @transform_4(%arg0: i32) -> (i32, i32) {
    %c0_i32 = arith.constant 0 : i32
    %c0_i32_0 = arith.constant 0 : i32
    %c0_i32_1 = arith.constant 0 : i32
    return %c0_i32, %c0_i32_0 : i32, i32
  }
  func.func @transform_5(%arg0: i32) -> (i32, i32) {
    %c0_i32 = arith.constant 0 : i32
    %c0_i32_0 = arith.constant 0 : i32
    %c0_i32_1 = arith.constant 0 : i32
    return %c0_i32, %c0_i32_0 : i32, i32
  }
  func.func @transform_6(%arg0: i32) -> (i32, i32) {
    %c0_i32 = arith.constant 0 : i32
    %c0_i32_0 = arith.constant 0 : i32
    %c0_i32_1 = arith.constant 0 : i32
    return %c0_i32, %c0_i32_0 : i32, i32
  }
  func.func @transform_7(%arg0: i32) -> (i32, i32) {
    %c0_i32 = arith.constant 0 : i32
    %c0_i32_0 = arith.constant 0 : i32
    %c0_i32_1 = arith.constant 0 : i32
    return %c0_i32, %c0_i32_0 : i32, i32
  }
  func.func @transform_8(%arg0: i32) -> (i32, i32) {
    %c0_i32 = arith.constant 0 : i32
    %c0_i32_0 = arith.constant 0 : i32
    %c0_i32_1 = arith.constant 0 : i32
    return %c0_i32, %c0_i32_0 : i32, i32
  }
  func.func @transform_9(%arg0: i32) -> (i32, i32) {
    %c0_i32 = arith.constant 0 : i32
    %c0_i32_0 = arith.constant 0 : i32
    %c0_i32_1 = arith.constant 0 : i32
    return %c0_i32, %c0_i32_0 : i32, i32
  }
  func.func @transform_10(%arg0: i32) -> (i32, i32) {
    %c0_i32 = arith.constant 0 : i32
    %c0_i32_0 = arith.constant 0 : i32
    %c0_i32_1 = arith.constant 0 : i32
    return %c0_i32, %c0_i32_0 : i32, i32
  }
  func.func @transform_11(%arg0: i32) -> (i32, i32) {
    %c0_i32 = arith.constant 0 : i32
    %c0_i32_0 = arith.constant 0 : i32
    return %c0_i32, %arg0 : i32, i32
  }
  func.func @transform_12(%arg0: i32) -> (i32, i32) {
    %c0_i32 = arith.constant 0 : i32
    %c0_i32_0 = arith.constant 0 : i32
    return %arg0, %c0_i32 : i32, i32
  }
}

</mosaic_0001>

<llo_original>
// kernel: tpu_custom_call.1
$region0: #{tpu_custom_call.1}
  #allocation0 [shape = 'u32[]', space=smem, size = 0x4, offset = 0x4, fixed_abs, tag = 'smem constant byte address 0x4 - core index']
  #allocation1 [shape = 'u32[144,128]{1,0:T(1,128)}', space=vmem, size = 0x12000, scoped, tag = 'internal scratch']
  #allocation2 [shape = 'f32[1,1]{1,0:T(1,128)S(1)}', space=vmem, size = 0x200, scoped, tag = 'scoped memory for tpu_custom_call.1']
  %s0 = inlined_call_operand.hbm [shape: f32[1024,128], index: 0, kind: input, shape index: {}]
  %s1 = inlined_call_operand.vmem [shape: bf16[128,64], index: 1, kind: input, shape index: {}]
  %s2 = inlined_call_operand.vmem [shape: f32[1,64], index: 2, kind: input, shape index: {}]
  %s3 = inlined_call_operand.vmem [shape: bf16[64,32], index: 3, kind: input, shape index: {}]
  %s4 = inlined_call_operand.vmem [shape: f32[1,32], index: 4, kind: input, shape index: {}]
  %s5 = inlined_call_operand.vmem [shape: bf16[32,64], index: 5, kind: input, shape index: {}]
  %s6 = inlined_call_operand.vmem [shape: f32[1,64], index: 6, kind: input, shape index: {}]
  %s7 = inlined_call_operand.vmem [shape: bf16[64,128], index: 7, kind: input, shape index: {}]
  %s8 = inlined_call_operand.vmem [shape: f32[1,128], index: 8, kind: input, shape index: {}]
  %s9 = inlined_call_operand.vmem [shape: bf16[8,32], index: 9, kind: input, shape index: {}]
  %s10 = inlined_call_operand.<no memory space> [shape: f32[1,1], index: 10, kind: input, shape index: {}]
  %s11 = inlined_call_operand.hbm [shape: f32[1,1024], index: 11, kind: output, shape index: {0}]
  %s12 = inlined_call_operand.hbm [shape: f32[1024,128], index: 12, kind: output, shape index: {1}]
  %13 = xla_tuple %s11, %s12
  %s14 = sld [smem:[#allocation0]]
  $region66: #{tpu_custom_call.1} parent=0
    _
  %s16 = ssub.s32 1, %s14
  %s17 = scalar_select 0, %s16, %s14
  %v18 = vstv %s10
  %19 = vst [vmem:[#allocation2] sm:$0x1] %v18
  $region1: #{tpu_custom_call.1} parent=0
    #allocation3 [shape = 'u8[524288]{0}', space=vmem, size = 0x80000, scoped, tag = 'input window, operand 0, single buffered']
    #allocation4 [shape = 's32[1]{0}', space=sflag, size = 0x4, scoped, tag = 'scoped memory for tpu_custom_call.1']
    #allocation5 [shape = 's32[1]{0}', space=sflag, size = 0x4, scoped, tag = 'scoped memory for tpu_custom_call.1']
    #allocation6 [shape = 'u8[4096]{0}', space=vmem, size = 0x1000, scoped, tag = 'output window, operand 0, single buffered']
    #allocation7 [shape = 'u8[524288]{0}', space=vmem, size = 0x80000, scoped, tag = 'output window, operand 1, single buffered']
    #allocation8 [shape = 's32[1]{0}', space=sflag, size = 0x4, scoped, tag = 'scoped memory for tpu_custom_call.1']
    %20 = vsyncpa [#allocation4], 0
    %21 = vsyncpa [#allocation5], 0
    %22 = vsyncpa [#allocation8], 0
    // Predicated region
    $region2: #{tpu_custom_call.1} parent=1 // pred_check
      _
    $region3: #{tpu_custom_call.1} parent=1 // pred_check_branch
      %24 = sbr.rel (0) target = $region5
    $region4: #{tpu_custom_call.1} parent=1 // pred_region
      %s26 = ssub.s32 16384, 16384
      %27 = vsyncadd [#allocation4], %s26
      %s28 = sshll.u32 [#allocation3], 4
      %s29 = int_to_ptr.vmem [resolvable:$true] %s28
      %34 = dma.hbm_to_vmem [thread:$0]  %s0, 16384, %s29, [#allocation4], 128, 128, 8
    $region5: #{tpu_custom_call.1} parent=1 // pred_fallthru
      _
    // Predicated region
    $region6: #{tpu_custom_call.1} parent=1 // pred_check
      _
    $region7: #{tpu_custom_call.1} parent=1 // pred_check_branch
      %36 = sbr.rel (0) target = $region9
    $region8: #{tpu_custom_call.1} parent=1 // pred_region
      _
    $region9: #{tpu_custom_call.1} parent=1 // pred_fallthru
      _
    // Predicated region
    $region10: #{tpu_custom_call.1} parent=1 // pred_check
      _
    $region11: #{tpu_custom_call.1} parent=1 // pred_check_branch
      %38 = sbr.rel (0) target = $region13
    $region12: #{tpu_custom_call.1} parent=1 // pred_region
      _
    $region13: #{tpu_custom_call.1} parent=1 // pred_fallthru
      _
    // Predicated region
    $region14: #{tpu_custom_call.1} parent=1 // pred_check
      _
    $region15: #{tpu_custom_call.1} parent=1 // pred_check_branch
      %40 = sbr.rel (0) target = $region17
    $region16: #{tpu_custom_call.1} parent=1 // pred_region
      _
    $region17: #{tpu_custom_call.1} parent=1 // pred_fallthru
      _
    // Predicated region
    $region18: #{tpu_custom_call.1} parent=1 // pred_check
      _
    $region19: #{tpu_custom_call.1} parent=1 // pred_check_branch
      %42 = sbr.rel (0) target = $region21
    $region20: #{tpu_custom_call.1} parent=1 // pred_region
      _
    $region21: #{tpu_custom_call.1} parent=1 // pred_fallthru
      _
    // Predicated region
    $region22: #{tpu_custom_call.1} parent=1 // pred_check
      _
    $region23: #{tpu_custom_call.1} parent=1 // pred_check_branch
      %44 = sbr.rel (0) target = $region25
    $region24: #{tpu_custom_call.1} parent=1 // pred_region
      _
    $region25: #{tpu_custom_call.1} parent=1 // pred_fallthru
      _
    // Predicated region
    $region26: #{tpu_custom_call.1} parent=1 // pred_check
      _
    $region27: #{tpu_custom_call.1} parent=1 // pred_check_branch
      %46 = sbr.rel (0) target = $region29
    $region28: #{tpu_custom_call.1} parent=1 // pred_region
      _
    $region29: #{tpu_custom_call.1} parent=1 // pred_fallthru
      _
    // Predicated region
    $region30: #{tpu_custom_call.1} parent=1 // pred_check
      _
    $region31: #{tpu_custom_call.1} parent=1 // pred_check_branch
      %48 = sbr.rel (0) target = $region33
    $region32: #{tpu_custom_call.1} parent=1 // pred_region
      _
    $region33: #{tpu_custom_call.1} parent=1 // pred_fallthru
      _
    // Predicated region
    $region34: #{tpu_custom_call.1} parent=1 // pred_check
      _
    $region35: #{tpu_custom_call.1} parent=1 // pred_check_branch
      %50 = sbr.rel (0) target = $region37
    $region36: #{tpu_custom_call.1} parent=1 // pred_region
      _
    $region37: #{tpu_custom_call.1} parent=1 // pred_fallthru
      _
    // Predicated region
    $region38: #{tpu_custom_call.1} parent=1 // pred_check
      _
    $region39: #{tpu_custom_call.1} parent=1 // pred_check_branch
      %52 = sbr.rel (0) target = $region41
    $region40: #{tpu_custom_call.1} parent=1 // pred_region
      _
    $region41: #{tpu_custom_call.1} parent=1 // pred_fallthru
      _
    // Predicated region
    $region42: #{tpu_custom_call.1} parent=1 // pred_check
      _
    $region43: #{tpu_custom_call.1} parent=1 // pred_check_branch
      %54 = sbr.rel (0) target = $region45
    $region44: #{tpu_custom_call.1} parent=1 // pred_region
      _
    $region45: #{tpu_custom_call.1} parent=1 // pred_fallthru
      _
    // Predicated region
    $region46: #{tpu_custom_call.1} parent=1 // pred_check
      _
    $region47: #{tpu_custom_call.1} parent=1 // pred_check_branch
      %56 = sbr.rel (0) target = $region49
    $region48: #{tpu_custom_call.1} parent=1 // pred_region
      %57 = dma.done [#allocation4], 16384
    $region49: #{tpu_custom_call.1} parent=1 // pred_fallthru
      _
    %v59 = vld [vmem:[#allocation3] sm:$0xff]
    %v60 = vld [vmem:[#allocation3 + $0x8] sm:$0xff]
    %v61 = vld [vmem:[#allocation3 + $0x10] sm:$0xff]
    %v62 = vld [vmem:[#allocation3 + $0x18] sm:$0xff]
    %v63 = vld [vmem:[#allocation3 + $0x20] sm:$0xff]
    %v64 = vld [vmem:[#allocation3 + $0x28] sm:$0xff]
    %v65 = vld [vmem:[#allocation3 + $0x30] sm:$0xff]
    %v66 = vld [vmem:[#allocation3 + $0x38] sm:$0xff]
    %v67 = vld [vmem:[#allocation3 + $0x40] sm:$0xff]
    %v68 = vld [vmem:[#allocation3 + $0x48] sm:$0xff]
    %v69 = vld [vmem:[#allocation3 + $0x50] sm:$0xff]
    %v70 = vld [vmem:[#allocation3 + $0x58] sm:$0xff]
    %v71 = vld [vmem:[#allocation3 + $0x60] sm:$0xff]
    %v72 = vld [vmem:[#allocation3 + $0x68] sm:$0xff]
    %v73 = vld [vmem:[#allocation3 + $0x70] sm:$0xff]
    %v74 = vld [vmem:[#allocation3 + $0x78] sm:$0xff]
    %v75 = vld [vmem:[#allocation3 + $0x80] sm:$0xff]
    %v76 = vld [vmem:[#allocation3 + $0x88] sm:$0xff]
    %v77 = vld [vmem:[#allocation3 + $0x90] sm:$0xff]
    %v78 = vld [vmem:[#allocation3 + $0x98] sm:$0xff]
    %v79 = vld [vmem:[#allocation3 + $0xa0] sm:$0xff]
    %v80 = vld [vmem:[#allocation3 + $0xa8] sm:$0xff]
    %v81 = vld [vmem:[#allocation3 + $0xb0] sm:$0xff]
    %v82 = vld [vmem:[#allocation3 + $0xb8] sm:$0xff]
    %v83 = vld [vmem:[#allocation3 + $0xc0] sm:$0xff]
    %v84 = vld [vmem:[#allocation3 + $0xc8] sm:$0xff]
    %v85 = vld [vmem:[#allocation3 + $0xd0] sm:$0xff]
    %v86 = vld [vmem:[#allocation3 + $0xd8] sm:$0xff]
    %v87 = vld [vmem:[#allocation3 + $0xe0] sm:$0xff]
    %v88 = vld [vmem:[#allocation3 + $0xe8] sm:$0xff]
    %v89 = vld [vmem:[#allocation3 + $0xf0] sm:$0xff]
    %v90 = vld [vmem:[#allocation3 + $0xf8] sm:$0xff]
    %v91 = vld [vmem:[#allocation3 + $0x100] sm:$0xff]
    %v92 = vld [vmem:[#allocation3 + $0x108] sm:$0xff]
    %v93 = vld [vmem:[#allocation3 + $0x110] sm:$0xff]
    %v94 = vld [vmem:[#allocation3 + $0x118] sm:$0xff]
    %v95 = vld [vmem:[#allocation3 + $0x120] sm:$0xff]
    %v96 = vld [vmem:[#allocation3 + $0x128] sm:$0xff]
    %v97 = vld [vmem:[#allocation3 + $0x130] sm:$0xff]
    %v98 = vld [vmem:[#allocation3 + $0x138] sm:$0xff]
    %v99 = vld [vmem:[#allocation3 + $0x140] sm:$0xff]
    %v100 = vld [vmem:[#allocation3 + $0x148] sm:$0xff]
    %v101 = vld [vmem:[#allocation3 + $0x150] sm:$0xff]
    %v102 = vld [vmem:[#allocation3 + $0x158] sm:$0xff]
    %v103 = vld [vmem:[#allocation3 + $0x160] sm:$0xff]
    %v104 = vld [vmem:[#allocation3 + $0x168] sm:$0xff]
    %v105 = vld [vmem:[#allocation3 + $0x170] sm:$0xff]
    %v106 = vld [vmem:[#allocation3 + $0x178] sm:$0xff]
    %v107 = vld [vmem:[#allocation3 + $0x180] sm:$0xff]
    %v108 = vld [vmem:[#allocation3 + $0x188] sm:$0xff]
    %v109 = vld [vmem:[#allocation3 + $0x190] sm:$0xff]
    %v110 = vld [vmem:[#allocation3 + $0x198] sm:$0xff]
    %v111 = vld [vmem:[#allocation3 + $0x1a0] sm:$0xff]
    %v112 = vld [vmem:[#allocation3 + $0x1a8] sm:$0xff]
    %v113 = vld [vmem:[#allocation3 + $0x1b0] sm:$0xff]
    %v114 = vld [vmem:[#allocation3 + $0x1b8] sm:$0xff]
    %v115 = vld [vmem:[#allocation3 + $0x1c0] sm:$0xff]
    %v116 = vld [vmem:[#allocation3 + $0x1c8] sm:$0xff]
    %v117 = vld [vmem:[#allocation3 + $0x1d0] sm:$0xff]
    %v118 = vld [vmem:[#allocation3 + $0x1d8] sm:$0xff]
    %v119 = vld [vmem:[#allocation3 + $0x1e0] sm:$0xff]
    %v120 = vld [vmem:[#allocation3 + $0x1e8] sm:$0xff]
    %v121 = vld [vmem:[#allocation3 + $0x1f0] sm:$0xff]
    %v122 = vld [vmem:[#allocation3 + $0x1f8] sm:$0xff]
    %v123 = vld [vmem:[#allocation3 + $0x200] sm:$0xff]
    %v124 = vld [vmem:[#allocation3 + $0x208] sm:$0xff]
    %v125 = vld [vmem:[#allocation3 + $0x210] sm:$0xff]
    %v126 = vld [vmem:[#allocation3 + $0x218] sm:$0xff]
    %v127 = vld [vmem:[#allocation3 + $0x220] sm:$0xff]
    %v128 = vld [vmem:[#allocation3 + $0x228] sm:$0xff]
    %v129 = vld [vmem:[#allocation3 + $0x230] sm:$0xff]
    %v130 = vld [vmem:[#allocation3 + $0x238] sm:$0xff]
    %v131 = vld [vmem:[#allocation3 + $0x240] sm:$0xff]
    %v132 = vld [vmem:[#allocation3 + $0x248] sm:$0xff]
    %v133 = vld [vmem:[#allocation3 + $0x250] sm:$0xff]
    %v134 = vld [vmem:[#allocation3 + $0x258] sm:$0xff]
    %v135 = vld [vmem:[#allocation3 + $0x260] sm:$0xff]
    %v136 = vld [vmem:[#allocation3 + $0x268] sm:$0xff]
    %v137 = vld [vmem:[#allocation3 + $0x270] sm:$0xff]
    %v138 = vld [vmem:[#allocation3 + $0x278] sm:$0xff]
    %v139 = vld [vmem:[#allocation3 + $0x280] sm:$0xff]
    %v140 = vld [vmem:[#allocation3 + $0x288] sm:$0xff]
    %v141 = vld [vmem:[#allocation3 + $0x290] sm:$0xff]
    %v142 = vld [vmem:[#allocation3 + $0x298] sm:$0xff]
    %v143 = vld [vmem:[#allocation3 + $0x2a0] sm:$0xff]
    %v144 = vld [vmem:[#allocation3 + $0x2a8] sm:$0xff]
    %v145 = vld [vmem:[#allocation3 + $0x2b0] sm:$0xff]
    %v146 = vld [vmem:[#allocation3 + $0x2b8] sm:$0xff]
    %v147 = vld [vmem:[#allocation3 + $0x2c0] sm:$0xff]
    %v148 = vld [vmem:[#allocation3 + $0x2c8] sm:$0xff]
    %v149 = vld [vmem:[#allocation3 + $0x2d0] sm:$0xff]
    %v150 = vld [vmem:[#allocation3 + $0x2d8] sm:$0xff]
    %v151 = vld [vmem:[#allocation3 + $0x2e0] sm:$0xff]
    %v152 = vld [vmem:[#allocation3 + $0x2e8] sm:$0xff]
    %v153 = vld [vmem:[#allocation3 + $0x2f0] sm:$0xff]
    %v154 = vld [vmem:[#allocation3 + $0x2f8] sm:$0xff]
    %v155 = vld [vmem:[#allocation3 + $0x300] sm:$0xff]
    %v156 = vld [vmem:[#allocation3 + $0x308] sm:$0xff]
    %v157 = vld [vmem:[#allocation3 + $0x310] sm:$0xff]
    %v158 = vld [vmem:[#allocation3 + $0x318] sm:$0xff]
    %v159 = vld [vmem:[#allocation3 + $0x320] sm:$0xff]
    %v160 = vld [vmem:[#allocation3 + $0x328] sm:$0xff]
    %v161 = vld [vmem:[#allocation3 + $0x330] sm:$0xff]
    %v162 = vld [vmem:[#allocation3 + $0x338] sm:$0xff]
    %v163 = vld [vmem:[#allocation3 + $0x340] sm:$0xff]
    %v164 = vld [vmem:[#allocation3 + $0x348] sm:$0xff]
    %v165 = vld [vmem:[#allocation3 + $0x350] sm:$0xff]
    %v166 = vld [vmem:[#allocation3 + $0x358] sm:$0xff]
    %v167 = vld [vmem:[#allocation3 + $0x360] sm:$0xff]
    %v168 = vld [vmem:[#allocation3 + $0x368] sm:$0xff]
    %v169 = vld [vmem:[#allocation3 + $0x370] sm:$0xff]
    %v170 = vld [vmem:[#allocation3 + $0x378] sm:$0xff]
    %v171 = vld [vmem:[#allocation3 + $0x380] sm:$0xff]
    %v172 = vld [vmem:[#allocation3 + $0x388] sm:$0xff]
    %v173 = vld [vmem:[#allocation3 + $0x390] sm:$0xff]
    %v174 = vld [vmem:[#allocation3 + $0x398] sm:$0xff]
    %v175 = vld [vmem:[#allocation3 + $0x3a0] sm:$0xff]
    %v176 = vld [vmem:[#allocation3 + $0x3a8] sm:$0xff]
    %v177 = vld [vmem:[#allocation3 + $0x3b0] sm:$0xff]
    %v178 = vld [vmem:[#allocation3 + $0x3b8] sm:$0xff]
    %v179 = vld [vmem:[#allocation3 + $0x3c0] sm:$0xff]
    %v180 = vld [vmem:[#allocation3 + $0x3c8] sm:$0xff]
    %v181 = vld [vmem:[#allocation3 + $0x3d0] sm:$0xff]
    %v182 = vld [vmem:[#allocation3 + $0x3d8] sm:$0xff]
    %v183 = vld [vmem:[#allocation3 + $0x3e0] sm:$0xff]
    %v184 = vld [vmem:[#allocation3 + $0x3e8] sm:$0xff]
    %v185 = vld [vmem:[#allocation3 + $0x3f0] sm:$0xff]
    %v186 = vld [vmem:[#allocation3 + $0x3f8] sm:$0xff]
    %v187 = vpack.c.bf16 %v60, %v59
    %v188 = vpack.c.bf16 %v62, %v61
    %v189 = vpack.c.bf16 %v64, %v63
    %v190 = vpack.c.bf16 %v66, %v65
    %v191 = vpack.c.bf16 %v68, %v67
    %v192 = vpack.c.bf16 %v70, %v69
    %v193 = vpack.c.bf16 %v72, %v71
    %v194 = vpack.c.bf16 %v74, %v73
    %v195 = vpack.c.bf16 %v76, %v75
    %v196 = vpack.c.bf16 %v78, %v77
    %v197 = vpack.c.bf16 %v80, %v79
    %v198 = vpack.c.bf16 %v82, %v81
    %v199 = vpack.c.bf16 %v84, %v83
    %v200 = vpack.c.bf16 %v86, %v85
    %v201 = vpack.c.bf16 %v88, %v87
    %v202 = vpack.c.bf16 %v90, %v89
    %v203 = vpack.c.bf16 %v92, %v91
    %v204 = vpack.c.bf16 %v94, %v93
    %v205 = vpack.c.bf16 %v96, %v95
    %v206 = vpack.c.bf16 %v98, %v97
    %v207 = vpack.c.bf16 %v100, %v99
    %v208 = vpack.c.bf16 %v102, %v101
    %v209 = vpack.c.bf16 %v104, %v103
    %v210 = vpack.c.bf16 %v106, %v105
    %v211 = vpack.c.bf16 %v108, %v107
    %v212 = vpack.c.bf16 %v110, %v109
    %v213 = vpack.c.bf16 %v112, %v111
    %v214 = vpack.c.bf16 %v114, %v113
    %v215 = vpack.c.bf16 %v116, %v115
    %v216 = vpack.c.bf16 %v118, %v117
    %v217 = vpack.c.bf16 %v120, %v119
    %v218 = vpack.c.bf16 %v122, %v121
    %v219 = vpack.c.bf16 %v124, %v123
    %v220 = vpack.c.bf16 %v126, %v125
    %v221 = vpack.c.bf16 %v128, %v127
    %v222 = vpack.c.bf16 %v130, %v129
    %v223 = vpack.c.bf16 %v132, %v131
    %v224 = vpack.c.bf16 %v134, %v133
    %v225 = vpack.c.bf16 %v136, %v135
    %v226 = vpack.c.bf16 %v138, %v137
    %v227 = vpack.c.bf16 %v140, %v139
    %v228 = vpack.c.bf16 %v142, %v141
    %v229 = vpack.c.bf16 %v144, %v143
    %v230 = vpack.c.bf16 %v146, %v145
    %v231 = vpack.c.bf16 %v148, %v147
    %v232 = vpack.c.bf16 %v150, %v149
    %v233 = vpack.c.bf16 %v152, %v151
    %v234 = vpack.c.bf16 %v154, %v153
    %v235 = vpack.c.bf16 %v156, %v155
    %v236 = vpack.c.bf16 %v158, %v157
    %v237 = vpack.c.bf16 %v160, %v159
    %v238 = vpack.c.bf16 %v162, %v161
    %v239 = vpack.c.bf16 %v164, %v163
    %v240 = vpack.c.bf16 %v166, %v165
    %v241 = vpack.c.bf16 %v168, %v167
    %v242 = vpack.c.bf16 %v170, %v169
    %v243 = vpack.c.bf16 %v172, %v171
    %v244 = vpack.c.bf16 %v174, %v173
    %v245 = vpack.c.bf16 %v176, %v175
    %v246 = vpack.c.bf16 %v178, %v177
    %v247 = vpack.c.bf16 %v180, %v179
    %v248 = vpack.c.bf16 %v182, %v181
    %v249 = vpack.c.bf16 %v184, %v183
    %v250 = vpack.c.bf16 %v186, %v185
    %v251 = vld [vmem:[%s1] sm:$0xf]
    %v252 = vld [vmem:[%s1 + $0x4] sm:$0xf]
    %v253 = vld [vmem:[%s1 + $0x8] sm:$0xf]
    %v254 = vld [vmem:[%s1 + $0xc] sm:$0xf]
    %v255 = vld [vmem:[%s1 + $0x10] sm:$0xf]
    %v256 = vld [vmem:[%s1 + $0x14] sm:$0xf]
    %v257 = vld [vmem:[%s1 + $0x18] sm:$0xf]
    %v258 = vld [vmem:[%s1 + $0x1c] sm:$0xf]
    %v259 = vld [vmem:[%s1 + $0x20] sm:$0xf]
    %v260 = vld [vmem:[%s1 + $0x24] sm:$0xf]
    %v261 = vld [vmem:[%s1 + $0x28] sm:$0xf]
    %v262 = vld [vmem:[%s1 + $0x2c] sm:$0xf]
    %v263 = vld [vmem:[%s1 + $0x30] sm:$0xf]
    %v264 = vld [vmem:[%s1 + $0x34] sm:$0xf]
    %v265 = vld [vmem:[%s1 + $0x38] sm:$0xf]
    %v266 = vld [vmem:[%s1 + $0x3c] sm:$0xf]
    %v267 = vld [vmem:[%s2] sm:$0x1]
    %v269 = vlaneseq
    %v270 = vshrl.u32 %v269, 7
    %v271 = vsub.s32 0, %v270
    %v272 = vrot.slane %v267, %v271
    %v290 = vunpack.c.l.b16 %v251
    %v291 = vunpack.c.l.b16 %v252
    %v292 = vunpack.c.l.b16 %v253
    %v293 = vunpack.c.l.b16 %v254
    %v294 = vunpack.c.l.b16 %v255
    %v295 = vunpack.c.l.b16 %v256
    %v296 = vunpack.c.l.b16 %v257
    %v297 = vunpack.c.l.b16 %v258
    %v298 = vunpack.c.l.b16 %v259
    %v299 = vunpack.c.l.b16 %v260
    %v300 = vunpack.c.l.b16 %v261
    %v301 = vunpack.c.l.b16 %v262
    %v302 = vunpack.c.l.b16 %v263
    %v303 = vunpack.c.l.b16 %v264
    %v304 = vunpack.c.l.b16 %v265
    %v305 = vunpack.c.l.b16 %v266
    %v306 = vpack.c.b16 %v291, %v290
    %v307 = vpack.c.b16 %v293, %v292
    %v308 = vpack.c.b16 %v295, %v294
    %v309 = vpack.c.b16 %v297, %v296
    %v310 = vpack.c.b16 %v299, %v298
    %v311 = vpack.c.b16 %v301, %v300
    %v312 = vpack.c.b16 %v303, %v302
    %v313 = vpack.c.b16 %v305, %v304
    %322 = vmatprep.subr.bf16.mxu0 0
    %323 = vmatpush1.bf16.msra.mxu0 %v313
    %324 = vmatprep.subr.bf16.mxu0 0
    %325 = vmatpush1.bf16.msra.mxu0 %v312
    %326 = vmatprep.subr.bf16.mxu0 0
    %327 = vmatpush1.bf16.msra.mxu0 %v311
    %328 = vmatprep.subr.bf16.mxu0 0
    %329 = vmatpush1.bf16.msra.mxu0 %v310
    %330 = vmatprep.subr.bf16.mxu0 0
    %331 = vmatpush1.bf16.msra.mxu0 %v309
    %332 = vmatprep.subr.bf16.mxu0 0
    %333 = vmatpush1.bf16.msra.mxu0 %v308
    %334 = vmatprep.subr.bf16.mxu0 0
    %335 = vmatpush1.bf16.msra.mxu0 %v307
    %336 = vmatprep.subr.bf16.mxu0 0
    %337 = vmatpush1.bf16.msra.mxu0 %v306
    %338 = vmatprep.subr.bf16.mxu0 0
    %339 = vmatpush2.bf16.msra.mxu0 0
    %340 = vmatprep.subr.bf16.mxu0 0
    %341 = vmatpush2.bf16.msra.mxu0 0
    %342 = vmatprep.subr.bf16.mxu0 0
    %343 = vmatpush2.bf16.msra.mxu0 0
    %344 = vmatprep.subr.bf16.mxu0 0
    %345 = vmatpush2.bf16.msra.mxu0 0
    %346 = vmatprep.subr.bf16.mxu0 0
    %347 = vmatpush2.bf16.msra.mxu0 0
    %348 = vmatprep.subr.bf16.mxu0 0
    %349 = vmatpush2.bf16.msra.mxu0 0
    %350 = vmatprep.subr.bf16.mxu0 0
    %351 = vmatpush2.bf16.msra.mxu0 0
    %352 = vmatprep.subr.bf16.mxu0 0
    %353 = vmatpush2.bf16.msra.mxu0 0
    %354 = vmatprep.mubr.bf16.mxu0 0
    %355 = vmatmul.mubr.bf16.gmra.mxu0 %v187
    %v356 = vpop.f32.mrf.mxu0
    %v357 = vadd.f32 %v272, %v356
    %v358 = vpop.f32.mrf.mxu0
    %v359 = vpop.f32.mrf.mxu0
    %v360 = vadd.f32 %v272, %v359
    %v361 = vpop.f32.mrf.mxu0
    %362 = vmatprep.mubr.bf16.mxu0 0
    %363 = vmatmul.mubr.bf16.gmra.mxu0 %v188
    %v364 = vpop.f32.mrf.mxu0
    %v365 = vadd.f32 %v272, %v364
    %v366 = vpop.f32.mrf.mxu0
    %v367 = vpop.f32.mrf.mxu0
    %v368 = vadd.f32 %v272, %v367
    %v369 = vpop.f32.mrf.mxu0
    %370 = vmatprep.mubr.bf16.mxu0 0
    %371 = vmatmul.mubr.bf16.gmra.mxu0 %v189
    %v372 = vpop.f32.mrf.mxu0
    %v373 = vadd.f32 %v272, %v372
    %v374 = vpop.f32.mrf.mxu0
    %v375 = vpop.f32.mrf.mxu0
    %v376 = vadd.f32 %v272, %v375
    %v377 = vpop.f32.mrf.mxu0
    %378 = vmatprep.mubr.bf16.mxu0 0
    %379 = vmatmul.mubr.bf16.gmra.mxu0 %v190
    %v380 = vpop.f32.mrf.mxu0
    %v381 = vadd.f32 %v272, %v380
    %v382 = vpop.f32.mrf.mxu0
    %v383 = vpop.f32.mrf.mxu0
    %v384 = vadd.f32 %v272, %v383
    %v385 = vpop.f32.mrf.mxu0
    %386 = vmatprep.mubr.bf16.mxu0 0
    %387 = vmatmul.mubr.bf16.gmra.mxu0 %v191
    %v388 = vpop.f32.mrf.mxu0
    %v389 = vadd.f32 %v272, %v388
    %v390 = vpop.f32.mrf.mxu0
    %v391 = vpop.f32.mrf.mxu0
    %v392 = vadd.f32 %v272, %v391
    %v393 = vpop.f32.mrf.mxu0
    %394 = vmatprep.mubr.bf16.mxu0 0
    %395 = vmatmul.mubr.bf16.gmra.mxu0 %v192
    %v396 = vpop.f32.mrf.mxu0
    %v397 = vadd.f32 %v272, %v396
    %v398 = vpop.f32.mrf.mxu0
    %v399 = vpop.f32.mrf.mxu0
    %v400 = vadd.f32 %v272, %v399
    %v401 = vpop.f32.mrf.mxu0
    %402 = vmatprep.mubr.bf16.mxu0 0
    %403 = vmatmul.mubr.bf16.gmra.mxu0 %v193
    %v404 = vpop.f32.mrf.mxu0
    %v405 = vadd.f32 %v272, %v404
    %v406 = vpop.f32.mrf.mxu0
    %v407 = vpop.f32.mrf.mxu0
    %v408 = vadd.f32 %v272, %v407
    %v409 = vpop.f32.mrf.mxu0
    %410 = vmatprep.mubr.bf16.mxu0 0
    %411 = vmatmul.mubr.bf16.gmra.mxu0 %v194
    %v412 = vpop.f32.mrf.mxu0
    %v413 = vadd.f32 %v272, %v412
    %v414 = vpop.f32.mrf.mxu0
    %v415 = vpop.f32.mrf.mxu0
    %v416 = vadd.f32 %v272, %v415
    %v417 = vpop.f32.mrf.mxu0
    %418 = vmatprep.mubr.bf16.mxu0 0
    %419 = vmatmul.mubr.bf16.gmra.mxu0 %v195
    %v420 = vpop.f32.mrf.mxu0
    %v421 = vadd.f32 %v272, %v420
    %v422 = vpop.f32.mrf.mxu0
    %v423 = vpop.f32.mrf.mxu0
    %v424 = vadd.f32 %v272, %v423
    %v425 = vpop.f32.mrf.mxu0
    %426 = vmatprep.mubr.bf16.mxu0 0
    %427 = vmatmul.mubr.bf16.gmra.mxu0 %v196
    %v428 = vpop.f32.mrf.mxu0
    %v429 = vadd.f32 %v272, %v428
    %v430 = vpop.f32.mrf.mxu0
    %v431 = vpop.f32.mrf.mxu0
    %v432 = vadd.f32 %v272, %v431
    %v433 = vpop.f32.mrf.mxu0
    %434 = vmatprep.mubr.bf16.mxu0 0
    %435 = vmatmul.mubr.bf16.gmra.mxu0 %v197
    %v436 = vpop.f32.mrf.mxu0
    %v437 = vadd.f32 %v272, %v436
    %v438 = vpop.f32.mrf.mxu0
    %v439 = vpop.f32.mrf.mxu0
    %v440 = vadd.f32 %v272, %v439
    %v441 = vpop.f32.mrf.mxu0
    %442 = vmatprep.mubr.bf16.mxu0 0
    %443 = vmatmul.mubr.bf16.gmra.mxu0 %v198
    %v444 = vpop.f32.mrf.mxu0
    %v445 = vadd.f32 %v272, %v444
    %v446 = vpop.f32.mrf.mxu0
    %v447 = vpop.f32.mrf.mxu0
    %v448 = vadd.f32 %v272, %v447
    %v449 = vpop.f32.mrf.mxu0
    %450 = vmatprep.mubr.bf16.mxu0 0
    %451 = vmatmul.mubr.bf16.gmra.mxu0 %v199
    %v452 = vpop.f32.mrf.mxu0
    %v453 = vadd.f32 %v272, %v452
    %v454 = vpop.f32.mrf.mxu0
    %v455 = vpop.f32.mrf.mxu0
    %v456 = vadd.f32 %v272, %v455
    %v457 = vpop.f32.mrf.mxu0
    %458 = vmatprep.mubr.bf16.mxu0 0
    %459 = vmatmul.mubr.bf16.gmra.mxu0 %v200
    %v460 = vpop.f32.mrf.mxu0
    %v461 = vadd.f32 %v272, %v460
    %v462 = vpop.f32.mrf.mxu0
    %v463 = vpop.f32.mrf.mxu0
    %v464 = vadd.f32 %v272, %v463
    %v465 = vpop.f32.mrf.mxu0
    %466 = vmatprep.mubr.bf16.mxu0 0
    %467 = vmatmul.mubr.bf16.gmra.mxu0 %v201
    %v468 = vpop.f32.mrf.mxu0
    %v469 = vadd.f32 %v272, %v468
    %v470 = vpop.f32.mrf.mxu0
    %v471 = vpop.f32.mrf.mxu0
    %v472 = vadd.f32 %v272, %v471
    %v473 = vpop.f32.mrf.mxu0
    %474 = vmatprep.mubr.bf16.mxu0 0
    %475 = vmatmul.mubr.bf16.gmra.mxu0 %v202
    %v476 = vpop.f32.mrf.mxu0
    %v477 = vadd.f32 %v272, %v476
    %v478 = vpop.f32.mrf.mxu0
    %v479 = vpop.f32.mrf.mxu0
    %v480 = vadd.f32 %v272, %v479
    %v481 = vpop.f32.mrf.mxu0
    %482 = vmatprep.mubr.bf16.mxu0 0
    %483 = vmatmul.mubr.bf16.gmra.mxu0 %v203
    %v484 = vpop.f32.mrf.mxu0
    %v485 = vadd.f32 %v272, %v484
    %v486 = vpop.f32.mrf.mxu0
    %v487 = vpop.f32.mrf.mxu0
    %v488 = vadd.f32 %v272, %v487
    %v489 = vpop.f32.mrf.mxu0
    %490 = vmatprep.mubr.bf16.mxu0 0
    %491 = vmatmul.mubr.bf16.gmra.mxu0 %v204
    %v492 = vpop.f32.mrf.mxu0
    %v493 = vadd.f32 %v272, %v492
    %v494 = vpop.f32.mrf.mxu0
    %v495 = vpop.f32.mrf.mxu0
    %v496 = vadd.f32 %v272, %v495
    %v497 = vpop.f32.mrf.mxu0
    %498 = vmatprep.mubr.bf16.mxu0 0
    %499 = vmatmul.mubr.bf16.gmra.mxu0 %v205
    %v500 = vpop.f32.mrf.mxu0
    %v501 = vadd.f32 %v272, %v500
    %v502 = vpop.f32.mrf.mxu0
    %v503 = vpop.f32.mrf.mxu0
    %v504 = vadd.f32 %v272, %v503
    %v505 = vpop.f32.mrf.mxu0
    %506 = vmatprep.mubr.bf16.mxu0 0
    %507 = vmatmul.mubr.bf16.gmra.mxu0 %v206
    %v508 = vpop.f32.mrf.mxu0
    %v509 = vadd.f32 %v272, %v508
    %v510 = vpop.f32.mrf.mxu0
    %v511 = vpop.f32.mrf.mxu0
    %v512 = vadd.f32 %v272, %v511
    %v513 = vpop.f32.mrf.mxu0
    %514 = vmatprep.mubr.bf16.mxu0 0
    %515 = vmatmul.mubr.bf16.gmra.mxu0 %v207
    %v516 = vpop.f32.mrf.mxu0
    %v517 = vadd.f32 %v272, %v516
    %v518 = vpop.f32.mrf.mxu0
    %v519 = vpop.f32.mrf.mxu0
    %v520 = vadd.f32 %v272, %v519
    %v521 = vpop.f32.mrf.mxu0
    %522 = vmatprep.mubr.bf16.mxu0 0
    %523 = vmatmul.mubr.bf16.gmra.mxu0 %v208
    %v524 = vpop.f32.mrf.mxu0
    %v525 = vadd.f32 %v272, %v524
    %v526 = vpop.f32.mrf.mxu0
    %v527 = vpop.f32.mrf.mxu0
    %v528 = vadd.f32 %v272, %v527
    %v529 = vpop.f32.mrf.mxu0
    %530 = vmatprep.mubr.bf16.mxu0 0
    %531 = vmatmul.mubr.bf16.gmra.mxu0 %v209
    %v532 = vpop.f32.mrf.mxu0
    %v533 = vadd.f32 %v272, %v532
    %v534 = vpop.f32.mrf.mxu0
    %v535 = vpop.f32.mrf.mxu0
    %v536 = vadd.f32 %v272, %v535
    %v537 = vpop.f32.mrf.mxu0
    %538 = vmatprep.mubr.bf16.mxu0 0
    %539 = vmatmul.mubr.bf16.gmra.mxu0 %v210
    %v540 = vpop.f32.mrf.mxu0
    %v541 = vadd.f32 %v272, %v540
    %v542 = vpop.f32.mrf.mxu0
    %v543 = vpop.f32.mrf.mxu0
    %v544 = vadd.f32 %v272, %v543
    %v545 = vpop.f32.mrf.mxu0
    %546 = vmatprep.mubr.bf16.mxu0 0
    %547 = vmatmul.mubr.bf16.gmra.mxu0 %v211
    %v548 = vpop.f32.mrf.mxu0
    %v549 = vadd.f32 %v272, %v548
    %v550 = vpop.f32.mrf.mxu0
    %v551 = vpop.f32.mrf.mxu0
    %v552 = vadd.f32 %v272, %v551
    %v553 = vpop.f32.mrf.mxu0
    %554 = vmatprep.mubr.bf16.mxu0 0
    %555 = vmatmul.mubr.bf16.gmra.mxu0 %v212
    %v556 = vpop.f32.mrf.mxu0
    %v557 = vadd.f32 %v272, %v556
    %v558 = vpop.f32.mrf.mxu0
    %v559 = vpop.f32.mrf.mxu0
    %v560 = vadd.f32 %v272, %v559
    %v561 = vpop.f32.mrf.mxu0
    %562 = vmatprep.mubr.bf16.mxu0 0
    %563 = vmatmul.mubr.bf16.gmra.mxu0 %v213
    %v564 = vpop.f32.mrf.mxu0
    %v565 = vadd.f32 %v272, %v564
    %v566 = vpop.f32.mrf.mxu0
    %v567 = vpop.f32.mrf.mxu0
    %v568 = vadd.f32 %v272, %v567
    %v569 = vpop.f32.mrf.mxu0
    %570 = vmatprep.mubr.bf16.mxu0 0
    %571 = vmatmul.mubr.bf16.gmra.mxu0 %v214
    %v572 = vpop.f32.mrf.mxu0
    %v573 = vadd.f32 %v272, %v572
    %v574 = vpop.f32.mrf.mxu0
    %v575 = vpop.f32.mrf.mxu0
    %v576 = vadd.f32 %v272, %v575
    %v577 = vpop.f32.mrf.mxu0
    %578 = vmatprep.mubr.bf16.mxu0 0
    %579 = vmatmul.mubr.bf16.gmra.mxu0 %v215
    %v580 = vpop.f32.mrf.mxu0
    %v581 = vadd.f32 %v272, %v580
    %v582 = vpop.f32.mrf.mxu0
    %v583 = vpop.f32.mrf.mxu0
    %v584 = vadd.f32 %v272, %v583
    %v585 = vpop.f32.mrf.mxu0
    %586 = vmatprep.mubr.bf16.mxu0 0
    %587 = vmatmul.mubr.bf16.gmra.mxu0 %v216
    %v588 = vpop.f32.mrf.mxu0
    %v589 = vadd.f32 %v272, %v588
    %v590 = vpop.f32.mrf.mxu0
    %v591 = vpop.f32.mrf.mxu0
    %v592 = vadd.f32 %v272, %v591
    %v593 = vpop.f32.mrf.mxu0
    %594 = vmatprep.mubr.bf16.mxu0 0
    %595 = vmatmul.mubr.bf16.gmra.mxu0 %v217
    %v596 = vpop.f32.mrf.mxu0
    %v597 = vadd.f32 %v272, %v596
    %v598 = vpop.f32.mrf.mxu0
    %v599 = vpop.f32.mrf.mxu0
    %v600 = vadd.f32 %v272, %v599
    %v601 = vpop.f32.mrf.mxu0
    %602 = vmatprep.mubr.bf16.mxu0 0
    %603 = vmatmul.mubr.bf16.gmra.mxu0 %v218
    %v604 = vpop.f32.mrf.mxu0
    %v605 = vadd.f32 %v272, %v604
    %v606 = vpop.f32.mrf.mxu0
    %v607 = vpop.f32.mrf.mxu0
    %v608 = vadd.f32 %v272, %v607
    %v609 = vpop.f32.mrf.mxu0
    %610 = vmatprep.mubr.bf16.mxu0 0
    %611 = vmatmul.mubr.bf16.gmra.mxu0 %v219
    %v612 = vpop.f32.mrf.mxu0
    %v613 = vadd.f32 %v272, %v612
    %v614 = vpop.f32.mrf.mxu0
    %v615 = vpop.f32.mrf.mxu0
    %v616 = vadd.f32 %v272, %v615
    %v617 = vpop.f32.mrf.mxu0
    %618 = vmatprep.mubr.bf16.mxu0 0
    %619 = vmatmul.mubr.bf16.gmra.mxu0 %v220
    %v620 = vpop.f32.mrf.mxu0
    %v621 = vadd.f32 %v272, %v620
    %v622 = vpop.f32.mrf.mxu0
    %v623 = vpop.f32.mrf.mxu0
    %v624 = vadd.f32 %v272, %v623
    %v625 = vpop.f32.mrf.mxu0
    %626 = vmatprep.mubr.bf16.mxu0 0
    %627 = vmatmul.mubr.bf16.gmra.mxu0 %v221
    %v628 = vpop.f32.mrf.mxu0
    %v629 = vadd.f32 %v272, %v628
    %v630 = vpop.f32.mrf.mxu0
    %v631 = vpop.f32.mrf.mxu0
    %v632 = vadd.f32 %v272, %v631
    %v633 = vpop.f32.mrf.mxu0
    %634 = vmatprep.mubr.bf16.mxu0 0
    %635 = vmatmul.mubr.bf16.gmra.mxu0 %v222
    %v636 = vpop.f32.mrf.mxu0
    %v637 = vadd.f32 %v272, %v636
    %v638 = vpop.f32.mrf.mxu0
    %v639 = vpop.f32.mrf.mxu0
    %v640 = vadd.f32 %v272, %v639
    %v641 = vpop.f32.mrf.mxu0
    %642 = vmatprep.mubr.bf16.mxu0 0
    %643 = vmatmul.mubr.bf16.gmra.mxu0 %v223
    %v644 = vpop.f32.mrf.mxu0
    %v645 = vadd.f32 %v272, %v644
    %v646 = vpop.f32.mrf.mxu0
    %v647 = vpop.f32.mrf.mxu0
    %v648 = vadd.f32 %v272, %v647
    %v649 = vpop.f32.mrf.mxu0
    %650 = vmatprep.mubr.bf16.mxu0 0
    %651 = vmatmul.mubr.bf16.gmra.mxu0 %v224
    %v652 = vpop.f32.mrf.mxu0
    %v653 = vadd.f32 %v272, %v652
    %v654 = vpop.f32.mrf.mxu0
    %v655 = vpop.f32.mrf.mxu0
    %v656 = vadd.f32 %v272, %v655
    %v657 = vpop.f32.mrf.mxu0
    %658 = vmatprep.mubr.bf16.mxu0 0
    %659 = vmatmul.mubr.bf16.gmra.mxu0 %v225
    %v660 = vpop.f32.mrf.mxu0
    %v661 = vadd.f32 %v272, %v660
    %v662 = vpop.f32.mrf.mxu0
    %v663 = vpop.f32.mrf.mxu0
    %v664 = vadd.f32 %v272, %v663
    %v665 = vpop.f32.mrf.mxu0
    %666 = vmatprep.mubr.bf16.mxu0 0
    %667 = vmatmul.mubr.bf16.gmra.mxu0 %v226
    %v668 = vpop.f32.mrf.mxu0
    %v669 = vadd.f32 %v272, %v668
    %v670 = vpop.f32.mrf.mxu0
    %v671 = vpop.f32.mrf.mxu0
    %v672 = vadd.f32 %v272, %v671
    %v673 = vpop.f32.mrf.mxu0
    %674 = vmatprep.mubr.bf16.mxu0 0
    %675 = vmatmul.mubr.bf16.gmra.mxu0 %v227
    %v676 = vpop.f32.mrf.mxu0
    %v677 = vadd.f32 %v272, %v676
    %v678 = vpop.f32.mrf.mxu0
    %v679 = vpop.f32.mrf.mxu0
    %v680 = vadd.f32 %v272, %v679
    %v681 = vpop.f32.mrf.mxu0
    %682 = vmatprep.mubr.bf16.mxu0 0
    %683 = vmatmul.mubr.bf16.gmra.mxu0 %v228
    %v684 = vpop.f32.mrf.mxu0
    %v685 = vadd.f32 %v272, %v684
    %v686 = vpop.f32.mrf.mxu0
    %v687 = vpop.f32.mrf.mxu0
    %v688 = vadd.f32 %v272, %v687
    %v689 = vpop.f32.mrf.mxu0
    %690 = vmatprep.mubr.bf16.mxu0 0
    %691 = vmatmul.mubr.bf16.gmra.mxu0 %v229
    %v692 = vpop.f32.mrf.mxu0
    %v693 = vadd.f32 %v272, %v692
    %v694 = vpop.f32.mrf.mxu0
    %v695 = vpop.f32.mrf.mxu0
    %v696 = vadd.f32 %v272, %v695
    %v697 = vpop.f32.mrf.mxu0
    %698 = vmatprep.mubr.bf16.mxu0 0
    %699 = vmatmul.mubr.bf16.gmra.mxu0 %v230
    %v700 = vpop.f32.mrf.mxu0
    %v701 = vadd.f32 %v272, %v700
    %v702 = vpop.f32.mrf.mxu0
    %v703 = vpop.f32.mrf.mxu0
    %v704 = vadd.f32 %v272, %v703
    %v705 = vpop.f32.mrf.mxu0
    %706 = vmatprep.mubr.bf16.mxu0 0
    %707 = vmatmul.mubr.bf16.gmra.mxu0 %v231
    %v708 = vpop.f32.mrf.mxu0
    %v709 = vadd.f32 %v272, %v708
    %v710 = vpop.f32.mrf.mxu0
    %v711 = vpop.f32.mrf.mxu0
    %v712 = vadd.f32 %v272, %v711
    %v713 = vpop.f32.mrf.mxu0
    %714 = vmatprep.mubr.bf16.mxu0 0
    %715 = vmatmul.mubr.bf16.gmra.mxu0 %v232
    %v716 = vpop.f32.mrf.mxu0
    %v717 = vadd.f32 %v272, %v716
    %v718 = vpop.f32.mrf.mxu0
    %v719 = vpop.f32.mrf.mxu0
    %v720 = vadd.f32 %v272, %v719
    %v721 = vpop.f32.mrf.mxu0
    %722 = vmatprep.mubr.bf16.mxu0 0
    %723 = vmatmul.mubr.bf16.gmra.mxu0 %v233
    %v724 = vpop.f32.mrf.mxu0
    %v725 = vadd.f32 %v272, %v724
    %v726 = vpop.f32.mrf.mxu0
    %v727 = vpop.f32.mrf.mxu0
    %v728 = vadd.f32 %v272, %v727
    %v729 = vpop.f32.mrf.mxu0
    %730 = vmatprep.mubr.bf16.mxu0 0
    %731 = vmatmul.mubr.bf16.gmra.mxu0 %v234
    %v732 = vpop.f32.mrf.mxu0
    %v733 = vadd.f32 %v272, %v732
    %v734 = vpop.f32.mrf.mxu0
    %v735 = vpop.f32.mrf.mxu0
    %v736 = vadd.f32 %v272, %v735
    %v737 = vpop.f32.mrf.mxu0
    %738 = vmatprep.mubr.bf16.mxu0 0
    %739 = vmatmul.mubr.bf16.gmra.mxu0 %v235
    %v740 = vpop.f32.mrf.mxu0
    %v741 = vadd.f32 %v272, %v740
    %v742 = vpop.f32.mrf.mxu0
    %v743 = vpop.f32.mrf.mxu0
    %v744 = vadd.f32 %v272, %v743
    %v745 = vpop.f32.mrf.mxu0
    %746 = vmatprep.mubr.bf16.mxu0 0
    %747 = vmatmul.mubr.bf16.gmra.mxu0 %v236
    %v748 = vpop.f32.mrf.mxu0
    %v749 = vadd.f32 %v272, %v748
    %v750 = vpop.f32.mrf.mxu0
    %v751 = vpop.f32.mrf.mxu0
    %v752 = vadd.f32 %v272, %v751
    %v753 = vpop.f32.mrf.mxu0
    %754 = vmatprep.mubr.bf16.mxu0 0
    %755 = vmatmul.mubr.bf16.gmra.mxu0 %v237
    %v756 = vpop.f32.mrf.mxu0
    %v757 = vadd.f32 %v272, %v756
    %v758 = vpop.f32.mrf.mxu0
    %v759 = vpop.f32.mrf.mxu0
    %v760 = vadd.f32 %v272, %v759
    %v761 = vpop.f32.mrf.mxu0
    %762 = vmatprep.mubr.bf16.mxu0 0
    %763 = vmatmul.mubr.bf16.gmra.mxu0 %v238
    %v764 = vpop.f32.mrf.mxu0
    %v765 = vadd.f32 %v272, %v764
    %v766 = vpop.f32.mrf.mxu0
    %v767 = vpop.f32.mrf.mxu0
    %v768 = vadd.f32 %v272, %v767
    %v769 = vpop.f32.mrf.mxu0
    %770 = vmatprep.mubr.bf16.mxu0 0
    %771 = vmatmul.mubr.bf16.gmra.mxu0 %v239
    %v772 = vpop.f32.mrf.mxu0
    %v773 = vadd.f32 %v272, %v772
    %v774 = vpop.f32.mrf.mxu0
    %v775 = vpop.f32.mrf.mxu0
    %v776 = vadd.f32 %v272, %v775
    %v777 = vpop.f32.mrf.mxu0
    %778 = vmatprep.mubr.bf16.mxu0 0
    %779 = vmatmul.mubr.bf16.gmra.mxu0 %v240
    %v780 = vpop.f32.mrf.mxu0
    %v781 = vadd.f32 %v272, %v780
    %v782 = vpop.f32.mrf.mxu0
    %v783 = vpop.f32.mrf.mxu0
    %v784 = vadd.f32 %v272, %v783
    %v785 = vpop.f32.mrf.mxu0
    %786 = vmatprep.mubr.bf16.mxu0 0
    %787 = vmatmul.mubr.bf16.gmra.mxu0 %v241
    %v788 = vpop.f32.mrf.mxu0
    %v789 = vadd.f32 %v272, %v788
    %v790 = vpop.f32.mrf.mxu0
    %v791 = vpop.f32.mrf.mxu0
    %v792 = vadd.f32 %v272, %v791
    %v793 = vpop.f32.mrf.mxu0
    %794 = vmatprep.mubr.bf16.mxu0 0
    %795 = vmatmul.mubr.bf16.gmra.mxu0 %v242
    %v796 = vpop.f32.mrf.mxu0
    %v797 = vadd.f32 %v272, %v796
    %v798 = vpop.f32.mrf.mxu0
    %v799 = vpop.f32.mrf.mxu0
    %v800 = vadd.f32 %v272, %v799
    %v801 = vpop.f32.mrf.mxu0
    %802 = vmatprep.mubr.bf16.mxu0 0
    %803 = vmatmul.mubr.bf16.gmra.mxu0 %v243
    %v804 = vpop.f32.mrf.mxu0
    %v805 = vadd.f32 %v272, %v804
    %v806 = vpop.f32.mrf.mxu0
    %v807 = vpop.f32.mrf.mxu0
    %v808 = vadd.f32 %v272, %v807
    %v809 = vpop.f32.mrf.mxu0
    %810 = vmatprep.mubr.bf16.mxu0 0
    %811 = vmatmul.mubr.bf16.gmra.mxu0 %v244
    %v812 = vpop.f32.mrf.mxu0
    %v813 = vadd.f32 %v272, %v812
    %v814 = vpop.f32.mrf.mxu0
    %v815 = vpop.f32.mrf.mxu0
    %v816 = vadd.f32 %v272, %v815
    %v817 = vpop.f32.mrf.mxu0
    %818 = vmatprep.mubr.bf16.mxu0 0
    %819 = vmatmul.mubr.bf16.gmra.mxu0 %v245
    %v820 = vpop.f32.mrf.mxu0
    %v821 = vadd.f32 %v272, %v820
    %v822 = vpop.f32.mrf.mxu0
    %v823 = vpop.f32.mrf.mxu0
    %v824 = vadd.f32 %v272, %v823
    %v825 = vpop.f32.mrf.mxu0
    %826 = vmatprep.mubr.bf16.mxu0 0
    %827 = vmatmul.mubr.bf16.gmra.mxu0 %v246
    %v828 = vpop.f32.mrf.mxu0
    %v829 = vadd.f32 %v272, %v828
    %v830 = vpop.f32.mrf.mxu0
    %v831 = vpop.f32.mrf.mxu0
    %v832 = vadd.f32 %v272, %v831
    %v833 = vpop.f32.mrf.mxu0
    %834 = vmatprep.mubr.bf16.mxu0 0
    %835 = vmatmul.mubr.bf16.gmra.mxu0 %v247
    %v836 = vpop.f32.mrf.mxu0
    %v837 = vadd.f32 %v272, %v836
    %v838 = vpop.f32.mrf.mxu0
    %v839 = vpop.f32.mrf.mxu0
    %v840 = vadd.f32 %v272, %v839
    %v841 = vpop.f32.mrf.mxu0
    %842 = vmatprep.mubr.bf16.mxu0 0
    %843 = vmatmul.mubr.bf16.gmra.mxu0 %v248
    %v844 = vpop.f32.mrf.mxu0
    %v845 = vadd.f32 %v272, %v844
    %v846 = vpop.f32.mrf.mxu0
    %v847 = vpop.f32.mrf.mxu0
    %v848 = vadd.f32 %v272, %v847
    %v849 = vpop.f32.mrf.mxu0
    %850 = vmatprep.mubr.bf16.mxu0 0
    %851 = vmatmul.mubr.bf16.gmra.mxu0 %v249
    %v852 = vpop.f32.mrf.mxu0
    %v853 = vadd.f32 %v272, %v852
    %v854 = vpop.f32.mrf.mxu0
    %v855 = vpop.f32.mrf.mxu0
    %v856 = vadd.f32 %v272, %v855
    %v857 = vpop.f32.mrf.mxu0
    %858 = vmatprep.mubr.bf16.mxu0 0
    %859 = vmatmul.mubr.bf16.gmra.mxu0 %v250
    %v860 = vpop.f32.mrf.mxu0
    %v861 = vadd.f32 %v272, %v860
    %v862 = vpop.f32.mrf.mxu0
    %v863 = vpop.f32.mrf.mxu0
    %v864 = vadd.f32 %v272, %v863
    %v865 = vpop.f32.mrf.mxu0
    %866 = vdwg.mxu0
    %v867 = vmax.f32 %v357, 0.0
    %v868 = vmax.f32 %v360, 0.0
    %v869 = vmax.f32 %v365, 0.0
    %v870 = vmax.f32 %v368, 0.0
    %v871 = vmax.f32 %v373, 0.0
    %v872 = vmax.f32 %v376, 0.0
    %v873 = vmax.f32 %v381, 0.0
    %v874 = vmax.f32 %v384, 0.0
    %v875 = vmax.f32 %v389, 0.0
    %v876 = vmax.f32 %v392, 0.0
    %v877 = vmax.f32 %v397, 0.0
    %v878 = vmax.f32 %v400, 0.0
    %v879 = vmax.f32 %v405, 0.0
    %v880 = vmax.f32 %v408, 0.0
    %v881 = vmax.f32 %v413, 0.0
    %v882 = vmax.f32 %v416, 0.0
    %v883 = vmax.f32 %v421, 0.0
    %v884 = vmax.f32 %v424, 0.0
    %v885 = vmax.f32 %v429, 0.0
    %v886 = vmax.f32 %v432, 0.0
    %v887 = vmax.f32 %v437, 0.0
    %v888 = vmax.f32 %v440, 0.0
    %v889 = vmax.f32 %v445, 0.0
    %v890 = vmax.f32 %v448, 0.0
    %v891 = vmax.f32 %v453, 0.0
    %v892 = vmax.f32 %v456, 0.0
    %v893 = vmax.f32 %v461, 0.0
    %v894 = vmax.f32 %v464, 0.0
    %v895 = vmax.f32 %v469, 0.0
    %v896 = vmax.f32 %v472, 0.0
    %v897 = vmax.f32 %v477, 0.0
    %v898 = vmax.f32 %v480, 0.0
    %v899 = vmax.f32 %v485, 0.0
    %v900 = vmax.f32 %v488, 0.0
    %v901 = vmax.f32 %v493, 0.0
    %v902 = vmax.f32 %v496, 0.0
    %v903 = vmax.f32 %v501, 0.0
    %v904 = vmax.f32 %v504, 0.0
    %v905 = vmax.f32 %v509, 0.0
    %v906 = vmax.f32 %v512, 0.0
    %v907 = vmax.f32 %v517, 0.0
    %v908 = vmax.f32 %v520, 0.0
    %v909 = vmax.f32 %v525, 0.0
    %v910 = vmax.f32 %v528, 0.0
    %v911 = vmax.f32 %v533, 0.0
    %v912 = vmax.f32 %v536, 0.0
    %v913 = vmax.f32 %v541, 0.0
    %v914 = vmax.f32 %v544, 0.0
    %v915 = vmax.f32 %v549, 0.0
    %v916 = vmax.f32 %v552, 0.0
    %v917 = vmax.f32 %v557, 0.0
    %v918 = vmax.f32 %v560, 0.0
    %v919 = vmax.f32 %v565, 0.0
    %v920 = vmax.f32 %v568, 0.0
    %v921 = vmax.f32 %v573, 0.0
    %v922 = vmax.f32 %v576, 0.0
    %v923 = vmax.f32 %v581, 0.0
    %v924 = vmax.f32 %v584, 0.0
    %v925 = vmax.f32 %v589, 0.0
    %v926 = vmax.f32 %v592, 0.0
    %v927 = vmax.f32 %v597, 0.0
    %v928 = vmax.f32 %v600, 0.0
    %v929 = vmax.f32 %v605, 0.0
    %v930 = vmax.f32 %v608, 0.0
    %v931 = vmax.f32 %v613, 0.0
    %v932 = vmax.f32 %v616, 0.0
    %v933 = vmax.f32 %v621, 0.0
    %v934 = vmax.f32 %v624, 0.0
    %v935 = vmax.f32 %v629, 0.0
    %v936 = vmax.f32 %v632, 0.0
    %v937 = vmax.f32 %v637, 0.0
    %v938 = vmax.f32 %v640, 0.0
    %v939 = vmax.f32 %v645, 0.0
    %v940 = vmax.f32 %v648, 0.0
    %v941 = vmax.f32 %v653, 0.0
    %v942 = vmax.f32 %v656, 0.0
    %v943 = vmax.f32 %v661, 0.0
    %v944 = vmax.f32 %v664, 0.0
    %v945 = vmax.f32 %v669, 0.0
    %v946 = vmax.f32 %v672, 0.0
    %v947 = vmax.f32 %v677, 0.0
    %v948 = vmax.f32 %v680, 0.0
    %v949 = vmax.f32 %v685, 0.0
    %v950 = vmax.f32 %v688, 0.0
    %v951 = vmax.f32 %v693, 0.0
    %v952 = vmax.f32 %v696, 0.0
    %v953 = vmax.f32 %v701, 0.0
    %v954 = vmax.f32 %v704, 0.0
    %v955 = vmax.f32 %v709, 0.0
    %v956 = vmax.f32 %v712, 0.0
    %v957 = vmax.f32 %v717, 0.0
    %v958 = vmax.f32 %v720, 0.0
    %v959 = vmax.f32 %v725, 0.0
    %v960 = vmax.f32 %v728, 0.0
    %v961 = vmax.f32 %v733, 0.0
    %v962 = vmax.f32 %v736, 0.0
    %v963 = vmax.f32 %v741, 0.0
    %v964 = vmax.f32 %v744, 0.0
    %v965 = vmax.f32 %v749, 0.0
    %v966 = vmax.f32 %v752, 0.0
    %v967 = vmax.f32 %v757, 0.0
    %v968 = vmax.f32 %v760, 0.0
    %v969 = vmax.f32 %v765, 0.0
    %v970 = vmax.f32 %v768, 0.0
    %v971 = vmax.f32 %v773, 0.0
    %v972 = vmax.f32 %v776, 0.0
    %v973 = vmax.f32 %v781, 0.0
    %v974 = vmax.f32 %v784, 0.0
    %v975 = vmax.f32 %v789, 0.0
    %v976 = vmax.f32 %v792, 0.0
    %v977 = vmax.f32 %v797, 0.0
    %v978 = vmax.f32 %v800, 0.0
    %v979 = vmax.f32 %v805, 0.0
    %v980 = vmax.f32 %v808, 0.0
    %v981 = vmax.f32 %v813, 0.0
    %v982 = vmax.f32 %v816, 0.0
    %v983 = vmax.f32 %v821, 0.0
    %v984 = vmax.f32 %v824, 0.0
    %v985 = vmax.f32 %v829, 0.0
    %v986 = vmax.f32 %v832, 0.0
    %v987 = vmax.f32 %v837, 0.0
    %v988 = vmax.f32 %v840, 0.0
    %v989 = vmax.f32 %v845, 0.0
    %v990 = vmax.f32 %v848, 0.0
    %v991 = vmax.f32 %v853, 0.0
    %v992 = vmax.f32 %v856, 0.0
    %v993 = vmax.f32 %v861, 0.0
    %v994 = vmax.f32 %v864, 0.0
    %v995 = vpack.c.bf16 %v868, %v867
    %v996 = vpack.c.bf16 %v870, %v869
    %v997 = vpack.c.bf16 %v872, %v871
    %v998 = vpack.c.bf16 %v874, %v873
    %v999 = vpack.c.bf16 %v876, %v875
    %v1000 = vpack.c.bf16 %v878, %v877
    %v1001 = vpack.c.bf16 %v880, %v879
    %v1002 = vpack.c.bf16 %v882, %v881
    %v1003 = vpack.c.bf16 %v884, %v883
    %v1004 = vpack.c.bf16 %v886, %v885
    %v1005 = vpack.c.bf16 %v888, %v887
    %v1006 = vpack.c.bf16 %v890, %v889
    %v1007 = vpack.c.bf16 %v892, %v891
    %v1008 = vpack.c.bf16 %v894, %v893
    %v1009 = vpack.c.bf16 %v896, %v895
    %v1010 = vpack.c.bf16 %v898, %v897
    %v1011 = vpack.c.bf16 %v900, %v899
    %v1012 = vpack.c.bf16 %v902, %v901
    %v1013 = vpack.c.bf16 %v904, %v903
    %v1014 = vpack.c.bf16 %v906, %v905
    %v1015 = vpack.c.bf16 %v908, %v907
    %v1016 = vpack.c.bf16 %v910, %v909
    %v1017 = vpack.c.bf16 %v912, %v911
    %v1018 = vpack.c.bf16 %v914, %v913
    %v1019 = vpack.c.bf16 %v916, %v915
    %v1020 = vpack.c.bf16 %v918, %v917
    %v1021 = vpack.c.bf16 %v920, %v919
    %v1022 = vpack.c.bf16 %v922, %v921
    %v1023 = vpack.c.bf16 %v924, %v923
    %v1024 = vpack.c.bf16 %v926, %v925
    %v1025 = vpack.c.bf16 %v928, %v927
    %v1026 = vpack.c.bf16 %v930, %v929
    %v1027 = vpack.c.bf16 %v932, %v931
    %v1028 = vpack.c.bf16 %v934, %v933
    %v1029 = vpack.c.bf16 %v936, %v935
    %v1030 = vpack.c.bf16 %v938, %v937
    %v1031 = vpack.c.bf16 %v940, %v939
    %v1032 = vpack.c.bf16 %v942, %v941
    %v1033 = vpack.c.bf16 %v944, %v943
    %v1034 = vpack.c.bf16 %v946, %v945
    %v1035 = vpack.c.bf16 %v948, %v947
    %v1036 = vpack.c.bf16 %v950, %v949
    %v1037 = vpack.c.bf16 %v952, %v951
    %v1038 = vpack.c.bf16 %v954, %v953
    %v1039 = vpack.c.bf16 %v956, %v955
    %v1040 = vpack.c.bf16 %v958, %v957
    %v1041 = vpack.c.bf16 %v960, %v959
    %v1042 = vpack.c.bf16 %v962, %v961
    %v1043 = vpack.c.bf16 %v964, %v963
    %v1044 = vpack.c.bf16 %v966, %v965
    %v1045 = vpack.c.bf16 %v968, %v967
    %v1046 = vpack.c.bf16 %v970, %v969
    %v1047 = vpack.c.bf16 %v972, %v971
    %v1048 = vpack.c.bf16 %v974, %v973
    %v1049 = vpack.c.bf16 %v976, %v975
    %v1050 = vpack.c.bf16 %v978, %v977
    %v1051 = vpack.c.bf16 %v980, %v979
    %v1052 = vpack.c.bf16 %v982, %v981
    %v1053 = vpack.c.bf16 %v984, %v983
    %v1054 = vpack.c.bf16 %v986, %v985
    %v1055 = vpack.c.bf16 %v988, %v987
    %v1056 = vpack.c.bf16 %v990, %v989
    %v1057 = vpack.c.bf16 %v992, %v991
    %v1058 = vpack.c.bf16 %v994, %v993
    %v1059 = vld [vmem:[%s3] sm:$0xf]
    %v1060 = vld [vmem:[%s3 + $0x4] sm:$0xf]
    %v1061 = vld [vmem:[%s3 + $0x8] sm:$0xf]
    %v1062 = vld [vmem:[%s3 + $0xc] sm:$0xf]
    %v1063 = vld [vmem:[%s3 + $0x10] sm:$0xf]
    %v1064 = vld [vmem:[%s3 + $0x14] sm:$0xf]
    %v1065 = vld [vmem:[%s3 + $0x18] sm:$0xf]
    %v1066 = vld [vmem:[%s3 + $0x1c] sm:$0xf]
    %v1067 = vld [vmem:[%s4] sm:$0x1]
    %v1069 = vlaneseq
    %v1070 = vshrl.u32 %v1069, 7
    %v1071 = vsub.s32 0, %v1070
    %v1072 = vrot.slane %v1067, %v1071
    %v1082 = vunpack.c.l.b16 %v1059
    %v1083 = vunpack.c.l.b16 %v1060
    %v1084 = vunpack.c.l.b16 %v1061
    %v1085 = vunpack.c.l.b16 %v1062
    %v1086 = vunpack.c.l.b16 %v1063
    %v1087 = vunpack.c.l.b16 %v1064
    %v1088 = vunpack.c.l.b16 %v1065
    %v1089 = vunpack.c.l.b16 %v1066
    %v1090 = vpack.c.b16 %v1083, %v1082
    %v1091 = vpack.c.b16 %v1085, %v1084
    %v1092 = vpack.c.b16 %v1087, %v1086
    %v1093 = vpack.c.b16 %v1089, %v1088
    %vm1098 = vcmask 523264
    %v1100 = vsel %vm1098, %v995, 0
    %v1103 = vsel %vm1098, %v996, 0
    %v1106 = vsel %vm1098, %v997, 0
    %v1109 = vsel %vm1098, %v998, 0
    %v1112 = vsel %vm1098, %v999, 0
    %v1115 = vsel %vm1098, %v1000, 0
    %v1118 = vsel %vm1098, %v1001, 0
    %v1121 = vsel %vm1098, %v1002, 0
    %v1124 = vsel %vm1098, %v1003, 0
    %v1127 = vsel %vm1098, %v1004, 0
    %v1130 = vsel %vm1098, %v1005, 0
    %v1133 = vsel %vm1098, %v1006, 0
    %v1136 = vsel %vm1098, %v1007, 0
    %v1139 = vsel %vm1098, %v1008, 0
    %v1142 = vsel %vm1098, %v1009, 0
    %v1145 = vsel %vm1098, %v1010, 0
    %v1148 = vsel %vm1098, %v1011, 0
    %v1151 = vsel %vm1098, %v1012, 0
    %v1154 = vsel %vm1098, %v1013, 0
    %v1157 = vsel %vm1098, %v1014, 0
    %v1160 = vsel %vm1098, %v1015, 0
    %v1163 = vsel %vm1098, %v1016, 0
    %v1166 = vsel %vm1098, %v1017, 0
    %v1169 = vsel %vm1098, %v1018, 0
    %v1172 = vsel %vm1098, %v1019, 0
    %v1175 = vsel %vm1098, %v1020, 0
    %v1178 = vsel %vm1098, %v1021, 0
    %v1181 = vsel %vm1098, %v1022, 0
    %v1184 = vsel %vm1098, %v1023, 0
    %v1187 = vsel %vm1098, %v1024, 0
    %v1190 = vsel %vm1098, %v1025, 0
    %v1193 = vsel %vm1098, %v1026, 0
    %v1196 = vsel %vm1098, %v1027, 0
    %v1199 = vsel %vm1098, %v1028, 0
    %v1202 = vsel %vm1098, %v1029, 0
    %v1205 = vsel %vm1098, %v1030, 0
    %v1208 = vsel %vm1098, %v1031, 0
    %v1211 = vsel %vm1098, %v1032, 0
    %v1214 = vsel %vm1098, %v1033, 0
    %v1217 = vsel %vm1098, %v1034, 0
    %v1220 = vsel %vm1098, %v1035, 0
    %v1223 = vsel %vm1098, %v1036, 0
    %v1226 = vsel %vm1098, %v1037, 0
    %v1229 = vsel %vm1098, %v1038, 0
    %v1232 = vsel %vm1098, %v1039, 0
    %v1235 = vsel %vm1098, %v1040, 0
    %v1238 = vsel %vm1098, %v1041, 0
    %v1241 = vsel %vm1098, %v1042, 0
    %v1244 = vsel %vm1098, %v1043, 0
    %v1247 = vsel %vm1098, %v1044, 0
    %v1250 = vsel %vm1098, %v1045, 0
    %v1253 = vsel %vm1098, %v1046, 0
    %v1256 = vsel %vm1098, %v1047, 0
    %v1259 = vsel %vm1098, %v1048, 0
    %v1262 = vsel %vm1098, %v1049, 0
    %v1265 = vsel %vm1098, %v1050, 0
    %v1268 = vsel %vm1098, %v1051, 0
    %v1271 = vsel %vm1098, %v1052, 0
    %v1274 = vsel %vm1098, %v1053, 0
    %v1277 = vsel %vm1098, %v1054, 0
    %v1280 = vsel %vm1098, %v1055, 0
    %v1283 = vsel %vm1098, %v1056, 0
    %v1286 = vsel %vm1098, %v1057, 0
    %v1289 = vsel %vm1098, %v1058, 0
    %1291 = vmatprep.subr.bf16.mxu0 0
    %1292 = vmatpush1.bf16.msra.mxu0 0
    %1293 = vmatprep.subr.bf16.mxu0 0
    %1294 = vmatpush1.bf16.msra.mxu0 0
    %1295 = vmatprep.subr.bf16.mxu0 0
    %1296 = vmatpush1.bf16.msra.mxu0 0
    %1297 = vmatprep.subr.bf16.mxu0 0
    %1298 = vmatpush1.bf16.msra.mxu0 0
    %1299 = vmatprep.subr.bf16.mxu0 0
    %1300 = vmatpush1.bf16.msra.mxu0 %v1093
    %1301 = vmatprep.subr.bf16.mxu0 0
    %1302 = vmatpush1.bf16.msra.mxu0 %v1092
    %1303 = vmatprep.subr.bf16.mxu0 0
    %1304 = vmatpush1.bf16.msra.mxu0 %v1091
    %1305 = vmatprep.subr.bf16.mxu0 0
    %1306 = vmatpush1.bf16.msra.mxu0 %v1090
    %1307 = vmatprep.subr.bf16.mxu0 0
    %1308 = vmatpush2.bf16.msra.mxu0 0
    %1309 = vmatprep.subr.bf16.mxu0 0
    %1310 = vmatpush2.bf16.msra.mxu0 0
    %1311 = vmatprep.subr.bf16.mxu0 0
    %1312 = vmatpush2.bf16.msra.mxu0 0
    %1313 = vmatprep.subr.bf16.mxu0 0
    %1314 = vmatpush2.bf16.msra.mxu0 0
    %1315 = vmatprep.subr.bf16.mxu0 0
    %1316 = vmatpush2.bf16.msra.mxu0 0
    %1317 = vmatprep.subr.bf16.mxu0 0
    %1318 = vmatpush2.bf16.msra.mxu0 0
    %1319 = vmatprep.subr.bf16.mxu0 0
    %1320 = vmatpush2.bf16.msra.mxu0 0
    %1321 = vmatprep.subr.bf16.mxu0 0
    %1322 = vmatpush2.bf16.msra.mxu0 0
    %1323 = vmatprep.mubr.bf16.mxu0 0
    %1324 = vmatmul.mubr.bf16.gmra.mxu0 %v1100
    %v1325 = vpop.f32.mrf.mxu0
    %v1326 = vadd.f32 %v1072, %v1325
    %v1327 = vpop.f32.mrf.mxu0
    %v1328 = vpop.f32.mrf.mxu0
    %v1329 = vadd.f32 %v1072, %v1328
    %v1330 = vpop.f32.mrf.mxu0
    %1331 = vmatprep.mubr.bf16.mxu0 0
    %1332 = vmatmul.mubr.bf16.gmra.mxu0 %v1103
    %v1333 = vpop.f32.mrf.mxu0
    %v1334 = vadd.f32 %v1072, %v1333
    %v1335 = vpop.f32.mrf.mxu0
    %v1336 = vpop.f32.mrf.mxu0
    %v1337 = vadd.f32 %v1072, %v1336
    %v1338 = vpop.f32.mrf.mxu0
    %1339 = vmatprep.mubr.bf16.mxu0 0
    %1340 = vmatmul.mubr.bf16.gmra.mxu0 %v1106
    %v1341 = vpop.f32.mrf.mxu0
    %v1342 = vadd.f32 %v1072, %v1341
    %v1343 = vpop.f32.mrf.mxu0
    %v1344 = vpop.f32.mrf.mxu0
    %v1345 = vadd.f32 %v1072, %v1344
    %v1346 = vpop.f32.mrf.mxu0
    %1347 = vmatprep.mubr.bf16.mxu0 0
    %1348 = vmatmul.mubr.bf16.gmra.mxu0 %v1109
    %v1349 = vpop.f32.mrf.mxu0
    %v1350 = vadd.f32 %v1072, %v1349
    %v1351 = vpop.f32.mrf.mxu0
    %v1352 = vpop.f32.mrf.mxu0
    %v1353 = vadd.f32 %v1072, %v1352
    %v1354 = vpop.f32.mrf.mxu0
    %1355 = vmatprep.mubr.bf16.mxu0 0
    %1356 = vmatmul.mubr.bf16.gmra.mxu0 %v1112
    %v1357 = vpop.f32.mrf.mxu0
    %v1358 = vadd.f32 %v1072, %v1357
    %v1359 = vpop.f32.mrf.mxu0
    %v1360 = vpop.f32.mrf.mxu0
    %v1361 = vadd.f32 %v1072, %v1360
    %v1362 = vpop.f32.mrf.mxu0
    %1363 = vmatprep.mubr.bf16.mxu0 0
    %1364 = vmatmul.mubr.bf16.gmra.mxu0 %v1115
    %v1365 = vpop.f32.mrf.mxu0
    %v1366 = vadd.f32 %v1072, %v1365
    %v1367 = vpop.f32.mrf.mxu0
    %v1368 = vpop.f32.mrf.mxu0
    %v1369 = vadd.f32 %v1072, %v1368
    %v1370 = vpop.f32.mrf.mxu0
    %1371 = vmatprep.mubr.bf16.mxu0 0
    %1372 = vmatmul.mubr.bf16.gmra.mxu0 %v1118
    %v1373 = vpop.f32.mrf.mxu0
    %v1374 = vadd.f32 %v1072, %v1373
    %v1375 = vpop.f32.mrf.mxu0
    %v1376 = vpop.f32.mrf.mxu0
    %v1377 = vadd.f32 %v1072, %v1376
    %v1378 = vpop.f32.mrf.mxu0
    %1379 = vmatprep.mubr.bf16.mxu0 0
    %1380 = vmatmul.mubr.bf16.gmra.mxu0 %v1121
    %v1381 = vpop.f32.mrf.mxu0
    %v1382 = vadd.f32 %v1072, %v1381
    %v1383 = vpop.f32.mrf.mxu0
    %v1384 = vpop.f32.mrf.mxu0
    %v1385 = vadd.f32 %v1072, %v1384
    %v1386 = vpop.f32.mrf.mxu0
    %1387 = vmatprep.mubr.bf16.mxu0 0
    %1388 = vmatmul.mubr.bf16.gmra.mxu0 %v1124
    %v1389 = vpop.f32.mrf.mxu0
    %v1390 = vadd.f32 %v1072, %v1389
    %v1391 = vpop.f32.mrf.mxu0
    %v1392 = vpop.f32.mrf.mxu0
    %v1393 = vadd.f32 %v1072, %v1392
    %v1394 = vpop.f32.mrf.mxu0
    %1395 = vmatprep.mubr.bf16.mxu0 0
    %1396 = vmatmul.mubr.bf16.gmra.mxu0 %v1127
    %v1397 = vpop.f32.mrf.mxu0
    %v1398 = vadd.f32 %v1072, %v1397
    %v1399 = vpop.f32.mrf.mxu0
    %v1400 = vpop.f32.mrf.mxu0
    %v1401 = vadd.f32 %v1072, %v1400
    %v1402 = vpop.f32.mrf.mxu0
    %1403 = vmatprep.mubr.bf16.mxu0 0
    %1404 = vmatmul.mubr.bf16.gmra.mxu0 %v1130
    %v1405 = vpop.f32.mrf.mxu0
    %v1406 = vadd.f32 %v1072, %v1405
    %v1407 = vpop.f32.mrf.mxu0
    %v1408 = vpop.f32.mrf.mxu0
    %v1409 = vadd.f32 %v1072, %v1408
    %v1410 = vpop.f32.mrf.mxu0
    %1411 = vmatprep.mubr.bf16.mxu0 0
    %1412 = vmatmul.mubr.bf16.gmra.mxu0 %v1133
    %v1413 = vpop.f32.mrf.mxu0
    %v1414 = vadd.f32 %v1072, %v1413
    %v1415 = vpop.f32.mrf.mxu0
    %v1416 = vpop.f32.mrf.mxu0
    %v1417 = vadd.f32 %v1072, %v1416
    %v1418 = vpop.f32.mrf.mxu0
    %1419 = vmatprep.mubr.bf16.mxu0 0
    %1420 = vmatmul.mubr.bf16.gmra.mxu0 %v1136
    %v1421 = vpop.f32.mrf.mxu0
    %v1422 = vadd.f32 %v1072, %v1421
    %v1423 = vpop.f32.mrf.mxu0
    %v1424 = vpop.f32.mrf.mxu0
    %v1425 = vadd.f32 %v1072, %v1424
    %v1426 = vpop.f32.mrf.mxu0
    %1427 = vmatprep.mubr.bf16.mxu0 0
    %1428 = vmatmul.mubr.bf16.gmra.mxu0 %v1139
    %v1429 = vpop.f32.mrf.mxu0
    %v1430 = vadd.f32 %v1072, %v1429
    %v1431 = vpop.f32.mrf.mxu0
    %v1432 = vpop.f32.mrf.mxu0
    %v1433 = vadd.f32 %v1072, %v1432
    %v1434 = vpop.f32.mrf.mxu0
    %1435 = vmatprep.mubr.bf16.mxu0 0
    %1436 = vmatmul.mubr.bf16.gmra.mxu0 %v1142
    %v1437 = vpop.f32.mrf.mxu0
    %v1438 = vadd.f32 %v1072, %v1437
    %v1439 = vpop.f32.mrf.mxu0
    %v1440 = vpop.f32.mrf.mxu0
    %v1441 = vadd.f32 %v1072, %v1440
    %v1442 = vpop.f32.mrf.mxu0
    %1443 = vmatprep.mubr.bf16.mxu0 0
    %1444 = vmatmul.mubr.bf16.gmra.mxu0 %v1145
    %v1445 = vpop.f32.mrf.mxu0
    %v1446 = vadd.f32 %v1072, %v1445
    %v1447 = vpop.f32.mrf.mxu0
    %v1448 = vpop.f32.mrf.mxu0
    %v1449 = vadd.f32 %v1072, %v1448
    %v1450 = vpop.f32.mrf.mxu0
    %1451 = vmatprep.mubr.bf16.mxu0 0
    %1452 = vmatmul.mubr.bf16.gmra.mxu0 %v1148
    %v1453 = vpop.f32.mrf.mxu0
    %v1454 = vadd.f32 %v1072, %v1453
    %v1455 = vpop.f32.mrf.mxu0
    %v1456 = vpop.f32.mrf.mxu0
    %v1457 = vadd.f32 %v1072, %v1456
    %v1458 = vpop.f32.mrf.mxu0
    %1459 = vmatprep.mubr.bf16.mxu0 0
    %1460 = vmatmul.mubr.bf16.gmra.mxu0 %v1151
    %v1461 = vpop.f32.mrf.mxu0
    %v1462 = vadd.f32 %v1072, %v1461
    %v1463 = vpop.f32.mrf.mxu0
    %v1464 = vpop.f32.mrf.mxu0
    %v1465 = vadd.f32 %v1072, %v1464
    %v1466 = vpop.f32.mrf.mxu0
    %1467 = vmatprep.mubr.bf16.mxu0 0
    %1468 = vmatmul.mubr.bf16.gmra.mxu0 %v1154
    %v1469 = vpop.f32.mrf.mxu0
    %v1470 = vadd.f32 %v1072, %v1469
    %v1471 = vpop.f32.mrf.mxu0
    %v1472 = vpop.f32.mrf.mxu0
    %v1473 = vadd.f32 %v1072, %v1472
    %v1474 = vpop.f32.mrf.mxu0
    %1475 = vmatprep.mubr.bf16.mxu0 0
    %1476 = vmatmul.mubr.bf16.gmra.mxu0 %v1157
    %v1477 = vpop.f32.mrf.mxu0
    %v1478 = vadd.f32 %v1072, %v1477
    %v1479 = vpop.f32.mrf.mxu0
    %v1480 = vpop.f32.mrf.mxu0
    %v1481 = vadd.f32 %v1072, %v1480
    %v1482 = vpop.f32.mrf.mxu0
    %1483 = vmatprep.mubr.bf16.mxu0 0
    %1484 = vmatmul.mubr.bf16.gmra.mxu0 %v1160
    %v1485 = vpop.f32.mrf.mxu0
    %v1486 = vadd.f32 %v1072, %v1485
    %v1487 = vpop.f32.mrf.mxu0
    %v1488 = vpop.f32.mrf.mxu0
    %v1489 = vadd.f32 %v1072, %v1488
    %v1490 = vpop.f32.mrf.mxu0
    %1491 = vmatprep.mubr.bf16.mxu0 0
    %1492 = vmatmul.mubr.bf16.gmra.mxu0 %v1163
    %v1493 = vpop.f32.mrf.mxu0
    %v1494 = vadd.f32 %v1072, %v1493
    %v1495 = vpop.f32.mrf.mxu0
    %v1496 = vpop.f32.mrf.mxu0
    %v1497 = vadd.f32 %v1072, %v1496
    %v1498 = vpop.f32.mrf.mxu0
    %1499 = vmatprep.mubr.bf16.mxu0 0
    %1500 = vmatmul.mubr.bf16.gmra.mxu0 %v1166
    %v1501 = vpop.f32.mrf.mxu0
    %v1502 = vadd.f32 %v1072, %v1501
    %v1503 = vpop.f32.mrf.mxu0
    %v1504 = vpop.f32.mrf.mxu0
    %v1505 = vadd.f32 %v1072, %v1504
    %v1506 = vpop.f32.mrf.mxu0
    %1507 = vmatprep.mubr.bf16.mxu0 0
    %1508 = vmatmul.mubr.bf16.gmra.mxu0 %v1169
    %v1509 = vpop.f32.mrf.mxu0
    %v1510 = vadd.f32 %v1072, %v1509
    %v1511 = vpop.f32.mrf.mxu0
    %v1512 = vpop.f32.mrf.mxu0
    %v1513 = vadd.f32 %v1072, %v1512
    %v1514 = vpop.f32.mrf.mxu0
    %1515 = vmatprep.mubr.bf16.mxu0 0
    %1516 = vmatmul.mubr.bf16.gmra.mxu0 %v1172
    %v1517 = vpop.f32.mrf.mxu0
    %v1518 = vadd.f32 %v1072, %v1517
    %v1519 = vpop.f32.mrf.mxu0
    %v1520 = vpop.f32.mrf.mxu0
    %v1521 = vadd.f32 %v1072, %v1520
    %v1522 = vpop.f32.mrf.mxu0
    %1523 = vmatprep.mubr.bf16.mxu0 0
    %1524 = vmatmul.mubr.bf16.gmra.mxu0 %v1175
    %v1525 = vpop.f32.mrf.mxu0
    %v1526 = vadd.f32 %v1072, %v1525
    %v1527 = vpop.f32.mrf.mxu0
    %v1528 = vpop.f32.mrf.mxu0
    %v1529 = vadd.f32 %v1072, %v1528
    %v1530 = vpop.f32.mrf.mxu0
    %1531 = vmatprep.mubr.bf16.mxu0 0
    %1532 = vmatmul.mubr.bf16.gmra.mxu0 %v1178
    %v1533 = vpop.f32.mrf.mxu0
    %v1534 = vadd.f32 %v1072, %v1533
    %v1535 = vpop.f32.mrf.mxu0
    %v1536 = vpop.f32.mrf.mxu0
    %v1537 = vadd.f32 %v1072, %v1536
    %v1538 = vpop.f32.mrf.mxu0
    %1539 = vmatprep.mubr.bf16.mxu0 0
    %1540 = vmatmul.mubr.bf16.gmra.mxu0 %v1181
    %v1541 = vpop.f32.mrf.mxu0
    %v1542 = vadd.f32 %v1072, %v1541
    %v1543 = vpop.f32.mrf.mxu0
    %v1544 = vpop.f32.mrf.mxu0
    %v1545 = vadd.f32 %v1072, %v1544
    %v1546 = vpop.f32.mrf.mxu0
    %1547 = vmatprep.mubr.bf16.mxu0 0
    %1548 = vmatmul.mubr.bf16.gmra.mxu0 %v1184
    %v1549 = vpop.f32.mrf.mxu0
    %v1550 = vadd.f32 %v1072, %v1549
    %v1551 = vpop.f32.mrf.mxu0
    %v1552 = vpop.f32.mrf.mxu0
    %v1553 = vadd.f32 %v1072, %v1552
    %v1554 = vpop.f32.mrf.mxu0
    %1555 = vmatprep.mubr.bf16.mxu0 0
    %1556 = vmatmul.mubr.bf16.gmra.mxu0 %v1187
    %v1557 = vpop.f32.mrf.mxu0
    %v1558 = vadd.f32 %v1072, %v1557
    %v1559 = vpop.f32.mrf.mxu0
    %v1560 = vpop.f32.mrf.mxu0
    %v1561 = vadd.f32 %v1072, %v1560
    %v1562 = vpop.f32.mrf.mxu0
    %1563 = vmatprep.mubr.bf16.mxu0 0
    %1564 = vmatmul.mubr.bf16.gmra.mxu0 %v1190
    %v1565 = vpop.f32.mrf.mxu0
    %v1566 = vadd.f32 %v1072, %v1565
    %v1567 = vpop.f32.mrf.mxu0
    %v1568 = vpop.f32.mrf.mxu0
    %v1569 = vadd.f32 %v1072, %v1568
    %v1570 = vpop.f32.mrf.mxu0
    %1571 = vmatprep.mubr.bf16.mxu0 0
    %1572 = vmatmul.mubr.bf16.gmra.mxu0 %v1193
    %v1573 = vpop.f32.mrf.mxu0
    %v1574 = vadd.f32 %v1072, %v1573
    %v1575 = vpop.f32.mrf.mxu0
    %v1576 = vpop.f32.mrf.mxu0
    %v1577 = vadd.f32 %v1072, %v1576
    %v1578 = vpop.f32.mrf.mxu0
    %1579 = vmatprep.mubr.bf16.mxu0 0
    %1580 = vmatmul.mubr.bf16.gmra.mxu0 %v1196
    %v1581 = vpop.f32.mrf.mxu0
    %v1582 = vadd.f32 %v1072, %v1581
    %v1583 = vpop.f32.mrf.mxu0
    %v1584 = vpop.f32.mrf.mxu0
    %v1585 = vadd.f32 %v1072, %v1584
    %v1586 = vpop.f32.mrf.mxu0
    %1587 = vmatprep.mubr.bf16.mxu0 0
    %1588 = vmatmul.mubr.bf16.gmra.mxu0 %v1199
    %v1589 = vpop.f32.mrf.mxu0
    %v1590 = vadd.f32 %v1072, %v1589
    %v1591 = vpop.f32.mrf.mxu0
    %v1592 = vpop.f32.mrf.mxu0
    %v1593 = vadd.f32 %v1072, %v1592
    %v1594 = vpop.f32.mrf.mxu0
    %1595 = vmatprep.mubr.bf16.mxu0 0
    %1596 = vmatmul.mubr.bf16.gmra.mxu0 %v1202
    %v1597 = vpop.f32.mrf.mxu0
    %v1598 = vadd.f32 %v1072, %v1597
    %v1599 = vpop.f32.mrf.mxu0
    %v1600 = vpop.f32.mrf.mxu0
    %v1601 = vadd.f32 %v1072, %v1600
    %v1602 = vpop.f32.mrf.mxu0
    %1603 = vmatprep.mubr.bf16.mxu0 0
    %1604 = vmatmul.mubr.bf16.gmra.mxu0 %v1205
    %v1605 = vpop.f32.mrf.mxu0
    %v1606 = vadd.f32 %v1072, %v1605
    %v1607 = vpop.f32.mrf.mxu0
    %v1608 = vpop.f32.mrf.mxu0
    %v1609 = vadd.f32 %v1072, %v1608
    %v1610 = vpop.f32.mrf.mxu0
    %1611 = vmatprep.mubr.bf16.mxu0 0
    %1612 = vmatmul.mubr.bf16.gmra.mxu0 %v1208
    %v1613 = vpop.f32.mrf.mxu0
    %v1614 = vadd.f32 %v1072, %v1613
    %v1615 = vpop.f32.mrf.mxu0
    %v1616 = vpop.f32.mrf.mxu0
    %v1617 = vadd.f32 %v1072, %v1616
    %v1618 = vpop.f32.mrf.mxu0
    %1619 = vmatprep.mubr.bf16.mxu0 0
    %1620 = vmatmul.mubr.bf16.gmra.mxu0 %v1211
    %v1621 = vpop.f32.mrf.mxu0
    %v1622 = vadd.f32 %v1072, %v1621
    %v1623 = vpop.f32.mrf.mxu0
    %v1624 = vpop.f32.mrf.mxu0
    %v1625 = vadd.f32 %v1072, %v1624
    %v1626 = vpop.f32.mrf.mxu0
    %1627 = vmatprep.mubr.bf16.mxu0 0
    %1628 = vmatmul.mubr.bf16.gmra.mxu0 %v1214
    %v1629 = vpop.f32.mrf.mxu0
    %v1630 = vadd.f32 %v1072, %v1629
    %v1631 = vpop.f32.mrf.mxu0
    %v1632 = vpop.f32.mrf.mxu0
    %v1633 = vadd.f32 %v1072, %v1632
    %v1634 = vpop.f32.mrf.mxu0
    %1635 = vmatprep.mubr.bf16.mxu0 0
    %1636 = vmatmul.mubr.bf16.gmra.mxu0 %v1217
    %v1637 = vpop.f32.mrf.mxu0
    %v1638 = vadd.f32 %v1072, %v1637
    %v1639 = vpop.f32.mrf.mxu0
    %v1640 = vpop.f32.mrf.mxu0
    %v1641 = vadd.f32 %v1072, %v1640
    %v1642 = vpop.f32.mrf.mxu0
    %1643 = vmatprep.mubr.bf16.mxu0 0
    %1644 = vmatmul.mubr.bf16.gmra.mxu0 %v1220
    %v1645 = vpop.f32.mrf.mxu0
    %v1646 = vadd.f32 %v1072, %v1645
    %v1647 = vpop.f32.mrf.mxu0
    %v1648 = vpop.f32.mrf.mxu0
    %v1649 = vadd.f32 %v1072, %v1648
    %v1650 = vpop.f32.mrf.mxu0
    %1651 = vmatprep.mubr.bf16.mxu0 0
    %1652 = vmatmul.mubr.bf16.gmra.mxu0 %v1223
    %v1653 = vpop.f32.mrf.mxu0
    %v1654 = vadd.f32 %v1072, %v1653
    %v1655 = vpop.f32.mrf.mxu0
    %v1656 = vpop.f32.mrf.mxu0
    %v1657 = vadd.f32 %v1072, %v1656
    %v1658 = vpop.f32.mrf.mxu0
    %1659 = vmatprep.mubr.bf16.mxu0 0
    %1660 = vmatmul.mubr.bf16.gmra.mxu0 %v1226
    %v1661 = vpop.f32.mrf.mxu0
    %v1662 = vadd.f32 %v1072, %v1661
    %v1663 = vpop.f32.mrf.mxu0
    %v1664 = vpop.f32.mrf.mxu0
    %v1665 = vadd.f32 %v1072, %v1664
    %v1666 = vpop.f32.mrf.mxu0
    %1667 = vmatprep.mubr.bf16.mxu0 0
    %1668 = vmatmul.mubr.bf16.gmra.mxu0 %v1229
    %v1669 = vpop.f32.mrf.mxu0
    %v1670 = vadd.f32 %v1072, %v1669
    %v1671 = vpop.f32.mrf.mxu0
    %v1672 = vpop.f32.mrf.mxu0
    %v1673 = vadd.f32 %v1072, %v1672
    %v1674 = vpop.f32.mrf.mxu0
    %1675 = vmatprep.mubr.bf16.mxu0 0
    %1676 = vmatmul.mubr.bf16.gmra.mxu0 %v1232
    %v1677 = vpop.f32.mrf.mxu0
    %v1678 = vadd.f32 %v1072, %v1677
    %v1679 = vpop.f32.mrf.mxu0
    %v1680 = vpop.f32.mrf.mxu0
    %v1681 = vadd.f32 %v1072, %v1680
    %v1682 = vpop.f32.mrf.mxu0
    %1683 = vmatprep.mubr.bf16.mxu0 0
    %1684 = vmatmul.mubr.bf16.gmra.mxu0 %v1235
    %v1685 = vpop.f32.mrf.mxu0
    %v1686 = vadd.f32 %v1072, %v1685
    %v1687 = vpop.f32.mrf.mxu0
    %v1688 = vpop.f32.mrf.mxu0
    %v1689 = vadd.f32 %v1072, %v1688
    %v1690 = vpop.f32.mrf.mxu0
    %1691 = vmatprep.mubr.bf16.mxu0 0
    %1692 = vmatmul.mubr.bf16.gmra.mxu0 %v1238
    %v1693 = vpop.f32.mrf.mxu0
    %v1694 = vadd.f32 %v1072, %v1693
    %v1695 = vpop.f32.mrf.mxu0
    %v1696 = vpop.f32.mrf.mxu0
    %v1697 = vadd.f32 %v1072, %v1696
    %v1698 = vpop.f32.mrf.mxu0
    %1699 = vmatprep.mubr.bf16.mxu0 0
    %1700 = vmatmul.mubr.bf16.gmra.mxu0 %v1241
    %v1701 = vpop.f32.mrf.mxu0
    %v1702 = vadd.f32 %v1072, %v1701
    %v1703 = vpop.f32.mrf.mxu0
    %v1704 = vpop.f32.mrf.mxu0
    %v1705 = vadd.f32 %v1072, %v1704
    %v1706 = vpop.f32.mrf.mxu0
    %1707 = vmatprep.mubr.bf16.mxu0 0
    %1708 = vmatmul.mubr.bf16.gmra.mxu0 %v1244
    %v1709 = vpop.f32.mrf.mxu0
    %v1710 = vadd.f32 %v1072, %v1709
    %v1711 = vpop.f32.mrf.mxu0
    %v1712 = vpop.f32.mrf.mxu0
    %v1713 = vadd.f32 %v1072, %v1712
    %v1714 = vpop.f32.mrf.mxu0
    %1715 = vmatprep.mubr.bf16.mxu0 0
    %1716 = vmatmul.mubr.bf16.gmra.mxu0 %v1247
    %v1717 = vpop.f32.mrf.mxu0
    %v1718 = vadd.f32 %v1072, %v1717
    %v1719 = vpop.f32.mrf.mxu0
    %v1720 = vpop.f32.mrf.mxu0
    %v1721 = vadd.f32 %v1072, %v1720
    %v1722 = vpop.f32.mrf.mxu0
    %1723 = vmatprep.mubr.bf16.mxu0 0
    %1724 = vmatmul.mubr.bf16.gmra.mxu0 %v1250
    %v1725 = vpop.f32.mrf.mxu0
    %v1726 = vadd.f32 %v1072, %v1725
    %v1727 = vpop.f32.mrf.mxu0
    %v1728 = vpop.f32.mrf.mxu0
    %v1729 = vadd.f32 %v1072, %v1728
    %v1730 = vpop.f32.mrf.mxu0
    %1731 = vmatprep.mubr.bf16.mxu0 0
    %1732 = vmatmul.mubr.bf16.gmra.mxu0 %v1253
    %v1733 = vpop.f32.mrf.mxu0
    %v1734 = vadd.f32 %v1072, %v1733
    %v1735 = vpop.f32.mrf.mxu0
    %v1736 = vpop.f32.mrf.mxu0
    %v1737 = vadd.f32 %v1072, %v1736
    %v1738 = vpop.f32.mrf.mxu0
    %1739 = vmatprep.mubr.bf16.mxu0 0
    %1740 = vmatmul.mubr.bf16.gmra.mxu0 %v1256
    %v1741 = vpop.f32.mrf.mxu0
    %v1742 = vadd.f32 %v1072, %v1741
    %v1743 = vpop.f32.mrf.mxu0
    %v1744 = vpop.f32.mrf.mxu0
    %v1745 = vadd.f32 %v1072, %v1744
    %v1746 = vpop.f32.mrf.mxu0
    %1747 = vmatprep.mubr.bf16.mxu0 0
    %1748 = vmatmul.mubr.bf16.gmra.mxu0 %v1259
    %v1749 = vpop.f32.mrf.mxu0
    %v1750 = vadd.f32 %v1072, %v1749
    %v1751 = vpop.f32.mrf.mxu0
    %v1752 = vpop.f32.mrf.mxu0
    %v1753 = vadd.f32 %v1072, %v1752
    %v1754 = vpop.f32.mrf.mxu0
    %1755 = vmatprep.mubr.bf16.mxu0 0
    %1756 = vmatmul.mubr.bf16.gmra.mxu0 %v1262
    %v1757 = vpop.f32.mrf.mxu0
    %v1758 = vadd.f32 %v1072, %v1757
    %v1759 = vpop.f32.mrf.mxu0
    %v1760 = vpop.f32.mrf.mxu0
    %v1761 = vadd.f32 %v1072, %v1760
    %v1762 = vpop.f32.mrf.mxu0
    %1763 = vmatprep.mubr.bf16.mxu0 0
    %1764 = vmatmul.mubr.bf16.gmra.mxu0 %v1265
    %v1765 = vpop.f32.mrf.mxu0
    %v1766 = vadd.f32 %v1072, %v1765
    %v1767 = vpop.f32.mrf.mxu0
    %v1768 = vpop.f32.mrf.mxu0
    %v1769 = vadd.f32 %v1072, %v1768
    %v1770 = vpop.f32.mrf.mxu0
    %1771 = vmatprep.mubr.bf16.mxu0 0
    %1772 = vmatmul.mubr.bf16.gmra.mxu0 %v1268
    %v1773 = vpop.f32.mrf.mxu0
    %v1774 = vadd.f32 %v1072, %v1773
    %v1775 = vpop.f32.mrf.mxu0
    %v1776 = vpop.f32.mrf.mxu0
    %v1777 = vadd.f32 %v1072, %v1776
    %v1778 = vpop.f32.mrf.mxu0
    %1779 = vmatprep.mubr.bf16.mxu0 0
    %1780 = vmatmul.mubr.bf16.gmra.mxu0 %v1271
    %v1781 = vpop.f32.mrf.mxu0
    %v1782 = vadd.f32 %v1072, %v1781
    %v1783 = vpop.f32.mrf.mxu0
    %v1784 = vpop.f32.mrf.mxu0
    %v1785 = vadd.f32 %v1072, %v1784
    %v1786 = vpop.f32.mrf.mxu0
    %1787 = vmatprep.mubr.bf16.mxu0 0
    %1788 = vmatmul.mubr.bf16.gmra.mxu0 %v1274
    %v1789 = vpop.f32.mrf.mxu0
    %v1790 = vadd.f32 %v1072, %v1789
    %v1791 = vpop.f32.mrf.mxu0
    %v1792 = vpop.f32.mrf.mxu0
    %v1793 = vadd.f32 %v1072, %v1792
    %v1794 = vpop.f32.mrf.mxu0
    %1795 = vmatprep.mubr.bf16.mxu0 0
    %1796 = vmatmul.mubr.bf16.gmra.mxu0 %v1277
    %v1797 = vpop.f32.mrf.mxu0
    %v1798 = vadd.f32 %v1072, %v1797
    %v1799 = vpop.f32.mrf.mxu0
    %v1800 = vpop.f32.mrf.mxu0
    %v1801 = vadd.f32 %v1072, %v1800
    %v1802 = vpop.f32.mrf.mxu0
    %1803 = vmatprep.mubr.bf16.mxu0 0
    %1804 = vmatmul.mubr.bf16.gmra.mxu0 %v1280
    %v1805 = vpop.f32.mrf.mxu0
    %v1806 = vadd.f32 %v1072, %v1805
    %v1807 = vpop.f32.mrf.mxu0
    %v1808 = vpop.f32.mrf.mxu0
    %v1809 = vadd.f32 %v1072, %v1808
    %v1810 = vpop.f32.mrf.mxu0
    %1811 = vmatprep.mubr.bf16.mxu0 0
    %1812 = vmatmul.mubr.bf16.gmra.mxu0 %v1283
    %v1813 = vpop.f32.mrf.mxu0
    %v1814 = vadd.f32 %v1072, %v1813
    %v1815 = vpop.f32.mrf.mxu0
    %v1816 = vpop.f32.mrf.mxu0
    %v1817 = vadd.f32 %v1072, %v1816
    %v1818 = vpop.f32.mrf.mxu0
    %1819 = vmatprep.mubr.bf16.mxu0 0
    %1820 = vmatmul.mubr.bf16.gmra.mxu0 %v1286
    %v1821 = vpop.f32.mrf.mxu0
    %v1822 = vadd.f32 %v1072, %v1821
    %v1823 = vpop.f32.mrf.mxu0
    %v1824 = vpop.f32.mrf.mxu0
    %v1825 = vadd.f32 %v1072, %v1824
    %v1826 = vpop.f32.mrf.mxu0
    %1827 = vmatprep.mubr.bf16.mxu0 0
    %1828 = vmatmul.mubr.bf16.gmra.mxu0 %v1289
    %v1829 = vpop.f32.mrf.mxu0
    %v1830 = vadd.f32 %v1072, %v1829
    %v1831 = vpop.f32.mrf.mxu0
    %v1832 = vpop.f32.mrf.mxu0
    %v1833 = vadd.f32 %v1072, %v1832
    %v1834 = vpop.f32.mrf.mxu0
    %1835 = vdwg.mxu0
    %v1836 = vmax.f32 %v1326, 0.0
    %v1837 = vmax.f32 %v1329, 0.0
    %v1838 = vmax.f32 %v1334, 0.0
    %v1839 = vmax.f32 %v1337, 0.0
    %v1840 = vmax.f32 %v1342, 0.0
    %v1841 = vmax.f32 %v1345, 0.0
    %v1842 = vmax.f32 %v1350, 0.0
    %v1843 = vmax.f32 %v1353, 0.0
    %v1844 = vmax.f32 %v1358, 0.0
    %v1845 = vmax.f32 %v1361, 0.0
    %v1846 = vmax.f32 %v1366, 0.0
    %v1847 = vmax.f32 %v1369, 0.0
    %v1848 = vmax.f32 %v1374, 0.0
    %v1849 = vmax.f32 %v1377, 0.0
    %v1850 = vmax.f32 %v1382, 0.0
    %v1851 = vmax.f32 %v1385, 0.0
    %v1852 = vmax.f32 %v1390, 0.0
    %v1853 = vmax.f32 %v1393, 0.0
    %v1854 = vmax.f32 %v1398, 0.0
    %v1855 = vmax.f32 %v1401, 0.0
    %v1856 = vmax.f32 %v1406, 0.0
    %v1857 = vmax.f32 %v1409, 0.0
    %v1858 = vmax.f32 %v1414, 0.0
    %v1859 = vmax.f32 %v1417, 0.0
    %v1860 = vmax.f32 %v1422, 0.0
    %v1861 = vmax.f32 %v1425, 0.0
    %v1862 = vmax.f32 %v1430, 0.0
    %v1863 = vmax.f32 %v1433, 0.0
    %v1864 = vmax.f32 %v1438, 0.0
    %v1865 = vmax.f32 %v1441, 0.0
    %v1866 = vmax.f32 %v1446, 0.0
    %v1867 = vmax.f32 %v1449, 0.0
    %v1868 = vmax.f32 %v1454, 0.0
    %v1869 = vmax.f32 %v1457, 0.0
    %v1870 = vmax.f32 %v1462, 0.0
    %v1871 = vmax.f32 %v1465, 0.0
    %v1872 = vmax.f32 %v1470, 0.0
    %v1873 = vmax.f32 %v1473, 0.0
    %v1874 = vmax.f32 %v1478, 0.0
    %v1875 = vmax.f32 %v1481, 0.0
    %v1876 = vmax.f32 %v1486, 0.0
    %v1877 = vmax.f32 %v1489, 0.0
    %v1878 = vmax.f32 %v1494, 0.0
    %v1879 = vmax.f32 %v1497, 0.0
    %v1880 = vmax.f32 %v1502, 0.0
    %v1881 = vmax.f32 %v1505, 0.0
    %v1882 = vmax.f32 %v1510, 0.0
    %v1883 = vmax.f32 %v1513, 0.0
    %v1884 = vmax.f32 %v1518, 0.0
    %v1885 = vmax.f32 %v1521, 0.0
    %v1886 = vmax.f32 %v1526, 0.0
    %v1887 = vmax.f32 %v1529, 0.0
    %v1888 = vmax.f32 %v1534, 0.0
    %v1889 = vmax.f32 %v1537, 0.0
    %v1890 = vmax.f32 %v1542, 0.0
    %v1891 = vmax.f32 %v1545, 0.0
    %v1892 = vmax.f32 %v1550, 0.0
    %v1893 = vmax.f32 %v1553, 0.0
    %v1894 = vmax.f32 %v1558, 0.0
    %v1895 = vmax.f32 %v1561, 0.0
    %v1896 = vmax.f32 %v1566, 0.0
    %v1897 = vmax.f32 %v1569, 0.0
    %v1898 = vmax.f32 %v1574, 0.0
    %v1899 = vmax.f32 %v1577, 0.0
    %v1900 = vmax.f32 %v1582, 0.0
    %v1901 = vmax.f32 %v1585, 0.0
    %v1902 = vmax.f32 %v1590, 0.0
    %v1903 = vmax.f32 %v1593, 0.0
    %v1904 = vmax.f32 %v1598, 0.0
    %v1905 = vmax.f32 %v1601, 0.0
    %v1906 = vmax.f32 %v1606, 0.0
    %v1907 = vmax.f32 %v1609, 0.0
    %v1908 = vmax.f32 %v1614, 0.0
    %v1909 = vmax.f32 %v1617, 0.0
    %v1910 = vmax.f32 %v1622, 0.0
    %v1911 = vmax.f32 %v1625, 0.0
    %v1912 = vmax.f32 %v1630, 0.0
    %v1913 = vmax.f32 %v1633, 0.0
    %v1914 = vmax.f32 %v1638, 0.0
    %v1915 = vmax.f32 %v1641, 0.0
    %v1916 = vmax.f32 %v1646, 0.0
    %v1917 = vmax.f32 %v1649, 0.0
    %v1918 = vmax.f32 %v1654, 0.0
    %v1919 = vmax.f32 %v1657, 0.0
    %v1920 = vmax.f32 %v1662, 0.0
    %v1921 = vmax.f32 %v1665, 0.0
    %v1922 = vmax.f32 %v1670, 0.0
    %v1923 = vmax.f32 %v1673, 0.0
    %v1924 = vmax.f32 %v1678, 0.0
    %v1925 = vmax.f32 %v1681, 0.0
    %v1926 = vmax.f32 %v1686, 0.0
    %v1927 = vmax.f32 %v1689, 0.0
    %v1928 = vmax.f32 %v1694, 0.0
    %v1929 = vmax.f32 %v1697, 0.0
    %v1930 = vmax.f32 %v1702, 0.0
    %v1931 = vmax.f32 %v1705, 0.0
    %v1932 = vmax.f32 %v1710, 0.0
    %v1933 = vmax.f32 %v1713, 0.0
    %v1934 = vmax.f32 %v1718, 0.0
    %v1935 = vmax.f32 %v1721, 0.0
    %v1936 = vmax.f32 %v1726, 0.0
    %v1937 = vmax.f32 %v1729, 0.0
    %v1938 = vmax.f32 %v1734, 0.0
    %v1939 = vmax.f32 %v1737, 0.0
    %v1940 = vmax.f32 %v1742, 0.0
    %v1941 = vmax.f32 %v1745, 0.0
    %v1942 = vmax.f32 %v1750, 0.0
    %v1943 = vmax.f32 %v1753, 0.0
    %v1944 = vmax.f32 %v1758, 0.0
    %v1945 = vmax.f32 %v1761, 0.0
    %v1946 = vmax.f32 %v1766, 0.0
    %v1947 = vmax.f32 %v1769, 0.0
    %v1948 = vmax.f32 %v1774, 0.0
    %v1949 = vmax.f32 %v1777, 0.0
    %v1950 = vmax.f32 %v1782, 0.0
    %v1951 = vmax.f32 %v1785, 0.0
    %v1952 = vmax.f32 %v1790, 0.0
    %v1953 = vmax.f32 %v1793, 0.0
    %v1954 = vmax.f32 %v1798, 0.0
    %v1955 = vmax.f32 %v1801, 0.0
    %v1956 = vmax.f32 %v1806, 0.0
    %v1957 = vmax.f32 %v1809, 0.0
    %v1958 = vmax.f32 %v1814, 0.0
    %v1959 = vmax.f32 %v1817, 0.0
    %v1960 = vmax.f32 %v1822, 0.0
    %v1961 = vmax.f32 %v1825, 0.0
    %v1962 = vmax.f32 %v1830, 0.0
    %v1963 = vmax.f32 %v1833, 0.0
    %v1964 = vpack.c.bf16 %v1837, %v1836
    %v1965 = vpack.c.bf16 %v1839, %v1838
    %v1966 = vpack.c.bf16 %v1841, %v1840
    %v1967 = vpack.c.bf16 %v1843, %v1842
    %v1968 = vpack.c.bf16 %v1845, %v1844
    %v1969 = vpack.c.bf16 %v1847, %v1846
    %v1970 = vpack.c.bf16 %v1849, %v1848
    %v1971 = vpack.c.bf16 %v1851, %v1850
    %v1972 = vpack.c.bf16 %v1853, %v1852
    %v1973 = vpack.c.bf16 %v1855, %v1854
    %v1974 = vpack.c.bf16 %v1857, %v1856
    %v1975 = vpack.c.bf16 %v1859, %v1858
    %v1976 = vpack.c.bf16 %v1861, %v1860
    %v1977 = vpack.c.bf16 %v1863, %v1862
    %v1978 = vpack.c.bf16 %v1865, %v1864
    %v1979 = vpack.c.bf16 %v1867, %v1866
    %v1980 = vpack.c.bf16 %v1869, %v1868
    %v1981 = vpack.c.bf16 %v1871, %v1870
    %v1982 = vpack.c.bf16 %v1873, %v1872
    %v1983 = vpack.c.bf16 %v1875, %v1874
    %v1984 = vpack.c.bf16 %v1877, %v1876
    %v1985 = vpack.c.bf16 %v1879, %v1878
    %v1986 = vpack.c.bf16 %v1881, %v1880
    %v1987 = vpack.c.bf16 %v1883, %v1882
    %v1988 = vpack.c.bf16 %v1885, %v1884
    %v1989 = vpack.c.bf16 %v1887, %v1886
    %v1990 = vpack.c.bf16 %v1889, %v1888
    %v1991 = vpack.c.bf16 %v1891, %v1890
    %v1992 = vpack.c.bf16 %v1893, %v1892
    %v1993 = vpack.c.bf16 %v1895, %v1894
    %v1994 = vpack.c.bf16 %v1897, %v1896
    %v1995 = vpack.c.bf16 %v1899, %v1898
    %v1996 = vpack.c.bf16 %v1901, %v1900
    %v1997 = vpack.c.bf16 %v1903, %v1902
    %v1998 = vpack.c.bf16 %v1905, %v1904
    %v1999 = vpack.c.bf16 %v1907, %v1906
    %v2000 = vpack.c.bf16 %v1909, %v1908
    %v2001 = vpack.c.bf16 %v1911, %v1910
    %v2002 = vpack.c.bf16 %v1913, %v1912
    %v2003 = vpack.c.bf16 %v1915, %v1914
    %v2004 = vpack.c.bf16 %v1917, %v1916
    %v2005 = vpack.c.bf16 %v1919, %v1918
    %v2006 = vpack.c.bf16 %v1921, %v1920
    %v2007 = vpack.c.bf16 %v1923, %v1922
    %v2008 = vpack.c.bf16 %v1925, %v1924
    %v2009 = vpack.c.bf16 %v1927, %v1926
    %v2010 = vpack.c.bf16 %v1929, %v1928
    %v2011 = vpack.c.bf16 %v1931, %v1930
    %v2012 = vpack.c.bf16 %v1933, %v1932
    %v2013 = vpack.c.bf16 %v1935, %v1934
    %v2014 = vpack.c.bf16 %v1937, %v1936
    %v2015 = vpack.c.bf16 %v1939, %v1938
    %v2016 = vpack.c.bf16 %v1941, %v1940
    %v2017 = vpack.c.bf16 %v1943, %v1942
    %v2018 = vpack.c.bf16 %v1945, %v1944
    %v2019 = vpack.c.bf16 %v1947, %v1946
    %v2020 = vpack.c.bf16 %v1949, %v1948
    %v2021 = vpack.c.bf16 %v1951, %v1950
    %v2022 = vpack.c.bf16 %v1953, %v1952
    %v2023 = vpack.c.bf16 %v1955, %v1954
    %v2024 = vpack.c.bf16 %v1957, %v1956
    %v2025 = vpack.c.bf16 %v1959, %v1958
    %v2026 = vpack.c.bf16 %v1961, %v1960
    %v2027 = vpack.c.bf16 %v1963, %v1962
    %v2028 = vld [vmem:[%s9] sm:$0xf]
    %vm2029 = vcmask 261120
    %v2031 = vsel %vm2029, %v2028, 0
    %v2034 = vsel %vm2029, %v1964, 0
    %v2037 = vsel %vm2029, %v1965, 0
    %v2040 = vsel %vm2029, %v1966, 0
    %v2043 = vsel %vm2029, %v1967, 0
    %v2046 = vsel %vm2029, %v1968, 0
    %v2049 = vsel %vm2029, %v1969, 0
    %v2052 = vsel %vm2029, %v1970, 0
    %v2055 = vsel %vm2029, %v1971, 0
    %v2058 = vsel %vm2029, %v1972, 0
    %v2061 = vsel %vm2029, %v1973, 0
    %v2064 = vsel %vm2029, %v1974, 0
    %v2067 = vsel %vm2029, %v1975, 0
    %v2070 = vsel %vm2029, %v1976, 0
    %v2073 = vsel %vm2029, %v1977, 0
    %v2076 = vsel %vm2029, %v1978, 0
    %v2079 = vsel %vm2029, %v1979, 0
    %v2082 = vsel %vm2029, %v1980, 0
    %v2085 = vsel %vm2029, %v1981, 0
    %v2088 = vsel %vm2029, %v1982, 0
    %v2091 = vsel %vm2029, %v1983, 0
    %v2094 = vsel %vm2029, %v1984, 0
    %v2097 = vsel %vm2029, %v1985, 0
    %v2100 = vsel %vm2029, %v1986, 0
    %v2103 = vsel %vm2029, %v1987, 0
    %v2106 = vsel %vm2029, %v1988, 0
    %v2109 = vsel %vm2029, %v1989, 0
    %v2112 = vsel %vm2029, %v1990, 0
    %v2115 = vsel %vm2029, %v1991, 0
    %v2118 = vsel %vm2029, %v1992, 0
    %v2121 = vsel %vm2029, %v1993, 0
    %v2124 = vsel %vm2029, %v1994, 0
    %v2127 = vsel %vm2029, %v1995, 0
    %v2130 = vsel %vm2029, %v1996, 0
    %v2133 = vsel %vm2029, %v1997, 0
    %v2136 = vsel %vm2029, %v1998, 0
    %v2139 = vsel %vm2029, %v1999, 0
    %v2142 = vsel %vm2029, %v2000, 0
    %v2145 = vsel %vm2029, %v2001, 0
    %v2148 = vsel %vm2029, %v2002, 0
    %v2151 = vsel %vm2029, %v2003, 0
    %v2154 = vsel %vm2029, %v2004, 0
    %v2157 = vsel %vm2029, %v2005, 0
    %v2160 = vsel %vm2029, %v2006, 0
    %v2163 = vsel %vm2029, %v2007, 0
    %v2166 = vsel %vm2029, %v2008, 0
    %v2169 = vsel %vm2029, %v2009, 0
    %v2172 = vsel %vm2029, %v2010, 0
    %v2175 = vsel %vm2029, %v2011, 0
    %v2178 = vsel %vm2029, %v2012, 0
    %v2181 = vsel %vm2029, %v2013, 0
    %v2184 = vsel %vm2029, %v2014, 0
    %v2187 = vsel %vm2029, %v2015, 0
    %v2190 = vsel %vm2029, %v2016, 0
    %v2193 = vsel %vm2029, %v2017, 0
    %v2196 = vsel %vm2029, %v2018, 0
    %v2199 = vsel %vm2029, %v2019, 0
    %v2202 = vsel %vm2029, %v2020, 0
    %v2205 = vsel %vm2029, %v2021, 0
    %v2208 = vsel %vm2029, %v2022, 0
    %v2211 = vsel %vm2029, %v2023, 0
    %v2214 = vsel %vm2029, %v2024, 0
    %v2217 = vsel %vm2029, %v2025, 0
    %v2220 = vsel %vm2029, %v2026, 0
    %v2223 = vsel %vm2029, %v2027, 0
    %2225 = vmatprep.subr.bf16.mxu0 0
    %2226 = vmatpush1.bf16.xpose.msra.mxu0 %v2055
    %2227 = vmatprep.subr.bf16.mxu0 0
    %2228 = vmatpush1.bf16.xpose.msra.mxu0 %v2052
    %2229 = vmatprep.subr.bf16.mxu0 0
    %2230 = vmatpush1.bf16.xpose.msra.mxu0 %v2049
    %2231 = vmatprep.subr.bf16.mxu0 0
    %2232 = vmatpush1.bf16.xpose.msra.mxu0 %v2046
    %2233 = vmatprep.subr.bf16.mxu0 0
    %2234 = vmatpush1.bf16.xpose.msra.mxu0 %v2043
    %2235 = vmatprep.subr.bf16.mxu0 0
    %2236 = vmatpush1.bf16.xpose.msra.mxu0 %v2040
    %2237 = vmatprep.subr.bf16.mxu0 0
    %2238 = vmatpush1.bf16.xpose.msra.mxu0 %v2037
    %2239 = vmatprep.subr.bf16.mxu0 0
    %2240 = vmatpush1.bf16.xpose.msra.mxu0 %v2034
    %2241 = vmatprep.subr.bf16.mxu0 0
    %2242 = vmatpush2.bf16.xpose.msra.mxu0 %v2079
    %2243 = vmatprep.subr.bf16.mxu0 0
    %2244 = vmatpush2.bf16.xpose.msra.mxu0 %v2076
    %2245 = vmatprep.subr.bf16.mxu0 0
    %2246 = vmatpush2.bf16.xpose.msra.mxu0 %v2073
    %2247 = vmatprep.subr.bf16.mxu0 0
    %2248 = vmatpush2.bf16.xpose.msra.mxu0 %v2070
    %2249 = vmatprep.subr.bf16.mxu0 0
    %2250 = vmatpush2.bf16.xpose.msra.mxu0 %v2067
    %2251 = vmatprep.subr.bf16.mxu0 0
    %2252 = vmatpush2.bf16.xpose.msra.mxu0 %v2064
    %2253 = vmatprep.subr.bf16.mxu0 0
    %2254 = vmatpush2.bf16.xpose.msra.mxu0 %v2061
    %2255 = vmatprep.subr.bf16.mxu0 0
    %2256 = vmatpush2.bf16.xpose.msra.mxu0 %v2058
    %2257 = vmatprep.mubr.bf16.mxu0 0
    %2258 = vmatmul.mubr.bf16.gmra.mxu0 %v2031
    %v2259 = vpop.f32.mrf.mxu0
    %v2260 = vadd.f32 0.0, %v2259
    %v2261 = vpop.f32.mrf.mxu0
    %v2262 = vadd.f32 0.0, %v2261
    %v2263 = vpop.f32.mrf.mxu0
    %v2264 = vpop.f32.mrf.mxu0
    %2265 = vdwg.mxu0
    %2266 = vmatprep.subr.bf16.mxu0 0
    %2267 = vmatpush1.bf16.xpose.msra.mxu0 %v2103
    %2268 = vmatprep.subr.bf16.mxu0 0
    %2269 = vmatpush1.bf16.xpose.msra.mxu0 %v2100
    %2270 = vmatprep.subr.bf16.mxu0 0
    %2271 = vmatpush1.bf16.xpose.msra.mxu0 %v2097
    %2272 = vmatprep.subr.bf16.mxu0 0
    %2273 = vmatpush1.bf16.xpose.msra.mxu0 %v2094
    %2274 = vmatprep.subr.bf16.mxu0 0
    %2275 = vmatpush1.bf16.xpose.msra.mxu0 %v2091
    %2276 = vmatprep.subr.bf16.mxu0 0
    %2277 = vmatpush1.bf16.xpose.msra.mxu0 %v2088
    %2278 = vmatprep.subr.bf16.mxu0 0
    %2279 = vmatpush1.bf16.xpose.msra.mxu0 %v2085
    %2280 = vmatprep.subr.bf16.mxu0 0
    %2281 = vmatpush1.bf16.xpose.msra.mxu0 %v2082
    %2282 = vmatprep.subr.bf16.mxu0 0
    %2283 = vmatpush2.bf16.xpose.msra.mxu0 %v2127
    %2284 = vmatprep.subr.bf16.mxu0 0
    %2285 = vmatpush2.bf16.xpose.msra.mxu0 %v2124
    %2286 = vmatprep.subr.bf16.mxu0 0
    %2287 = vmatpush2.bf16.xpose.msra.mxu0 %v2121
    %2288 = vmatprep.subr.bf16.mxu0 0
    %2289 = vmatpush2.bf16.xpose.msra.mxu0 %v2118
    %2290 = vmatprep.subr.bf16.mxu0 0
    %2291 = vmatpush2.bf16.xpose.msra.mxu0 %v2115
    %2292 = vmatprep.subr.bf16.mxu0 0
    %2293 = vmatpush2.bf16.xpose.msra.mxu0 %v2112
    %2294 = vmatprep.subr.bf16.mxu0 0
    %2295 = vmatpush2.bf16.xpose.msra.mxu0 %v2109
    %2296 = vmatprep.subr.bf16.mxu0 0
    %2297 = vmatpush2.bf16.xpose.msra.mxu0 %v2106
    %2298 = vmatprep.mubr.bf16.mxu0 0
    %2299 = vmatmul.mubr.bf16.gmra.mxu0 %v2031
    %v2300 = vpop.f32.mrf.mxu0
    %v2301 = vadd.f32 0.0, %v2300
    %v2302 = vpop.f32.mrf.mxu0
    %v2303 = vadd.f32 0.0, %v2302
    %v2304 = vpop.f32.mrf.mxu0
    %v2305 = vpop.f32.mrf.mxu0
    %2306 = vdwg.mxu0
    %2307 = vmatprep.subr.bf16.mxu0 0
    %2308 = vmatpush1.bf16.xpose.msra.mxu0 %v2151
    %2309 = vmatprep.subr.bf16.mxu0 0
    %2310 = vmatpush1.bf16.xpose.msra.mxu0 %v2148
    %2311 = vmatprep.subr.bf16.mxu0 0
    %2312 = vmatpush1.bf16.xpose.msra.mxu0 %v2145
    %2313 = vmatprep.subr.bf16.mxu0 0
    %2314 = vmatpush1.bf16.xpose.msra.mxu0 %v2142
    %2315 = vmatprep.subr.bf16.mxu0 0
    %2316 = vmatpush1.bf16.xpose.msra.mxu0 %v2139
    %2317 = vmatprep.subr.bf16.mxu0 0
    %2318 = vmatpush1.bf16.xpose.msra.mxu0 %v2136
    %2319 = vmatprep.subr.bf16.mxu0 0
    %2320 = vmatpush1.bf16.xpose.msra.mxu0 %v2133
    %2321 = vmatprep.subr.bf16.mxu0 0
    %2322 = vmatpush1.bf16.xpose.msra.mxu0 %v2130
    %2323 = vmatprep.subr.bf16.mxu0 0
    %2324 = vmatpush2.bf16.xpose.msra.mxu0 %v2175
    %2325 = vmatprep.subr.bf16.mxu0 0
    %2326 = vmatpush2.bf16.xpose.msra.mxu0 %v2172
    %2327 = vmatprep.subr.bf16.mxu0 0
    %2328 = vmatpush2.bf16.xpose.msra.mxu0 %v2169
    %2329 = vmatprep.subr.bf16.mxu0 0
    %2330 = vmatpush2.bf16.xpose.msra.mxu0 %v2166
    %2331 = vmatprep.subr.bf16.mxu0 0
    %2332 = vmatpush2.bf16.xpose.msra.mxu0 %v2163
    %2333 = vmatprep.subr.bf16.mxu0 0
    %2334 = vmatpush2.bf16.xpose.msra.mxu0 %v2160
    %2335 = vmatprep.subr.bf16.mxu0 0
    %2336 = vmatpush2.bf16.xpose.msra.mxu0 %v2157
    %2337 = vmatprep.subr.bf16.mxu0 0
    %2338 = vmatpush2.bf16.xpose.msra.mxu0 %v2154
    %2339 = vmatprep.mubr.bf16.mxu0 0
    %2340 = vmatmul.mubr.bf16.gmra.mxu0 %v2031
    %v2341 = vpop.f32.mrf.mxu0
    %v2342 = vadd.f32 0.0, %v2341
    %v2343 = vpop.f32.mrf.mxu0
    %v2344 = vadd.f32 0.0, %v2343
    %v2345 = vpop.f32.mrf.mxu0
    %v2346 = vpop.f32.mrf.mxu0
    %2347 = vdwg.mxu0
    %2348 = vmatprep.subr.bf16.mxu0 0
    %2349 = vmatpush1.bf16.xpose.msra.mxu0 %v2199
    %2350 = vmatprep.subr.bf16.mxu0 0
    %2351 = vmatpush1.bf16.xpose.msra.mxu0 %v2196
    %2352 = vmatprep.subr.bf16.mxu0 0
    %2353 = vmatpush1.bf16.xpose.msra.mxu0 %v2193
    %2354 = vmatprep.subr.bf16.mxu0 0
    %2355 = vmatpush1.bf16.xpose.msra.mxu0 %v2190
    %2356 = vmatprep.subr.bf16.mxu0 0
    %2357 = vmatpush1.bf16.xpose.msra.mxu0 %v2187
    %2358 = vmatprep.subr.bf16.mxu0 0
    %2359 = vmatpush1.bf16.xpose.msra.mxu0 %v2184
    %2360 = vmatprep.subr.bf16.mxu0 0
    %2361 = vmatpush1.bf16.xpose.msra.mxu0 %v2181
    %2362 = vmatprep.subr.bf16.mxu0 0
    %2363 = vmatpush1.bf16.xpose.msra.mxu0 %v2178
    %2364 = vmatprep.subr.bf16.mxu0 0
    %2365 = vmatpush2.bf16.xpose.msra.mxu0 %v2223
    %2366 = vmatprep.subr.bf16.mxu0 0
    %2367 = vmatpush2.bf16.xpose.msra.mxu0 %v2220
    %2368 = vmatprep.subr.bf16.mxu0 0
    %2369 = vmatpush2.bf16.xpose.msra.mxu0 %v2217
    %2370 = vmatprep.subr.bf16.mxu0 0
    %2371 = vmatpush2.bf16.xpose.msra.mxu0 %v2214
    %2372 = vmatprep.subr.bf16.mxu0 0
    %2373 = vmatpush2.bf16.xpose.msra.mxu0 %v2211
    %2374 = vmatprep.subr.bf16.mxu0 0
    %2375 = vmatpush2.bf16.xpose.msra.mxu0 %v2208
    %2376 = vmatprep.subr.bf16.mxu0 0
    %2377 = vmatpush2.bf16.xpose.msra.mxu0 %v2205
    %2378 = vmatprep.subr.bf16.mxu0 0
    %2379 = vmatpush2.bf16.xpose.msra.mxu0 %v2202
    %2380 = vmatprep.mubr.bf16.mxu0 0
    %2381 = vmatmul.mubr.bf16.gmra.mxu0 %v2031
    %v2382 = vpop.f32.mrf.mxu0
    %v2383 = vadd.f32 0.0, %v2382
    %v2384 = vpop.f32.mrf.mxu0
    %v2385 = vadd.f32 0.0, %v2384
    %v2386 = vpop.f32.mrf.mxu0
    %v2387 = vpop.f32.mrf.mxu0
    %2388 = vdwg.mxu0
    %v2389 = vld [vmem:[#allocation2] sm:$0x1]
    %2391 = vset.pattern.permute.xlu0 0
    %2392 = vperm.xlu0 %2391, %v2389
    %v2393 = vpop.permute.xlu0 %2392
    %v2395 = vlaneseq
    %v2396 = vshrl.u32 %v2395, 7
    %v2397 = vsub.s32 0, %v2396
    %v2398 = vrot.slane %v2393, %v2397
    %v2399 = vadd.f32 %v2260, %v2398
    %v2400 = vadd.f32 %v2262, %v2398
    %v2401 = vadd.f32 %v2301, %v2398
    %v2402 = vadd.f32 %v2303, %v2398
    %v2403 = vadd.f32 %v2342, %v2398
    %v2404 = vadd.f32 %v2344, %v2398
    %v2405 = vadd.f32 %v2383, %v2398
    %v2406 = vadd.f32 %v2385, %v2398
    %v2415 = vcombine.low %v2399, %v2400
    %v2416 = vcombine.low %v2401, %v2402
    %v2417 = vcombine.low %v2403, %v2404
    %v2418 = vcombine.low %v2405, %v2406
    %v2420 = vunpack.c.l.s4 1966171168
    %v2421 = vunpack.c.0.s8 %v2420
    %v2422 = vlaneseq
    %v2423 = vshrl.u32 %v2422, 7
    %v2424 = vsub.s32 %v2421, %v2423
    %v2425 = vrot.slane %v2415, %v2424
    %v2427 = vunpack.c.l.s4 1966171168
    %v2428 = vunpack.c.0.s8 %v2427
    %v2429 = vlaneseq
    %v2430 = vshrl.u32 %v2429, 7
    %v2431 = vsub.s32 %v2428, %v2430
    %v2432 = vrot.slane %v2416, %v2431
    %v2434 = vunpack.c.l.s4 1966171168
    %v2435 = vunpack.c.0.s8 %v2434
    %v2436 = vlaneseq
    %v2437 = vshrl.u32 %v2436, 7
    %v2438 = vsub.s32 %v2435, %v2437
    %v2439 = vrot.slane %v2417, %v2438
    %v2441 = vunpack.c.l.s4 1966171168
    %v2442 = vunpack.c.0.s8 %v2441
    %v2443 = vlaneseq
    %v2444 = vshrl.u32 %v2443, 7
    %v2445 = vsub.s32 %v2442, %v2444
    %v2446 = vrot.slane %v2418, %v2445
    %v2447 = vcombine.low %v2425, %v2432
    %v2448 = vcombine.low %v2439, %v2446
    %v2450 = vunpack.c.l.s4 1966171168
    %v2451 = vunpack.c.0.s8 %v2450
    %v2452 = vlaneseq
    %v2453 = vshrl.u32 %v2452, 7
    %v2454 = vsub.s32 %v2451, %v2453
    %v2455 = vrot.slane %v2447, %v2454
    %v2457 = vunpack.c.l.s4 1966171168
    %v2458 = vunpack.c.0.s8 %v2457
    %v2459 = vlaneseq
    %v2460 = vshrl.u32 %v2459, 7
    %v2461 = vsub.s32 %v2458, %v2460
    %v2462 = vrot.slane %v2448, %v2461
    %v2463 = vcombine.low %v2455, %v2462
    %2465 = vst [vmem:[#allocation6] sm:$0xff] %v2463
    %v2466 = vld [vmem:[%s5] sm:$0xf]
    %v2467 = vld [vmem:[%s5 + $0x4] sm:$0xf]
    %v2468 = vld [vmem:[%s5 + $0x8] sm:$0xf]
    %v2469 = vld [vmem:[%s5 + $0xc] sm:$0xf]
    %v2470 = vld [vmem:[%s6] sm:$0x1]
    %v2472 = vlaneseq
    %v2473 = vshrl.u32 %v2472, 7
    %v2474 = vsub.s32 0, %v2473
    %v2475 = vrot.slane %v2470, %v2474
    %v2481 = vunpack.c.l.b16 %v2466
    %v2482 = vunpack.c.l.b16 %v2467
    %v2483 = vunpack.c.l.b16 %v2468
    %v2484 = vunpack.c.l.b16 %v2469
    %v2485 = vpack.c.b16 %v2482, %v2481
    %v2486 = vpack.c.b16 %v2484, %v2483
    %2489 = vmatprep.subr.bf16.mxu0 0
    %2490 = vmatpush1.bf16.msra.mxu0 0
    %2491 = vmatprep.subr.bf16.mxu0 0
    %2492 = vmatpush1.bf16.msra.mxu0 0
    %2493 = vmatprep.subr.bf16.mxu0 0
    %2494 = vmatpush1.bf16.msra.mxu0 0
    %2495 = vmatprep.subr.bf16.mxu0 0
    %2496 = vmatpush1.bf16.msra.mxu0 0
    %2497 = vmatprep.subr.bf16.mxu0 0
    %2498 = vmatpush1.bf16.msra.mxu0 0
    %2499 = vmatprep.subr.bf16.mxu0 0
    %2500 = vmatpush1.bf16.msra.mxu0 0
    %2501 = vmatprep.subr.bf16.mxu0 0
    %2502 = vmatpush1.bf16.msra.mxu0 %v2486
    %2503 = vmatprep.subr.bf16.mxu0 0
    %2504 = vmatpush1.bf16.msra.mxu0 %v2485
    %2505 = vmatprep.subr.bf16.mxu0 0
    %2506 = vmatpush2.bf16.msra.mxu0 0
    %2507 = vmatprep.subr.bf16.mxu0 0
    %2508 = vmatpush2.bf16.msra.mxu0 0
    %2509 = vmatprep.subr.bf16.mxu0 0
    %2510 = vmatpush2.bf16.msra.mxu0 0
    %2511 = vmatprep.subr.bf16.mxu0 0
    %2512 = vmatpush2.bf16.msra.mxu0 0
    %2513 = vmatprep.subr.bf16.mxu0 0
    %2514 = vmatpush2.bf16.msra.mxu0 0
    %2515 = vmatprep.subr.bf16.mxu0 0
    %2516 = vmatpush2.bf16.msra.mxu0 0
    %2517 = vmatprep.subr.bf16.mxu0 0
    %2518 = vmatpush2.bf16.msra.mxu0 0
    %2519 = vmatprep.subr.bf16.mxu0 0
    %2520 = vmatpush2.bf16.msra.mxu0 0
    %2521 = vmatprep.mubr.bf16.mxu0 0
    %2522 = vmatmul.mubr.bf16.gmra.mxu0 %v2034
    %v2523 = vpop.f32.mrf.mxu0
    %v2524 = vadd.f32 %v2475, %v2523
    %v2525 = vpop.f32.mrf.mxu0
    %v2526 = vpop.f32.mrf.mxu0
    %v2527 = vadd.f32 %v2475, %v2526
    %v2528 = vpop.f32.mrf.mxu0
    %2529 = vmatprep.mubr.bf16.mxu0 0
    %2530 = vmatmul.mubr.bf16.gmra.mxu0 %v2037
    %v2531 = vpop.f32.mrf.mxu0
    %v2532 = vadd.f32 %v2475, %v2531
    %v2533 = vpop.f32.mrf.mxu0
    %v2534 = vpop.f32.mrf.mxu0
    %v2535 = vadd.f32 %v2475, %v2534
    %v2536 = vpop.f32.mrf.mxu0
    %2537 = vmatprep.mubr.bf16.mxu0 0
    %2538 = vmatmul.mubr.bf16.gmra.mxu0 %v2040
    %v2539 = vpop.f32.mrf.mxu0
    %v2540 = vadd.f32 %v2475, %v2539
    %v2541 = vpop.f32.mrf.mxu0
    %v2542 = vpop.f32.mrf.mxu0
    %v2543 = vadd.f32 %v2475, %v2542
    %v2544 = vpop.f32.mrf.mxu0
    %2545 = vmatprep.mubr.bf16.mxu0 0
    %2546 = vmatmul.mubr.bf16.gmra.mxu0 %v2043
    %v2547 = vpop.f32.mrf.mxu0
    %v2548 = vadd.f32 %v2475, %v2547
    %v2549 = vpop.f32.mrf.mxu0
    %v2550 = vpop.f32.mrf.mxu0
    %v2551 = vadd.f32 %v2475, %v2550
    %v2552 = vpop.f32.mrf.mxu0
    %2553 = vmatprep.mubr.bf16.mxu0 0
    %2554 = vmatmul.mubr.bf16.gmra.mxu0 %v2046
    %v2555 = vpop.f32.mrf.mxu0
    %v2556 = vadd.f32 %v2475, %v2555
    %v2557 = vpop.f32.mrf.mxu0
    %v2558 = vpop.f32.mrf.mxu0
    %v2559 = vadd.f32 %v2475, %v2558
    %v2560 = vpop.f32.mrf.mxu0
    %2561 = vmatprep.mubr.bf16.mxu0 0
    %2562 = vmatmul.mubr.bf16.gmra.mxu0 %v2049
    %v2563 = vpop.f32.mrf.mxu0
    %v2564 = vadd.f32 %v2475, %v2563
    %v2565 = vpop.f32.mrf.mxu0
    %v2566 = vpop.f32.mrf.mxu0
    %v2567 = vadd.f32 %v2475, %v2566
    %v2568 = vpop.f32.mrf.mxu0
    %2569 = vmatprep.mubr.bf16.mxu0 0
    %2570 = vmatmul.mubr.bf16.gmra.mxu0 %v2052
    %v2571 = vpop.f32.mrf.mxu0
    %v2572 = vadd.f32 %v2475, %v2571
    %v2573 = vpop.f32.mrf.mxu0
    %v2574 = vpop.f32.mrf.mxu0
    %v2575 = vadd.f32 %v2475, %v2574
    %v2576 = vpop.f32.mrf.mxu0
    %2577 = vmatprep.mubr.bf16.mxu0 0
    %2578 = vmatmul.mubr.bf16.gmra.mxu0 %v2055
    %v2579 = vpop.f32.mrf.mxu0
    %v2580 = vadd.f32 %v2475, %v2579
    %v2581 = vpop.f32.mrf.mxu0
    %v2582 = vpop.f32.mrf.mxu0
    %v2583 = vadd.f32 %v2475, %v2582
    %v2584 = vpop.f32.mrf.mxu0
    %2585 = vmatprep.mubr.bf16.mxu0 0
    %2586 = vmatmul.mubr.bf16.gmra.mxu0 %v2058
    %v2587 = vpop.f32.mrf.mxu0
    %v2588 = vadd.f32 %v2475, %v2587
    %v2589 = vpop.f32.mrf.mxu0
    %v2590 = vpop.f32.mrf.mxu0
    %v2591 = vadd.f32 %v2475, %v2590
    %v2592 = vpop.f32.mrf.mxu0
    %2593 = vmatprep.mubr.bf16.mxu0 0
    %2594 = vmatmul.mubr.bf16.gmra.mxu0 %v2061
    %v2595 = vpop.f32.mrf.mxu0
    %v2596 = vadd.f32 %v2475, %v2595
    %v2597 = vpop.f32.mrf.mxu0
    %v2598 = vpop.f32.mrf.mxu0
    %v2599 = vadd.f32 %v2475, %v2598
    %v2600 = vpop.f32.mrf.mxu0
    %2601 = vmatprep.mubr.bf16.mxu0 0
    %2602 = vmatmul.mubr.bf16.gmra.mxu0 %v2064
    %v2603 = vpop.f32.mrf.mxu0
    %v2604 = vadd.f32 %v2475, %v2603
    %v2605 = vpop.f32.mrf.mxu0
    %v2606 = vpop.f32.mrf.mxu0
    %v2607 = vadd.f32 %v2475, %v2606
    %v2608 = vpop.f32.mrf.mxu0
    %2609 = vmatprep.mubr.bf16.mxu0 0
    %2610 = vmatmul.mubr.bf16.gmra.mxu0 %v2067
    %v2611 = vpop.f32.mrf.mxu0
    %v2612 = vadd.f32 %v2475, %v2611
    %v2613 = vpop.f32.mrf.mxu0
    %v2614 = vpop.f32.mrf.mxu0
    %v2615 = vadd.f32 %v2475, %v2614
    %v2616 = vpop.f32.mrf.mxu0
    %2617 = vmatprep.mubr.bf16.mxu0 0
    %2618 = vmatmul.mubr.bf16.gmra.mxu0 %v2070
    %v2619 = vpop.f32.mrf.mxu0
    %v2620 = vadd.f32 %v2475, %v2619
    %v2621 = vpop.f32.mrf.mxu0
    %v2622 = vpop.f32.mrf.mxu0
    %v2623 = vadd.f32 %v2475, %v2622
    %v2624 = vpop.f32.mrf.mxu0
    %2625 = vmatprep.mubr.bf16.mxu0 0
    %2626 = vmatmul.mubr.bf16.gmra.mxu0 %v2073
    %v2627 = vpop.f32.mrf.mxu0
    %v2628 = vadd.f32 %v2475, %v2627
    %v2629 = vpop.f32.mrf.mxu0
    %v2630 = vpop.f32.mrf.mxu0
    %v2631 = vadd.f32 %v2475, %v2630
    %v2632 = vpop.f32.mrf.mxu0
    %2633 = vmatprep.mubr.bf16.mxu0 0
    %2634 = vmatmul.mubr.bf16.gmra.mxu0 %v2076
    %v2635 = vpop.f32.mrf.mxu0
    %v2636 = vadd.f32 %v2475, %v2635
    %v2637 = vpop.f32.mrf.mxu0
    %v2638 = vpop.f32.mrf.mxu0
    %v2639 = vadd.f32 %v2475, %v2638
    %v2640 = vpop.f32.mrf.mxu0
    %2641 = vmatprep.mubr.bf16.mxu0 0
    %2642 = vmatmul.mubr.bf16.gmra.mxu0 %v2079
    %v2643 = vpop.f32.mrf.mxu0
    %v2644 = vadd.f32 %v2475, %v2643
    %v2645 = vpop.f32.mrf.mxu0
    %v2646 = vpop.f32.mrf.mxu0
    %v2647 = vadd.f32 %v2475, %v2646
    %v2648 = vpop.f32.mrf.mxu0
    %2649 = vmatprep.mubr.bf16.mxu0 0
    %2650 = vmatmul.mubr.bf16.gmra.mxu0 %v2082
    %v2651 = vpop.f32.mrf.mxu0
    %v2652 = vadd.f32 %v2475, %v2651
    %v2653 = vpop.f32.mrf.mxu0
    %v2654 = vpop.f32.mrf.mxu0
    %v2655 = vadd.f32 %v2475, %v2654
    %v2656 = vpop.f32.mrf.mxu0
    %2657 = vmatprep.mubr.bf16.mxu0 0
    %2658 = vmatmul.mubr.bf16.gmra.mxu0 %v2085
    %v2659 = vpop.f32.mrf.mxu0
    %v2660 = vadd.f32 %v2475, %v2659
    %v2661 = vpop.f32.mrf.mxu0
    %v2662 = vpop.f32.mrf.mxu0
    %v2663 = vadd.f32 %v2475, %v2662
    %v2664 = vpop.f32.mrf.mxu0
    %2665 = vmatprep.mubr.bf16.mxu0 0
    %2666 = vmatmul.mubr.bf16.gmra.mxu0 %v2088
    %v2667 = vpop.f32.mrf.mxu0
    %v2668 = vadd.f32 %v2475, %v2667
    %v2669 = vpop.f32.mrf.mxu0
    %v2670 = vpop.f32.mrf.mxu0
    %v2671 = vadd.f32 %v2475, %v2670
    %v2672 = vpop.f32.mrf.mxu0
    %2673 = vmatprep.mubr.bf16.mxu0 0
    %2674 = vmatmul.mubr.bf16.gmra.mxu0 %v2091
    %v2675 = vpop.f32.mrf.mxu0
    %v2676 = vadd.f32 %v2475, %v2675
    %v2677 = vpop.f32.mrf.mxu0
    %v2678 = vpop.f32.mrf.mxu0
    %v2679 = vadd.f32 %v2475, %v2678
    %v2680 = vpop.f32.mrf.mxu0
    %2681 = vmatprep.mubr.bf16.mxu0 0
    %2682 = vmatmul.mubr.bf16.gmra.mxu0 %v2094
    %v2683 = vpop.f32.mrf.mxu0
    %v2684 = vadd.f32 %v2475, %v2683
    %v2685 = vpop.f32.mrf.mxu0
    %v2686 = vpop.f32.mrf.mxu0
    %v2687 = vadd.f32 %v2475, %v2686
    %v2688 = vpop.f32.mrf.mxu0
    %2689 = vmatprep.mubr.bf16.mxu0 0
    %2690 = vmatmul.mubr.bf16.gmra.mxu0 %v2097
    %v2691 = vpop.f32.mrf.mxu0
    %v2692 = vadd.f32 %v2475, %v2691
    %v2693 = vpop.f32.mrf.mxu0
    %v2694 = vpop.f32.mrf.mxu0
    %v2695 = vadd.f32 %v2475, %v2694
    %v2696 = vpop.f32.mrf.mxu0
    %2697 = vmatprep.mubr.bf16.mxu0 0
    %2698 = vmatmul.mubr.bf16.gmra.mxu0 %v2100
    %v2699 = vpop.f32.mrf.mxu0
    %v2700 = vadd.f32 %v2475, %v2699
    %v2701 = vpop.f32.mrf.mxu0
    %v2702 = vpop.f32.mrf.mxu0
    %v2703 = vadd.f32 %v2475, %v2702
    %v2704 = vpop.f32.mrf.mxu0
    %2705 = vmatprep.mubr.bf16.mxu0 0
    %2706 = vmatmul.mubr.bf16.gmra.mxu0 %v2103
    %v2707 = vpop.f32.mrf.mxu0
    %v2708 = vadd.f32 %v2475, %v2707
    %v2709 = vpop.f32.mrf.mxu0
    %v2710 = vpop.f32.mrf.mxu0
    %v2711 = vadd.f32 %v2475, %v2710
    %v2712 = vpop.f32.mrf.mxu0
    %2713 = vmatprep.mubr.bf16.mxu0 0
    %2714 = vmatmul.mubr.bf16.gmra.mxu0 %v2106
    %v2715 = vpop.f32.mrf.mxu0
    %v2716 = vadd.f32 %v2475, %v2715
    %v2717 = vpop.f32.mrf.mxu0
    %v2718 = vpop.f32.mrf.mxu0
    %v2719 = vadd.f32 %v2475, %v2718
    %v2720 = vpop.f32.mrf.mxu0
    %2721 = vmatprep.mubr.bf16.mxu0 0
    %2722 = vmatmul.mubr.bf16.gmra.mxu0 %v2109
    %v2723 = vpop.f32.mrf.mxu0
    %v2724 = vadd.f32 %v2475, %v2723
    %v2725 = vpop.f32.mrf.mxu0
    %v2726 = vpop.f32.mrf.mxu0
    %v2727 = vadd.f32 %v2475, %v2726
    %v2728 = vpop.f32.mrf.mxu0
    %2729 = vmatprep.mubr.bf16.mxu0 0
    %2730 = vmatmul.mubr.bf16.gmra.mxu0 %v2112
    %v2731 = vpop.f32.mrf.mxu0
    %v2732 = vadd.f32 %v2475, %v2731
    %v2733 = vpop.f32.mrf.mxu0
    %v2734 = vpop.f32.mrf.mxu0
    %v2735 = vadd.f32 %v2475, %v2734
    %v2736 = vpop.f32.mrf.mxu0
    %2737 = vmatprep.mubr.bf16.mxu0 0
    %2738 = vmatmul.mubr.bf16.gmra.mxu0 %v2115
    %v2739 = vpop.f32.mrf.mxu0
    %v2740 = vadd.f32 %v2475, %v2739
    %v2741 = vpop.f32.mrf.mxu0
    %v2742 = vpop.f32.mrf.mxu0
    %v2743 = vadd.f32 %v2475, %v2742
    %v2744 = vpop.f32.mrf.mxu0
    %2745 = vmatprep.mubr.bf16.mxu0 0
    %2746 = vmatmul.mubr.bf16.gmra.mxu0 %v2118
    %v2747 = vpop.f32.mrf.mxu0
    %v2748 = vadd.f32 %v2475, %v2747
    %v2749 = vpop.f32.mrf.mxu0
    %v2750 = vpop.f32.mrf.mxu0
    %v2751 = vadd.f32 %v2475, %v2750
    %v2752 = vpop.f32.mrf.mxu0
    %2753 = vmatprep.mubr.bf16.mxu0 0
    %2754 = vmatmul.mubr.bf16.gmra.mxu0 %v2121
    %v2755 = vpop.f32.mrf.mxu0
    %v2756 = vadd.f32 %v2475, %v2755
    %v2757 = vpop.f32.mrf.mxu0
    %v2758 = vpop.f32.mrf.mxu0
    %v2759 = vadd.f32 %v2475, %v2758
    %v2760 = vpop.f32.mrf.mxu0
    %2761 = vmatprep.mubr.bf16.mxu0 0
    %2762 = vmatmul.mubr.bf16.gmra.mxu0 %v2124
    %v2763 = vpop.f32.mrf.mxu0
    %v2764 = vadd.f32 %v2475, %v2763
    %v2765 = vpop.f32.mrf.mxu0
    %v2766 = vpop.f32.mrf.mxu0
    %v2767 = vadd.f32 %v2475, %v2766
    %v2768 = vpop.f32.mrf.mxu0
    %2769 = vmatprep.mubr.bf16.mxu0 0
    %2770 = vmatmul.mubr.bf16.gmra.mxu0 %v2127
    %v2771 = vpop.f32.mrf.mxu0
    %v2772 = vadd.f32 %v2475, %v2771
    %v2773 = vpop.f32.mrf.mxu0
    %v2774 = vpop.f32.mrf.mxu0
    %v2775 = vadd.f32 %v2475, %v2774
    %v2776 = vpop.f32.mrf.mxu0
    %2777 = vmatprep.mubr.bf16.mxu0 0
    %2778 = vmatmul.mubr.bf16.gmra.mxu0 %v2130
    %v2779 = vpop.f32.mrf.mxu0
    %v2780 = vadd.f32 %v2475, %v2779
    %v2781 = vpop.f32.mrf.mxu0
    %v2782 = vpop.f32.mrf.mxu0
    %v2783 = vadd.f32 %v2475, %v2782
    %v2784 = vpop.f32.mrf.mxu0
    %2785 = vmatprep.mubr.bf16.mxu0 0
    %2786 = vmatmul.mubr.bf16.gmra.mxu0 %v2133
    %v2787 = vpop.f32.mrf.mxu0
    %v2788 = vadd.f32 %v2475, %v2787
    %v2789 = vpop.f32.mrf.mxu0
    %v2790 = vpop.f32.mrf.mxu0
    %v2791 = vadd.f32 %v2475, %v2790
    %v2792 = vpop.f32.mrf.mxu0
    %2793 = vmatprep.mubr.bf16.mxu0 0
    %2794 = vmatmul.mubr.bf16.gmra.mxu0 %v2136
    %v2795 = vpop.f32.mrf.mxu0
    %v2796 = vadd.f32 %v2475, %v2795
    %v2797 = vpop.f32.mrf.mxu0
    %v2798 = vpop.f32.mrf.mxu0
    %v2799 = vadd.f32 %v2475, %v2798
    %v2800 = vpop.f32.mrf.mxu0
    %2801 = vmatprep.mubr.bf16.mxu0 0
    %2802 = vmatmul.mubr.bf16.gmra.mxu0 %v2139
    %v2803 = vpop.f32.mrf.mxu0
    %v2804 = vadd.f32 %v2475, %v2803
    %v2805 = vpop.f32.mrf.mxu0
    %v2806 = vpop.f32.mrf.mxu0
    %v2807 = vadd.f32 %v2475, %v2806
    %v2808 = vpop.f32.mrf.mxu0
    %2809 = vmatprep.mubr.bf16.mxu0 0
    %2810 = vmatmul.mubr.bf16.gmra.mxu0 %v2142
    %v2811 = vpop.f32.mrf.mxu0
    %v2812 = vadd.f32 %v2475, %v2811
    %v2813 = vpop.f32.mrf.mxu0
    %v2814 = vpop.f32.mrf.mxu0
    %v2815 = vadd.f32 %v2475, %v2814
    %v2816 = vpop.f32.mrf.mxu0
    %2817 = vmatprep.mubr.bf16.mxu0 0
    %2818 = vmatmul.mubr.bf16.gmra.mxu0 %v2145
    %v2819 = vpop.f32.mrf.mxu0
    %v2820 = vadd.f32 %v2475, %v2819
    %v2821 = vpop.f32.mrf.mxu0
    %v2822 = vpop.f32.mrf.mxu0
    %v2823 = vadd.f32 %v2475, %v2822
    %v2824 = vpop.f32.mrf.mxu0
    %2825 = vmatprep.mubr.bf16.mxu0 0
    %2826 = vmatmul.mubr.bf16.gmra.mxu0 %v2148
    %v2827 = vpop.f32.mrf.mxu0
    %v2828 = vadd.f32 %v2475, %v2827
    %v2829 = vpop.f32.mrf.mxu0
    %v2830 = vpop.f32.mrf.mxu0
    %v2831 = vadd.f32 %v2475, %v2830
    %v2832 = vpop.f32.mrf.mxu0
    %2833 = vmatprep.mubr.bf16.mxu0 0
    %2834 = vmatmul.mubr.bf16.gmra.mxu0 %v2151
    %v2835 = vpop.f32.mrf.mxu0
    %v2836 = vadd.f32 %v2475, %v2835
    %v2837 = vpop.f32.mrf.mxu0
    %v2838 = vpop.f32.mrf.mxu0
    %v2839 = vadd.f32 %v2475, %v2838
    %v2840 = vpop.f32.mrf.mxu0
    %2841 = vmatprep.mubr.bf16.mxu0 0
    %2842 = vmatmul.mubr.bf16.gmra.mxu0 %v2154
    %v2843 = vpop.f32.mrf.mxu0
    %v2844 = vadd.f32 %v2475, %v2843
    %v2845 = vpop.f32.mrf.mxu0
    %v2846 = vpop.f32.mrf.mxu0
    %v2847 = vadd.f32 %v2475, %v2846
    %v2848 = vpop.f32.mrf.mxu0
    %2849 = vmatprep.mubr.bf16.mxu0 0
    %2850 = vmatmul.mubr.bf16.gmra.mxu0 %v2157
    %v2851 = vpop.f32.mrf.mxu0
    %v2852 = vadd.f32 %v2475, %v2851
    %v2853 = vpop.f32.mrf.mxu0
    %v2854 = vpop.f32.mrf.mxu0
    %v2855 = vadd.f32 %v2475, %v2854
    %v2856 = vpop.f32.mrf.mxu0
    %2857 = vmatprep.mubr.bf16.mxu0 0
    %2858 = vmatmul.mubr.bf16.gmra.mxu0 %v2160
    %v2859 = vpop.f32.mrf.mxu0
    %v2860 = vadd.f32 %v2475, %v2859
    %v2861 = vpop.f32.mrf.mxu0
    %v2862 = vpop.f32.mrf.mxu0
    %v2863 = vadd.f32 %v2475, %v2862
    %v2864 = vpop.f32.mrf.mxu0
    %2865 = vmatprep.mubr.bf16.mxu0 0
    %2866 = vmatmul.mubr.bf16.gmra.mxu0 %v2163
    %v2867 = vpop.f32.mrf.mxu0
    %v2868 = vadd.f32 %v2475, %v2867
    %v2869 = vpop.f32.mrf.mxu0
    %v2870 = vpop.f32.mrf.mxu0
    %v2871 = vadd.f32 %v2475, %v2870
    %v2872 = vpop.f32.mrf.mxu0
    %2873 = vmatprep.mubr.bf16.mxu0 0
    %2874 = vmatmul.mubr.bf16.gmra.mxu0 %v2166
    %v2875 = vpop.f32.mrf.mxu0
    %v2876 = vadd.f32 %v2475, %v2875
    %v2877 = vpop.f32.mrf.mxu0
    %v2878 = vpop.f32.mrf.mxu0
    %v2879 = vadd.f32 %v2475, %v2878
    %v2880 = vpop.f32.mrf.mxu0
    %2881 = vmatprep.mubr.bf16.mxu0 0
    %2882 = vmatmul.mubr.bf16.gmra.mxu0 %v2169
    %v2883 = vpop.f32.mrf.mxu0
    %v2884 = vadd.f32 %v2475, %v2883
    %v2885 = vpop.f32.mrf.mxu0
    %v2886 = vpop.f32.mrf.mxu0
    %v2887 = vadd.f32 %v2475, %v2886
    %v2888 = vpop.f32.mrf.mxu0
    %2889 = vmatprep.mubr.bf16.mxu0 0
    %2890 = vmatmul.mubr.bf16.gmra.mxu0 %v2172
    %v2891 = vpop.f32.mrf.mxu0
    %v2892 = vadd.f32 %v2475, %v2891
    %v2893 = vpop.f32.mrf.mxu0
    %v2894 = vpop.f32.mrf.mxu0
    %v2895 = vadd.f32 %v2475, %v2894
    %v2896 = vpop.f32.mrf.mxu0
    %2897 = vmatprep.mubr.bf16.mxu0 0
    %2898 = vmatmul.mubr.bf16.gmra.mxu0 %v2175
    %v2899 = vpop.f32.mrf.mxu0
    %v2900 = vadd.f32 %v2475, %v2899
    %v2901 = vpop.f32.mrf.mxu0
    %v2902 = vpop.f32.mrf.mxu0
    %v2903 = vadd.f32 %v2475, %v2902
    %v2904 = vpop.f32.mrf.mxu0
    %2905 = vmatprep.mubr.bf16.mxu0 0
    %2906 = vmatmul.mubr.bf16.gmra.mxu0 %v2178
    %v2907 = vpop.f32.mrf.mxu0
    %v2908 = vadd.f32 %v2475, %v2907
    %v2909 = vpop.f32.mrf.mxu0
    %v2910 = vpop.f32.mrf.mxu0
    %v2911 = vadd.f32 %v2475, %v2910
    %v2912 = vpop.f32.mrf.mxu0
    %2913 = vmatprep.mubr.bf16.mxu0 0
    %2914 = vmatmul.mubr.bf16.gmra.mxu0 %v2181
    %v2915 = vpop.f32.mrf.mxu0
    %v2916 = vadd.f32 %v2475, %v2915
    %v2917 = vpop.f32.mrf.mxu0
    %v2918 = vpop.f32.mrf.mxu0
    %v2919 = vadd.f32 %v2475, %v2918
    %v2920 = vpop.f32.mrf.mxu0
    %2921 = vmatprep.mubr.bf16.mxu0 0
    %2922 = vmatmul.mubr.bf16.gmra.mxu0 %v2184
    %v2923 = vpop.f32.mrf.mxu0
    %v2924 = vadd.f32 %v2475, %v2923
    %v2925 = vpop.f32.mrf.mxu0
    %v2926 = vpop.f32.mrf.mxu0
    %v2927 = vadd.f32 %v2475, %v2926
    %v2928 = vpop.f32.mrf.mxu0
    %2929 = vmatprep.mubr.bf16.mxu0 0
    %2930 = vmatmul.mubr.bf16.gmra.mxu0 %v2187
    %v2931 = vpop.f32.mrf.mxu0
    %v2932 = vadd.f32 %v2475, %v2931
    %v2933 = vpop.f32.mrf.mxu0
    %v2934 = vpop.f32.mrf.mxu0
    %v2935 = vadd.f32 %v2475, %v2934
    %v2936 = vpop.f32.mrf.mxu0
    %2937 = vmatprep.mubr.bf16.mxu0 0
    %2938 = vmatmul.mubr.bf16.gmra.mxu0 %v2190
    %v2939 = vpop.f32.mrf.mxu0
    %v2940 = vadd.f32 %v2475, %v2939
    %v2941 = vpop.f32.mrf.mxu0
    %v2942 = vpop.f32.mrf.mxu0
    %v2943 = vadd.f32 %v2475, %v2942
    %v2944 = vpop.f32.mrf.mxu0
    %2945 = vmatprep.mubr.bf16.mxu0 0
    %2946 = vmatmul.mubr.bf16.gmra.mxu0 %v2193
    %v2947 = vpop.f32.mrf.mxu0
    %v2948 = vadd.f32 %v2475, %v2947
    %v2949 = vpop.f32.mrf.mxu0
    %v2950 = vpop.f32.mrf.mxu0
    %v2951 = vadd.f32 %v2475, %v2950
    %v2952 = vpop.f32.mrf.mxu0
    %2953 = vmatprep.mubr.bf16.mxu0 0
    %2954 = vmatmul.mubr.bf16.gmra.mxu0 %v2196
    %v2955 = vpop.f32.mrf.mxu0
    %v2956 = vadd.f32 %v2475, %v2955
    %v2957 = vpop.f32.mrf.mxu0
    %v2958 = vpop.f32.mrf.mxu0
    %v2959 = vadd.f32 %v2475, %v2958
    %v2960 = vpop.f32.mrf.mxu0
    %2961 = vmatprep.mubr.bf16.mxu0 0
    %2962 = vmatmul.mubr.bf16.gmra.mxu0 %v2199
    %v2963 = vpop.f32.mrf.mxu0
    %v2964 = vadd.f32 %v2475, %v2963
    %v2965 = vpop.f32.mrf.mxu0
    %v2966 = vpop.f32.mrf.mxu0
    %v2967 = vadd.f32 %v2475, %v2966
    %v2968 = vpop.f32.mrf.mxu0
    %2969 = vmatprep.mubr.bf16.mxu0 0
    %2970 = vmatmul.mubr.bf16.gmra.mxu0 %v2202
    %v2971 = vpop.f32.mrf.mxu0
    %v2972 = vadd.f32 %v2475, %v2971
    %v2973 = vpop.f32.mrf.mxu0
    %v2974 = vpop.f32.mrf.mxu0
    %v2975 = vadd.f32 %v2475, %v2974
    %v2976 = vpop.f32.mrf.mxu0
    %2977 = vmatprep.mubr.bf16.mxu0 0
    %2978 = vmatmul.mubr.bf16.gmra.mxu0 %v2205
    %v2979 = vpop.f32.mrf.mxu0
    %v2980 = vadd.f32 %v2475, %v2979
    %v2981 = vpop.f32.mrf.mxu0
    %v2982 = vpop.f32.mrf.mxu0
    %v2983 = vadd.f32 %v2475, %v2982
    %v2984 = vpop.f32.mrf.mxu0
    %2985 = vmatprep.mubr.bf16.mxu0 0
    %2986 = vmatmul.mubr.bf16.gmra.mxu0 %v2208
    %v2987 = vpop.f32.mrf.mxu0
    %v2988 = vadd.f32 %v2475, %v2987
    %v2989 = vpop.f32.mrf.mxu0
    %v2990 = vpop.f32.mrf.mxu0
    %v2991 = vadd.f32 %v2475, %v2990
    %v2992 = vpop.f32.mrf.mxu0
    %2993 = vmatprep.mubr.bf16.mxu0 0
    %2994 = vmatmul.mubr.bf16.gmra.mxu0 %v2211
    %v2995 = vpop.f32.mrf.mxu0
    %v2996 = vadd.f32 %v2475, %v2995
    %v2997 = vpop.f32.mrf.mxu0
    %v2998 = vpop.f32.mrf.mxu0
    %v2999 = vadd.f32 %v2475, %v2998
    %v3000 = vpop.f32.mrf.mxu0
    %3001 = vmatprep.mubr.bf16.mxu0 0
    %3002 = vmatmul.mubr.bf16.gmra.mxu0 %v2214
    %v3003 = vpop.f32.mrf.mxu0
    %v3004 = vadd.f32 %v2475, %v3003
    %v3005 = vpop.f32.mrf.mxu0
    %v3006 = vpop.f32.mrf.mxu0
    %v3007 = vadd.f32 %v2475, %v3006
    %v3008 = vpop.f32.mrf.mxu0
    %3009 = vmatprep.mubr.bf16.mxu0 0
    %3010 = vmatmul.mubr.bf16.gmra.mxu0 %v2217
    %v3011 = vpop.f32.mrf.mxu0
    %v3012 = vadd.f32 %v2475, %v3011
    %v3013 = vpop.f32.mrf.mxu0
    %v3014 = vpop.f32.mrf.mxu0
    %v3015 = vadd.f32 %v2475, %v3014
    %v3016 = vpop.f32.mrf.mxu0
    %3017 = vmatprep.mubr.bf16.mxu0 0
    %3018 = vmatmul.mubr.bf16.gmra.mxu0 %v2220
    %v3019 = vpop.f32.mrf.mxu0
    %v3020 = vadd.f32 %v2475, %v3019
    %v3021 = vpop.f32.mrf.mxu0
    %v3022 = vpop.f32.mrf.mxu0
    %v3023 = vadd.f32 %v2475, %v3022
    %v3024 = vpop.f32.mrf.mxu0
    %3025 = vmatprep.mubr.bf16.mxu0 0
    %3026 = vmatmul.mubr.bf16.gmra.mxu0 %v2223
    %v3027 = vpop.f32.mrf.mxu0
    %v3028 = vadd.f32 %v2475, %v3027
    %v3029 = vpop.f32.mrf.mxu0
    %v3030 = vpop.f32.mrf.mxu0
    %v3031 = vadd.f32 %v2475, %v3030
    %v3032 = vpop.f32.mrf.mxu0
    %3033 = vdwg.mxu0
    %v3034 = vmax.f32 %v2524, 0.0
    %v3035 = vmax.f32 %v2527, 0.0
    %v3036 = vmax.f32 %v2532, 0.0
    %v3037 = vmax.f32 %v2535, 0.0
    %v3038 = vmax.f32 %v2540, 0.0
    %v3039 = vmax.f32 %v2543, 0.0
    %v3040 = vmax.f32 %v2548, 0.0
    %v3041 = vmax.f32 %v2551, 0.0
    %v3042 = vmax.f32 %v2556, 0.0
    %v3043 = vmax.f32 %v2559, 0.0
    %v3044 = vmax.f32 %v2564, 0.0
    %v3045 = vmax.f32 %v2567, 0.0
    %v3046 = vmax.f32 %v2572, 0.0
    %v3047 = vmax.f32 %v2575, 0.0
    %v3048 = vmax.f32 %v2580, 0.0
    %v3049 = vmax.f32 %v2583, 0.0
    %v3050 = vmax.f32 %v2588, 0.0
    %v3051 = vmax.f32 %v2591, 0.0
    %v3052 = vmax.f32 %v2596, 0.0
    %v3053 = vmax.f32 %v2599, 0.0
    %v3054 = vmax.f32 %v2604, 0.0
    %v3055 = vmax.f32 %v2607, 0.0
    %v3056 = vmax.f32 %v2612, 0.0
    %v3057 = vmax.f32 %v2615, 0.0
    %v3058 = vmax.f32 %v2620, 0.0
    %v3059 = vmax.f32 %v2623, 0.0
    %v3060 = vmax.f32 %v2628, 0.0
    %v3061 = vmax.f32 %v2631, 0.0
    %v3062 = vmax.f32 %v2636, 0.0
    %v3063 = vmax.f32 %v2639, 0.0
    %v3064 = vmax.f32 %v2644, 0.0
    %v3065 = vmax.f32 %v2647, 0.0
    %v3066 = vmax.f32 %v2652, 0.0
    %v3067 = vmax.f32 %v2655, 0.0
    %v3068 = vmax.f32 %v2660, 0.0
    %v3069 = vmax.f32 %v2663, 0.0
    %v3070 = vmax.f32 %v2668, 0.0
    %v3071 = vmax.f32 %v2671, 0.0
    %v3072 = vmax.f32 %v2676, 0.0
    %v3073 = vmax.f32 %v2679, 0.0
    %v3074 = vmax.f32 %v2684, 0.0
    %v3075 = vmax.f32 %v2687, 0.0
    %v3076 = vmax.f32 %v2692, 0.0
    %v3077 = vmax.f32 %v2695, 0.0
    %v3078 = vmax.f32 %v2700, 0.0
    %v3079 = vmax.f32 %v2703, 0.0
    %v3080 = vmax.f32 %v2708, 0.0
    %v3081 = vmax.f32 %v2711, 0.0
    %v3082 = vmax.f32 %v2716, 0.0
    %v3083 = vmax.f32 %v2719, 0.0
    %v3084 = vmax.f32 %v2724, 0.0
    %v3085 = vmax.f32 %v2727, 0.0
    %v3086 = vmax.f32 %v2732, 0.0
    %v3087 = vmax.f32 %v2735, 0.0
    %v3088 = vmax.f32 %v2740, 0.0
    %v3089 = vmax.f32 %v2743, 0.0
    %v3090 = vmax.f32 %v2748, 0.0
    %v3091 = vmax.f32 %v2751, 0.0
    %v3092 = vmax.f32 %v2756, 0.0
    %v3093 = vmax.f32 %v2759, 0.0
    %v3094 = vmax.f32 %v2764, 0.0
    %v3095 = vmax.f32 %v2767, 0.0
    %v3096 = vmax.f32 %v2772, 0.0
    %v3097 = vmax.f32 %v2775, 0.0
    %v3098 = vmax.f32 %v2780, 0.0
    %v3099 = vmax.f32 %v2783, 0.0
    %v3100 = vmax.f32 %v2788, 0.0
    %v3101 = vmax.f32 %v2791, 0.0
    %v3102 = vmax.f32 %v2796, 0.0
    %v3103 = vmax.f32 %v2799, 0.0
    %v3104 = vmax.f32 %v2804, 0.0
    %v3105 = vmax.f32 %v2807, 0.0
    %v3106 = vmax.f32 %v2812, 0.0
    %v3107 = vmax.f32 %v2815, 0.0
    %v3108 = vmax.f32 %v2820, 0.0
    %v3109 = vmax.f32 %v2823, 0.0
    %v3110 = vmax.f32 %v2828, 0.0
    %v3111 = vmax.f32 %v2831, 0.0
    %v3112 = vmax.f32 %v2836, 0.0
    %v3113 = vmax.f32 %v2839, 0.0
    %v3114 = vmax.f32 %v2844, 0.0
    %v3115 = vmax.f32 %v2847, 0.0
    %v3116 = vmax.f32 %v2852, 0.0
    %v3117 = vmax.f32 %v2855, 0.0
    %v3118 = vmax.f32 %v2860, 0.0
    %v3119 = vmax.f32 %v2863, 0.0
    %v3120 = vmax.f32 %v2868, 0.0
    %v3121 = vmax.f32 %v2871, 0.0
    %v3122 = vmax.f32 %v2876, 0.0
    %v3123 = vmax.f32 %v2879, 0.0
    %v3124 = vmax.f32 %v2884, 0.0
    %v3125 = vmax.f32 %v2887, 0.0
    %v3126 = vmax.f32 %v2892, 0.0
    %v3127 = vmax.f32 %v2895, 0.0
    %v3128 = vmax.f32 %v2900, 0.0
    %v3129 = vmax.f32 %v2903, 0.0
    %v3130 = vmax.f32 %v2908, 0.0
    %v3131 = vmax.f32 %v2911, 0.0
    %v3132 = vmax.f32 %v2916, 0.0
    %v3133 = vmax.f32 %v2919, 0.0
    %v3134 = vmax.f32 %v2924, 0.0
    %v3135 = vmax.f32 %v2927, 0.0
    %v3136 = vmax.f32 %v2932, 0.0
    %v3137 = vmax.f32 %v2935, 0.0
    %v3138 = vmax.f32 %v2940, 0.0
    %v3139 = vmax.f32 %v2943, 0.0
    %v3140 = vmax.f32 %v2948, 0.0
    %v3141 = vmax.f32 %v2951, 0.0
    %v3142 = vmax.f32 %v2956, 0.0
    %v3143 = vmax.f32 %v2959, 0.0
    %v3144 = vmax.f32 %v2964, 0.0
    %v3145 = vmax.f32 %v2967, 0.0
    %v3146 = vmax.f32 %v2972, 0.0
    %v3147 = vmax.f32 %v2975, 0.0
    %v3148 = vmax.f32 %v2980, 0.0
    %v3149 = vmax.f32 %v2983, 0.0
    %v3150 = vmax.f32 %v2988, 0.0
    %v3151 = vmax.f32 %v2991, 0.0
    %v3152 = vmax.f32 %v2996, 0.0
    %v3153 = vmax.f32 %v2999, 0.0
    %v3154 = vmax.f32 %v3004, 0.0
    %v3155 = vmax.f32 %v3007, 0.0
    %v3156 = vmax.f32 %v3012, 0.0
    %v3157 = vmax.f32 %v3015, 0.0
    %v3158 = vmax.f32 %v3020, 0.0
    %v3159 = vmax.f32 %v3023, 0.0
    %v3160 = vmax.f32 %v3028, 0.0
    %v3161 = vmax.f32 %v3031, 0.0
    %v3162 = vpack.c.bf16 %v3035, %v3034
    %v3163 = vpack.c.bf16 %v3037, %v3036
    %v3164 = vpack.c.bf16 %v3039, %v3038
    %v3165 = vpack.c.bf16 %v3041, %v3040
    %v3166 = vpack.c.bf16 %v3043, %v3042
    %v3167 = vpack.c.bf16 %v3045, %v3044
    %v3168 = vpack.c.bf16 %v3047, %v3046
    %v3169 = vpack.c.bf16 %v3049, %v3048
    %v3170 = vpack.c.bf16 %v3051, %v3050
    %v3171 = vpack.c.bf16 %v3053, %v3052
    %v3172 = vpack.c.bf16 %v3055, %v3054
    %v3173 = vpack.c.bf16 %v3057, %v3056
    %v3174 = vpack.c.bf16 %v3059, %v3058
    %v3175 = vpack.c.bf16 %v3061, %v3060
    %v3176 = vpack.c.bf16 %v3063, %v3062
    %v3177 = vpack.c.bf16 %v3065, %v3064
    %v3178 = vpack.c.bf16 %v3067, %v3066
    %v3179 = vpack.c.bf16 %v3069, %v3068
    %v3180 = vpack.c.bf16 %v3071, %v3070
    %v3181 = vpack.c.bf16 %v3073, %v3072
    %v3182 = vpack.c.bf16 %v3075, %v3074
    %v3183 = vpack.c.bf16 %v3077, %v3076
    %v3184 = vpack.c.bf16 %v3079, %v3078
    %v3185 = vpack.c.bf16 %v3081, %v3080
    %v3186 = vpack.c.bf16 %v3083, %v3082
    %v3187 = vpack.c.bf16 %v3085, %v3084
    %v3188 = vpack.c.bf16 %v3087, %v3086
    %v3189 = vpack.c.bf16 %v3089, %v3088
    %v3190 = vpack.c.bf16 %v3091, %v3090
    %v3191 = vpack.c.bf16 %v3093, %v3092
    %v3192 = vpack.c.bf16 %v3095, %v3094
    %v3193 = vpack.c.bf16 %v3097, %v3096
    %v3194 = vpack.c.bf16 %v3099, %v3098
    %v3195 = vpack.c.bf16 %v3101, %v3100
    %v3196 = vpack.c.bf16 %v3103, %v3102
    %v3197 = vpack.c.bf16 %v3105, %v3104
    %v3198 = vpack.c.bf16 %v3107, %v3106
    %v3199 = vpack.c.bf16 %v3109, %v3108
    %v3200 = vpack.c.bf16 %v3111, %v3110
    %v3201 = vpack.c.bf16 %v3113, %v3112
    %v3202 = vpack.c.bf16 %v3115, %v3114
    %v3203 = vpack.c.bf16 %v3117, %v3116
    %v3204 = vpack.c.bf16 %v3119, %v3118
    %v3205 = vpack.c.bf16 %v3121, %v3120
    %v3206 = vpack.c.bf16 %v3123, %v3122
    %v3207 = vpack.c.bf16 %v3125, %v3124
    %v3208 = vpack.c.bf16 %v3127, %v3126
    %v3209 = vpack.c.bf16 %v3129, %v3128
    %v3210 = vpack.c.bf16 %v3131, %v3130
    %v3211 = vpack.c.bf16 %v3133, %v3132
    %v3212 = vpack.c.bf16 %v3135, %v3134
    %v3213 = vpack.c.bf16 %v3137, %v3136
    %v3214 = vpack.c.bf16 %v3139, %v3138
    %v3215 = vpack.c.bf16 %v3141, %v3140
    %v3216 = vpack.c.bf16 %v3143, %v3142
    %v3217 = vpack.c.bf16 %v3145, %v3144
    %v3218 = vpack.c.bf16 %v3147, %v3146
    %v3219 = vpack.c.bf16 %v3149, %v3148
    %v3220 = vpack.c.bf16 %v3151, %v3150
    %v3221 = vpack.c.bf16 %v3153, %v3152
    %v3222 = vpack.c.bf16 %v3155, %v3154
    %v3223 = vpack.c.bf16 %v3157, %v3156
    %v3224 = vpack.c.bf16 %v3159, %v3158
    %v3225 = vpack.c.bf16 %v3161, %v3160
    %v3226 = vld [vmem:[%s7] sm:$0xf]
    %v3227 = vld [vmem:[%s7 + $0x4] sm:$0xf]
    %v3228 = vld [vmem:[%s7 + $0x8] sm:$0xf]
    %v3229 = vld [vmem:[%s7 + $0xc] sm:$0xf]
    %v3230 = vld [vmem:[%s7 + $0x10] sm:$0xf]
    %v3231 = vld [vmem:[%s7 + $0x14] sm:$0xf]
    %v3232 = vld [vmem:[%s7 + $0x18] sm:$0xf]
    %v3233 = vld [vmem:[%s7 + $0x1c] sm:$0xf]
    %v3234 = vld [vmem:[%s8] sm:$0x1]
    %v3236 = vlaneseq
    %v3237 = vshrl.u32 %v3236, 7
    %v3238 = vsub.s32 0, %v3237
    %v3239 = vrot.slane %v3234, %v3238
    %v3249 = vunpack.c.l.b16 %v3226
    %v3250 = vunpack.c.l.b16 %v3227
    %v3251 = vunpack.c.l.b16 %v3228
    %v3252 = vunpack.c.l.b16 %v3229
    %v3253 = vunpack.c.l.b16 %v3230
    %v3254 = vunpack.c.l.b16 %v3231
    %v3255 = vunpack.c.l.b16 %v3232
    %v3256 = vunpack.c.l.b16 %v3233
    %v3257 = vpack.c.b16 %v3250, %v3249
    %v3258 = vpack.c.b16 %v3252, %v3251
    %v3259 = vpack.c.b16 %v3254, %v3253
    %v3260 = vpack.c.b16 %v3256, %v3255
    %v3266 = vsel %vm1098, %v3162, 0
    %v3269 = vsel %vm1098, %v3163, 0
    %v3272 = vsel %vm1098, %v3164, 0
    %v3275 = vsel %vm1098, %v3165, 0
    %v3278 = vsel %vm1098, %v3166, 0
    %v3281 = vsel %vm1098, %v3167, 0
    %v3284 = vsel %vm1098, %v3168, 0
    %v3287 = vsel %vm1098, %v3169, 0
    %v3290 = vsel %vm1098, %v3170, 0
    %v3293 = vsel %vm1098, %v3171, 0
    %v3296 = vsel %vm1098, %v3172, 0
    %v3299 = vsel %vm1098, %v3173, 0
    %v3302 = vsel %vm1098, %v3174, 0
    %v3305 = vsel %vm1098, %v3175, 0
    %v3308 = vsel %vm1098, %v3176, 0
    %v3311 = vsel %vm1098, %v3177, 0
    %v3314 = vsel %vm1098, %v3178, 0
    %v3317 = vsel %vm1098, %v3179, 0
    %v3320 = vsel %vm1098, %v3180, 0
    %v3323 = vsel %vm1098, %v3181, 0
    %v3326 = vsel %vm1098, %v3182, 0
    %v3329 = vsel %vm1098, %v3183, 0
    %v3332 = vsel %vm1098, %v3184, 0
    %v3335 = vsel %vm1098, %v3185, 0
    %v3338 = vsel %vm1098, %v3186, 0
    %v3341 = vsel %vm1098, %v3187, 0
    %v3344 = vsel %vm1098, %v3188, 0
    %v3347 = vsel %vm1098, %v3189, 0
    %v3350 = vsel %vm1098, %v3190, 0
    %v3353 = vsel %vm1098, %v3191, 0
    %v3356 = vsel %vm1098, %v3192, 0
    %v3359 = vsel %vm1098, %v3193, 0
    %v3362 = vsel %vm1098, %v3194, 0
    %v3365 = vsel %vm1098, %v3195, 0
    %v3368 = vsel %vm1098, %v3196, 0
    %v3371 = vsel %vm1098, %v3197, 0
    %v3374 = vsel %vm1098, %v3198, 0
    %v3377 = vsel %vm1098, %v3199, 0
    %v3380 = vsel %vm1098, %v3200, 0
    %v3383 = vsel %vm1098, %v3201, 0
    %v3386 = vsel %vm1098, %v3202, 0
    %v3389 = vsel %vm1098, %v3203, 0
    %v3392 = vsel %vm1098, %v3204, 0
    %v3395 = vsel %vm1098, %v3205, 0
    %v3398 = vsel %vm1098, %v3206, 0
    %v3401 = vsel %vm1098, %v3207, 0
    %v3404 = vsel %vm1098, %v3208, 0
    %v3407 = vsel %vm1098, %v3209, 0
    %v3410 = vsel %vm1098, %v3210, 0
    %v3413 = vsel %vm1098, %v3211, 0
    %v3416 = vsel %vm1098, %v3212, 0
    %v3419 = vsel %vm1098, %v3213, 0
    %v3422 = vsel %vm1098, %v3214, 0
    %v3425 = vsel %vm1098, %v3215, 0
    %v3428 = vsel %vm1098, %v3216, 0
    %v3431 = vsel %vm1098, %v3217, 0
    %v3434 = vsel %vm1098, %v3218, 0
    %v3437 = vsel %vm1098, %v3219, 0
    %v3440 = vsel %vm1098, %v3220, 0
    %v3443 = vsel %vm1098, %v3221, 0
    %v3446 = vsel %vm1098, %v3222, 0
    %v3449 = vsel %vm1098, %v3223, 0
    %v3452 = vsel %vm1098, %v3224, 0
    %v3455 = vsel %vm1098, %v3225, 0
    %3457 = vmatprep.subr.bf16.mxu0 0
    %3458 = vmatpush1.bf16.msra.mxu0 0
    %3459 = vmatprep.subr.bf16.mxu0 0
    %3460 = vmatpush1.bf16.msra.mxu0 0
    %3461 = vmatprep.subr.bf16.mxu0 0
    %3462 = vmatpush1.bf16.msra.mxu0 0
    %3463 = vmatprep.subr.bf16.mxu0 0
    %3464 = vmatpush1.bf16.msra.mxu0 0
    %3465 = vmatprep.subr.bf16.mxu0 0
    %3466 = vmatpush1.bf16.msra.mxu0 %v3260
    %3467 = vmatprep.subr.bf16.mxu0 0
    %3468 = vmatpush1.bf16.msra.mxu0 %v3259
    %3469 = vmatprep.subr.bf16.mxu0 0
    %3470 = vmatpush1.bf16.msra.mxu0 %v3258
    %3471 = vmatprep.subr.bf16.mxu0 0
    %3472 = vmatpush1.bf16.msra.mxu0 %v3257
    %3473 = vmatprep.subr.bf16.mxu0 0
    %3474 = vmatpush2.bf16.msra.mxu0 0
    %3475 = vmatprep.subr.bf16.mxu0 0
    %3476 = vmatpush2.bf16.msra.mxu0 0
    %3477 = vmatprep.subr.bf16.mxu0 0
    %3478 = vmatpush2.bf16.msra.mxu0 0
    %3479 = vmatprep.subr.bf16.mxu0 0
    %3480 = vmatpush2.bf16.msra.mxu0 0
    %3481 = vmatprep.subr.bf16.mxu0 0
    %3482 = vmatpush2.bf16.msra.mxu0 0
    %3483 = vmatprep.subr.bf16.mxu0 0
    %3484 = vmatpush2.bf16.msra.mxu0 0
    %3485 = vmatprep.subr.bf16.mxu0 0
    %3486 = vmatpush2.bf16.msra.mxu0 0
    %3487 = vmatprep.subr.bf16.mxu0 0
    %3488 = vmatpush2.bf16.msra.mxu0 0
    %3489 = vmatprep.mubr.bf16.mxu0 0
    %3490 = vmatmul.mubr.bf16.gmra.mxu0 %v3266
    %v3491 = vpop.f32.mrf.mxu0
    %v3492 = vadd.f32 %v3239, %v3491
    %v3493 = vpop.f32.mrf.mxu0
    %v3494 = vpop.f32.mrf.mxu0
    %v3495 = vadd.f32 %v3239, %v3494
    %v3496 = vpop.f32.mrf.mxu0
    %3497 = vmatprep.mubr.bf16.mxu0 0
    %3498 = vmatmul.mubr.bf16.gmra.mxu0 %v3269
    %v3499 = vpop.f32.mrf.mxu0
    %v3500 = vadd.f32 %v3239, %v3499
    %v3501 = vpop.f32.mrf.mxu0
    %v3502 = vpop.f32.mrf.mxu0
    %v3503 = vadd.f32 %v3239, %v3502
    %v3504 = vpop.f32.mrf.mxu0
    %3505 = vmatprep.mubr.bf16.mxu0 0
    %3506 = vmatmul.mubr.bf16.gmra.mxu0 %v3272
    %v3507 = vpop.f32.mrf.mxu0
    %v3508 = vadd.f32 %v3239, %v3507
    %v3509 = vpop.f32.mrf.mxu0
    %v3510 = vpop.f32.mrf.mxu0
    %v3511 = vadd.f32 %v3239, %v3510
    %v3512 = vpop.f32.mrf.mxu0
    %3513 = vmatprep.mubr.bf16.mxu0 0
    %3514 = vmatmul.mubr.bf16.gmra.mxu0 %v3275
    %v3515 = vpop.f32.mrf.mxu0
    %v3516 = vadd.f32 %v3239, %v3515
    %v3517 = vpop.f32.mrf.mxu0
    %v3518 = vpop.f32.mrf.mxu0
    %v3519 = vadd.f32 %v3239, %v3518
    %v3520 = vpop.f32.mrf.mxu0
    %3521 = vmatprep.mubr.bf16.mxu0 0
    %3522 = vmatmul.mubr.bf16.gmra.mxu0 %v3278
    %v3523 = vpop.f32.mrf.mxu0
    %v3524 = vadd.f32 %v3239, %v3523
    %v3525 = vpop.f32.mrf.mxu0
    %v3526 = vpop.f32.mrf.mxu0
    %v3527 = vadd.f32 %v3239, %v3526
    %v3528 = vpop.f32.mrf.mxu0
    %3529 = vmatprep.mubr.bf16.mxu0 0
    %3530 = vmatmul.mubr.bf16.gmra.mxu0 %v3281
    %v3531 = vpop.f32.mrf.mxu0
    %v3532 = vadd.f32 %v3239, %v3531
    %v3533 = vpop.f32.mrf.mxu0
    %v3534 = vpop.f32.mrf.mxu0
    %v3535 = vadd.f32 %v3239, %v3534
    %v3536 = vpop.f32.mrf.mxu0
    %3537 = vmatprep.mubr.bf16.mxu0 0
    %3538 = vmatmul.mubr.bf16.gmra.mxu0 %v3284
    %v3539 = vpop.f32.mrf.mxu0
    %v3540 = vadd.f32 %v3239, %v3539
    %v3541 = vpop.f32.mrf.mxu0
    %v3542 = vpop.f32.mrf.mxu0
    %v3543 = vadd.f32 %v3239, %v3542
    %v3544 = vpop.f32.mrf.mxu0
    %3545 = vmatprep.mubr.bf16.mxu0 0
    %3546 = vmatmul.mubr.bf16.gmra.mxu0 %v3287
    %v3547 = vpop.f32.mrf.mxu0
    %v3548 = vadd.f32 %v3239, %v3547
    %v3549 = vpop.f32.mrf.mxu0
    %v3550 = vpop.f32.mrf.mxu0
    %v3551 = vadd.f32 %v3239, %v3550
    %v3552 = vpop.f32.mrf.mxu0
    %3553 = vmatprep.mubr.bf16.mxu0 0
    %3554 = vmatmul.mubr.bf16.gmra.mxu0 %v3290
    %v3555 = vpop.f32.mrf.mxu0
    %v3556 = vadd.f32 %v3239, %v3555
    %v3557 = vpop.f32.mrf.mxu0
    %v3558 = vpop.f32.mrf.mxu0
    %v3559 = vadd.f32 %v3239, %v3558
    %v3560 = vpop.f32.mrf.mxu0
    %3561 = vmatprep.mubr.bf16.mxu0 0
    %3562 = vmatmul.mubr.bf16.gmra.mxu0 %v3293
    %v3563 = vpop.f32.mrf.mxu0
    %v3564 = vadd.f32 %v3239, %v3563
    %v3565 = vpop.f32.mrf.mxu0
    %v3566 = vpop.f32.mrf.mxu0
    %v3567 = vadd.f32 %v3239, %v3566
    %v3568 = vpop.f32.mrf.mxu0
    %3569 = vmatprep.mubr.bf16.mxu0 0
    %3570 = vmatmul.mubr.bf16.gmra.mxu0 %v3296
    %v3571 = vpop.f32.mrf.mxu0
    %v3572 = vadd.f32 %v3239, %v3571
    %v3573 = vpop.f32.mrf.mxu0
    %v3574 = vpop.f32.mrf.mxu0
    %v3575 = vadd.f32 %v3239, %v3574
    %v3576 = vpop.f32.mrf.mxu0
    %3577 = vmatprep.mubr.bf16.mxu0 0
    %3578 = vmatmul.mubr.bf16.gmra.mxu0 %v3299
    %v3579 = vpop.f32.mrf.mxu0
    %v3580 = vadd.f32 %v3239, %v3579
    %v3581 = vpop.f32.mrf.mxu0
    %v3582 = vpop.f32.mrf.mxu0
    %v3583 = vadd.f32 %v3239, %v3582
    %v3584 = vpop.f32.mrf.mxu0
    %3585 = vmatprep.mubr.bf16.mxu0 0
    %3586 = vmatmul.mubr.bf16.gmra.mxu0 %v3302
    %v3587 = vpop.f32.mrf.mxu0
    %v3588 = vadd.f32 %v3239, %v3587
    %v3589 = vpop.f32.mrf.mxu0
    %v3590 = vpop.f32.mrf.mxu0
    %v3591 = vadd.f32 %v3239, %v3590
    %v3592 = vpop.f32.mrf.mxu0
    %3593 = vmatprep.mubr.bf16.mxu0 0
    %3594 = vmatmul.mubr.bf16.gmra.mxu0 %v3305
    %v3595 = vpop.f32.mrf.mxu0
    %v3596 = vadd.f32 %v3239, %v3595
    %v3597 = vpop.f32.mrf.mxu0
    %v3598 = vpop.f32.mrf.mxu0
    %v3599 = vadd.f32 %v3239, %v3598
    %v3600 = vpop.f32.mrf.mxu0
    %3601 = vmatprep.mubr.bf16.mxu0 0
    %3602 = vmatmul.mubr.bf16.gmra.mxu0 %v3308
    %v3603 = vpop.f32.mrf.mxu0
    %v3604 = vadd.f32 %v3239, %v3603
    %v3605 = vpop.f32.mrf.mxu0
    %v3606 = vpop.f32.mrf.mxu0
    %v3607 = vadd.f32 %v3239, %v3606
    %v3608 = vpop.f32.mrf.mxu0
    %3609 = vmatprep.mubr.bf16.mxu0 0
    %3610 = vmatmul.mubr.bf16.gmra.mxu0 %v3311
    %v3611 = vpop.f32.mrf.mxu0
    %v3612 = vadd.f32 %v3239, %v3611
    %v3613 = vpop.f32.mrf.mxu0
    %v3614 = vpop.f32.mrf.mxu0
    %v3615 = vadd.f32 %v3239, %v3614
    %v3616 = vpop.f32.mrf.mxu0
    %3617 = vmatprep.mubr.bf16.mxu0 0
    %3618 = vmatmul.mubr.bf16.gmra.mxu0 %v3314
    %v3619 = vpop.f32.mrf.mxu0
    %v3620 = vadd.f32 %v3239, %v3619
    %v3621 = vpop.f32.mrf.mxu0
    %v3622 = vpop.f32.mrf.mxu0
    %v3623 = vadd.f32 %v3239, %v3622
    %v3624 = vpop.f32.mrf.mxu0
    %3625 = vmatprep.mubr.bf16.mxu0 0
    %3626 = vmatmul.mubr.bf16.gmra.mxu0 %v3317
    %v3627 = vpop.f32.mrf.mxu0
    %v3628 = vadd.f32 %v3239, %v3627
    %v3629 = vpop.f32.mrf.mxu0
    %v3630 = vpop.f32.mrf.mxu0
    %v3631 = vadd.f32 %v3239, %v3630
    %v3632 = vpop.f32.mrf.mxu0
    %3633 = vmatprep.mubr.bf16.mxu0 0
    %3634 = vmatmul.mubr.bf16.gmra.mxu0 %v3320
    %v3635 = vpop.f32.mrf.mxu0
    %v3636 = vadd.f32 %v3239, %v3635
    %v3637 = vpop.f32.mrf.mxu0
    %v3638 = vpop.f32.mrf.mxu0
    %v3639 = vadd.f32 %v3239, %v3638
    %v3640 = vpop.f32.mrf.mxu0
    %3641 = vmatprep.mubr.bf16.mxu0 0
    %3642 = vmatmul.mubr.bf16.gmra.mxu0 %v3323
    %v3643 = vpop.f32.mrf.mxu0
    %v3644 = vadd.f32 %v3239, %v3643
    %v3645 = vpop.f32.mrf.mxu0
    %v3646 = vpop.f32.mrf.mxu0
    %v3647 = vadd.f32 %v3239, %v3646
    %v3648 = vpop.f32.mrf.mxu0
    %3649 = vmatprep.mubr.bf16.mxu0 0
    %3650 = vmatmul.mubr.bf16.gmra.mxu0 %v3326
    %v3651 = vpop.f32.mrf.mxu0
    %v3652 = vadd.f32 %v3239, %v3651
    %v3653 = vpop.f32.mrf.mxu0
    %v3654 = vpop.f32.mrf.mxu0
    %v3655 = vadd.f32 %v3239, %v3654
    %v3656 = vpop.f32.mrf.mxu0
    %3657 = vmatprep.mubr.bf16.mxu0 0
    %3658 = vmatmul.mubr.bf16.gmra.mxu0 %v3329
    %v3659 = vpop.f32.mrf.mxu0
    %v3660 = vadd.f32 %v3239, %v3659
    %v3661 = vpop.f32.mrf.mxu0
    %v3662 = vpop.f32.mrf.mxu0
    %v3663 = vadd.f32 %v3239, %v3662
    %v3664 = vpop.f32.mrf.mxu0
    %3665 = vmatprep.mubr.bf16.mxu0 0
    %3666 = vmatmul.mubr.bf16.gmra.mxu0 %v3332
    %v3667 = vpop.f32.mrf.mxu0
    %v3668 = vadd.f32 %v3239, %v3667
    %v3669 = vpop.f32.mrf.mxu0
    %v3670 = vpop.f32.mrf.mxu0
    %v3671 = vadd.f32 %v3239, %v3670
    %v3672 = vpop.f32.mrf.mxu0
    %3673 = vmatprep.mubr.bf16.mxu0 0
    %3674 = vmatmul.mubr.bf16.gmra.mxu0 %v3335
    %v3675 = vpop.f32.mrf.mxu0
    %v3676 = vadd.f32 %v3239, %v3675
    %v3677 = vpop.f32.mrf.mxu0
    %v3678 = vpop.f32.mrf.mxu0
    %v3679 = vadd.f32 %v3239, %v3678
    %v3680 = vpop.f32.mrf.mxu0
    %3681 = vmatprep.mubr.bf16.mxu0 0
    %3682 = vmatmul.mubr.bf16.gmra.mxu0 %v3338
    %v3683 = vpop.f32.mrf.mxu0
    %v3684 = vadd.f32 %v3239, %v3683
    %v3685 = vpop.f32.mrf.mxu0
    %v3686 = vpop.f32.mrf.mxu0
    %v3687 = vadd.f32 %v3239, %v3686
    %v3688 = vpop.f32.mrf.mxu0
    %3689 = vmatprep.mubr.bf16.mxu0 0
    %3690 = vmatmul.mubr.bf16.gmra.mxu0 %v3341
    %v3691 = vpop.f32.mrf.mxu0
    %v3692 = vadd.f32 %v3239, %v3691
    %v3693 = vpop.f32.mrf.mxu0
    %v3694 = vpop.f32.mrf.mxu0
    %v3695 = vadd.f32 %v3239, %v3694
    %v3696 = vpop.f32.mrf.mxu0
    %3697 = vmatprep.mubr.bf16.mxu0 0
    %3698 = vmatmul.mubr.bf16.gmra.mxu0 %v3344
    %v3699 = vpop.f32.mrf.mxu0
    %v3700 = vadd.f32 %v3239, %v3699
    %v3701 = vpop.f32.mrf.mxu0
    %v3702 = vpop.f32.mrf.mxu0
    %v3703 = vadd.f32 %v3239, %v3702
    %v3704 = vpop.f32.mrf.mxu0
    %3705 = vmatprep.mubr.bf16.mxu0 0
    %3706 = vmatmul.mubr.bf16.gmra.mxu0 %v3347
    %v3707 = vpop.f32.mrf.mxu0
    %v3708 = vadd.f32 %v3239, %v3707
    %v3709 = vpop.f32.mrf.mxu0
    %v3710 = vpop.f32.mrf.mxu0
    %v3711 = vadd.f32 %v3239, %v3710
    %v3712 = vpop.f32.mrf.mxu0
    %3713 = vmatprep.mubr.bf16.mxu0 0
    %3714 = vmatmul.mubr.bf16.gmra.mxu0 %v3350
    %v3715 = vpop.f32.mrf.mxu0
    %v3716 = vadd.f32 %v3239, %v3715
    %v3717 = vpop.f32.mrf.mxu0
    %v3718 = vpop.f32.mrf.mxu0
    %v3719 = vadd.f32 %v3239, %v3718
    %v3720 = vpop.f32.mrf.mxu0
    %3721 = vmatprep.mubr.bf16.mxu0 0
    %3722 = vmatmul.mubr.bf16.gmra.mxu0 %v3353
    %v3723 = vpop.f32.mrf.mxu0
    %v3724 = vadd.f32 %v3239, %v3723
    %v3725 = vpop.f32.mrf.mxu0
    %v3726 = vpop.f32.mrf.mxu0
    %v3727 = vadd.f32 %v3239, %v3726
    %v3728 = vpop.f32.mrf.mxu0
    %3729 = vmatprep.mubr.bf16.mxu0 0
    %3730 = vmatmul.mubr.bf16.gmra.mxu0 %v3356
    %v3731 = vpop.f32.mrf.mxu0
    %v3732 = vadd.f32 %v3239, %v3731
    %v3733 = vpop.f32.mrf.mxu0
    %v3734 = vpop.f32.mrf.mxu0
    %v3735 = vadd.f32 %v3239, %v3734
    %v3736 = vpop.f32.mrf.mxu0
    %3737 = vmatprep.mubr.bf16.mxu0 0
    %3738 = vmatmul.mubr.bf16.gmra.mxu0 %v3359
    %v3739 = vpop.f32.mrf.mxu0
    %v3740 = vadd.f32 %v3239, %v3739
    %v3741 = vpop.f32.mrf.mxu0
    %v3742 = vpop.f32.mrf.mxu0
    %v3743 = vadd.f32 %v3239, %v3742
    %v3744 = vpop.f32.mrf.mxu0
    %3745 = vmatprep.mubr.bf16.mxu0 0
    %3746 = vmatmul.mubr.bf16.gmra.mxu0 %v3362
    %v3747 = vpop.f32.mrf.mxu0
    %v3748 = vadd.f32 %v3239, %v3747
    %v3749 = vpop.f32.mrf.mxu0
    %v3750 = vpop.f32.mrf.mxu0
    %v3751 = vadd.f32 %v3239, %v3750
    %v3752 = vpop.f32.mrf.mxu0
    %3753 = vmatprep.mubr.bf16.mxu0 0
    %3754 = vmatmul.mubr.bf16.gmra.mxu0 %v3365
    %v3755 = vpop.f32.mrf.mxu0
    %v3756 = vadd.f32 %v3239, %v3755
    %v3757 = vpop.f32.mrf.mxu0
    %v3758 = vpop.f32.mrf.mxu0
    %v3759 = vadd.f32 %v3239, %v3758
    %v3760 = vpop.f32.mrf.mxu0
    %3761 = vmatprep.mubr.bf16.mxu0 0
    %3762 = vmatmul.mubr.bf16.gmra.mxu0 %v3368
    %v3763 = vpop.f32.mrf.mxu0
    %v3764 = vadd.f32 %v3239, %v3763
    %v3765 = vpop.f32.mrf.mxu0
    %v3766 = vpop.f32.mrf.mxu0
    %v3767 = vadd.f32 %v3239, %v3766
    %v3768 = vpop.f32.mrf.mxu0
    %3769 = vmatprep.mubr.bf16.mxu0 0
    %3770 = vmatmul.mubr.bf16.gmra.mxu0 %v3371
    %v3771 = vpop.f32.mrf.mxu0
    %v3772 = vadd.f32 %v3239, %v3771
    %v3773 = vpop.f32.mrf.mxu0
    %v3774 = vpop.f32.mrf.mxu0
    %v3775 = vadd.f32 %v3239, %v3774
    %v3776 = vpop.f32.mrf.mxu0
    %3777 = vmatprep.mubr.bf16.mxu0 0
    %3778 = vmatmul.mubr.bf16.gmra.mxu0 %v3374
    %v3779 = vpop.f32.mrf.mxu0
    %v3780 = vadd.f32 %v3239, %v3779
    %v3781 = vpop.f32.mrf.mxu0
    %v3782 = vpop.f32.mrf.mxu0
    %v3783 = vadd.f32 %v3239, %v3782
    %v3784 = vpop.f32.mrf.mxu0
    %3785 = vmatprep.mubr.bf16.mxu0 0
    %3786 = vmatmul.mubr.bf16.gmra.mxu0 %v3377
    %v3787 = vpop.f32.mrf.mxu0
    %v3788 = vadd.f32 %v3239, %v3787
    %v3789 = vpop.f32.mrf.mxu0
    %v3790 = vpop.f32.mrf.mxu0
    %v3791 = vadd.f32 %v3239, %v3790
    %v3792 = vpop.f32.mrf.mxu0
    %3793 = vmatprep.mubr.bf16.mxu0 0
    %3794 = vmatmul.mubr.bf16.gmra.mxu0 %v3380
    %v3795 = vpop.f32.mrf.mxu0
    %v3796 = vadd.f32 %v3239, %v3795
    %v3797 = vpop.f32.mrf.mxu0
    %v3798 = vpop.f32.mrf.mxu0
    %v3799 = vadd.f32 %v3239, %v3798
    %v3800 = vpop.f32.mrf.mxu0
    %3801 = vmatprep.mubr.bf16.mxu0 0
    %3802 = vmatmul.mubr.bf16.gmra.mxu0 %v3383
    %v3803 = vpop.f32.mrf.mxu0
    %v3804 = vadd.f32 %v3239, %v3803
    %v3805 = vpop.f32.mrf.mxu0
    %v3806 = vpop.f32.mrf.mxu0
    %v3807 = vadd.f32 %v3239, %v3806
    %v3808 = vpop.f32.mrf.mxu0
    %3809 = vmatprep.mubr.bf16.mxu0 0
    %3810 = vmatmul.mubr.bf16.gmra.mxu0 %v3386
    %v3811 = vpop.f32.mrf.mxu0
    %v3812 = vadd.f32 %v3239, %v3811
    %v3813 = vpop.f32.mrf.mxu0
    %v3814 = vpop.f32.mrf.mxu0
    %v3815 = vadd.f32 %v3239, %v3814
    %v3816 = vpop.f32.mrf.mxu0
    %3817 = vmatprep.mubr.bf16.mxu0 0
    %3818 = vmatmul.mubr.bf16.gmra.mxu0 %v3389
    %v3819 = vpop.f32.mrf.mxu0
    %v3820 = vadd.f32 %v3239, %v3819
    %v3821 = vpop.f32.mrf.mxu0
    %v3822 = vpop.f32.mrf.mxu0
    %v3823 = vadd.f32 %v3239, %v3822
    %v3824 = vpop.f32.mrf.mxu0
    %3825 = vmatprep.mubr.bf16.mxu0 0
    %3826 = vmatmul.mubr.bf16.gmra.mxu0 %v3392
    %v3827 = vpop.f32.mrf.mxu0
    %v3828 = vadd.f32 %v3239, %v3827
    %v3829 = vpop.f32.mrf.mxu0
    %v3830 = vpop.f32.mrf.mxu0
    %v3831 = vadd.f32 %v3239, %v3830
    %v3832 = vpop.f32.mrf.mxu0
    %3833 = vmatprep.mubr.bf16.mxu0 0
    %3834 = vmatmul.mubr.bf16.gmra.mxu0 %v3395
    %v3835 = vpop.f32.mrf.mxu0
    %v3836 = vadd.f32 %v3239, %v3835
    %v3837 = vpop.f32.mrf.mxu0
    %v3838 = vpop.f32.mrf.mxu0
    %v3839 = vadd.f32 %v3239, %v3838
    %v3840 = vpop.f32.mrf.mxu0
    %3841 = vmatprep.mubr.bf16.mxu0 0
    %3842 = vmatmul.mubr.bf16.gmra.mxu0 %v3398
    %v3843 = vpop.f32.mrf.mxu0
    %v3844 = vadd.f32 %v3239, %v3843
    %v3845 = vpop.f32.mrf.mxu0
    %v3846 = vpop.f32.mrf.mxu0
    %v3847 = vadd.f32 %v3239, %v3846
    %v3848 = vpop.f32.mrf.mxu0
    %3849 = vmatprep.mubr.bf16.mxu0 0
    %3850 = vmatmul.mubr.bf16.gmra.mxu0 %v3401
    %v3851 = vpop.f32.mrf.mxu0
    %v3852 = vadd.f32 %v3239, %v3851
    %v3853 = vpop.f32.mrf.mxu0
    %v3854 = vpop.f32.mrf.mxu0
    %v3855 = vadd.f32 %v3239, %v3854
    %v3856 = vpop.f32.mrf.mxu0
    %3857 = vmatprep.mubr.bf16.mxu0 0
    %3858 = vmatmul.mubr.bf16.gmra.mxu0 %v3404
    %v3859 = vpop.f32.mrf.mxu0
    %v3860 = vadd.f32 %v3239, %v3859
    %v3861 = vpop.f32.mrf.mxu0
    %v3862 = vpop.f32.mrf.mxu0
    %v3863 = vadd.f32 %v3239, %v3862
    %v3864 = vpop.f32.mrf.mxu0
    %3865 = vmatprep.mubr.bf16.mxu0 0
    %3866 = vmatmul.mubr.bf16.gmra.mxu0 %v3407
    %v3867 = vpop.f32.mrf.mxu0
    %v3868 = vadd.f32 %v3239, %v3867
    %v3869 = vpop.f32.mrf.mxu0
    %v3870 = vpop.f32.mrf.mxu0
    %v3871 = vadd.f32 %v3239, %v3870
    %v3872 = vpop.f32.mrf.mxu0
    %3873 = vmatprep.mubr.bf16.mxu0 0
    %3874 = vmatmul.mubr.bf16.gmra.mxu0 %v3410
    %v3875 = vpop.f32.mrf.mxu0
    %v3876 = vadd.f32 %v3239, %v3875
    %v3877 = vpop.f32.mrf.mxu0
    %v3878 = vpop.f32.mrf.mxu0
    %v3879 = vadd.f32 %v3239, %v3878
    %v3880 = vpop.f32.mrf.mxu0
    %3881 = vmatprep.mubr.bf16.mxu0 0
    %3882 = vmatmul.mubr.bf16.gmra.mxu0 %v3413
    %v3883 = vpop.f32.mrf.mxu0
    %v3884 = vadd.f32 %v3239, %v3883
    %v3885 = vpop.f32.mrf.mxu0
    %v3886 = vpop.f32.mrf.mxu0
    %v3887 = vadd.f32 %v3239, %v3886
    %v3888 = vpop.f32.mrf.mxu0
    %3889 = vmatprep.mubr.bf16.mxu0 0
    %3890 = vmatmul.mubr.bf16.gmra.mxu0 %v3416
    %v3891 = vpop.f32.mrf.mxu0
    %v3892 = vadd.f32 %v3239, %v3891
    %v3893 = vpop.f32.mrf.mxu0
    %v3894 = vpop.f32.mrf.mxu0
    %v3895 = vadd.f32 %v3239, %v3894
    %v3896 = vpop.f32.mrf.mxu0
    %3897 = vmatprep.mubr.bf16.mxu0 0
    %3898 = vmatmul.mubr.bf16.gmra.mxu0 %v3419
    %v3899 = vpop.f32.mrf.mxu0
    %v3900 = vadd.f32 %v3239, %v3899
    %v3901 = vpop.f32.mrf.mxu0
    %v3902 = vpop.f32.mrf.mxu0
    %v3903 = vadd.f32 %v3239, %v3902
    %v3904 = vpop.f32.mrf.mxu0
    %3905 = vmatprep.mubr.bf16.mxu0 0
    %3906 = vmatmul.mubr.bf16.gmra.mxu0 %v3422
    %v3907 = vpop.f32.mrf.mxu0
    %v3908 = vadd.f32 %v3239, %v3907
    %v3909 = vpop.f32.mrf.mxu0
    %v3910 = vpop.f32.mrf.mxu0
    %v3911 = vadd.f32 %v3239, %v3910
    %v3912 = vpop.f32.mrf.mxu0
    %3913 = vmatprep.mubr.bf16.mxu0 0
    %3914 = vmatmul.mubr.bf16.gmra.mxu0 %v3425
    %v3915 = vpop.f32.mrf.mxu0
    %v3916 = vadd.f32 %v3239, %v3915
    %v3917 = vpop.f32.mrf.mxu0
    %v3918 = vpop.f32.mrf.mxu0
    %v3919 = vadd.f32 %v3239, %v3918
    %v3920 = vpop.f32.mrf.mxu0
    %3921 = vmatprep.mubr.bf16.mxu0 0
    %3922 = vmatmul.mubr.bf16.gmra.mxu0 %v3428
    %v3923 = vpop.f32.mrf.mxu0
    %v3924 = vadd.f32 %v3239, %v3923
    %v3925 = vpop.f32.mrf.mxu0
    %v3926 = vpop.f32.mrf.mxu0
    %v3927 = vadd.f32 %v3239, %v3926
    %v3928 = vpop.f32.mrf.mxu0
    %3929 = vmatprep.mubr.bf16.mxu0 0
    %3930 = vmatmul.mubr.bf16.gmra.mxu0 %v3431
    %v3931 = vpop.f32.mrf.mxu0
    %v3932 = vadd.f32 %v3239, %v3931
    %v3933 = vpop.f32.mrf.mxu0
    %v3934 = vpop.f32.mrf.mxu0
    %v3935 = vadd.f32 %v3239, %v3934
    %v3936 = vpop.f32.mrf.mxu0
    %3937 = vmatprep.mubr.bf16.mxu0 0
    %3938 = vmatmul.mubr.bf16.gmra.mxu0 %v3434
    %v3939 = vpop.f32.mrf.mxu0
    %v3940 = vadd.f32 %v3239, %v3939
    %v3941 = vpop.f32.mrf.mxu0
    %v3942 = vpop.f32.mrf.mxu0
    %v3943 = vadd.f32 %v3239, %v3942
    %v3944 = vpop.f32.mrf.mxu0
    %3945 = vmatprep.mubr.bf16.mxu0 0
    %3946 = vmatmul.mubr.bf16.gmra.mxu0 %v3437
    %v3947 = vpop.f32.mrf.mxu0
    %v3948 = vadd.f32 %v3239, %v3947
    %v3949 = vpop.f32.mrf.mxu0
    %v3950 = vpop.f32.mrf.mxu0
    %v3951 = vadd.f32 %v3239, %v3950
    %v3952 = vpop.f32.mrf.mxu0
    %3953 = vmatprep.mubr.bf16.mxu0 0
    %3954 = vmatmul.mubr.bf16.gmra.mxu0 %v3440
    %v3955 = vpop.f32.mrf.mxu0
    %v3956 = vadd.f32 %v3239, %v3955
    %v3957 = vpop.f32.mrf.mxu0
    %v3958 = vpop.f32.mrf.mxu0
    %v3959 = vadd.f32 %v3239, %v3958
    %v3960 = vpop.f32.mrf.mxu0
    %3961 = vmatprep.mubr.bf16.mxu0 0
    %3962 = vmatmul.mubr.bf16.gmra.mxu0 %v3443
    %v3963 = vpop.f32.mrf.mxu0
    %v3964 = vadd.f32 %v3239, %v3963
    %v3965 = vpop.f32.mrf.mxu0
    %v3966 = vpop.f32.mrf.mxu0
    %v3967 = vadd.f32 %v3239, %v3966
    %v3968 = vpop.f32.mrf.mxu0
    %3969 = vmatprep.mubr.bf16.mxu0 0
    %3970 = vmatmul.mubr.bf16.gmra.mxu0 %v3446
    %v3971 = vpop.f32.mrf.mxu0
    %v3972 = vadd.f32 %v3239, %v3971
    %v3973 = vpop.f32.mrf.mxu0
    %v3974 = vpop.f32.mrf.mxu0
    %v3975 = vadd.f32 %v3239, %v3974
    %v3976 = vpop.f32.mrf.mxu0
    %3977 = vmatprep.mubr.bf16.mxu0 0
    %3978 = vmatmul.mubr.bf16.gmra.mxu0 %v3449
    %v3979 = vpop.f32.mrf.mxu0
    %v3980 = vadd.f32 %v3239, %v3979
    %v3981 = vpop.f32.mrf.mxu0
    %v3982 = vpop.f32.mrf.mxu0
    %v3983 = vadd.f32 %v3239, %v3982
    %v3984 = vpop.f32.mrf.mxu0
    %3985 = vmatprep.mubr.bf16.mxu0 0
    %3986 = vmatmul.mubr.bf16.gmra.mxu0 %v3452
    %v3987 = vpop.f32.mrf.mxu0
    %v3988 = vadd.f32 %v3239, %v3987
    %v3989 = vpop.f32.mrf.mxu0
    %v3990 = vpop.f32.mrf.mxu0
    %v3991 = vadd.f32 %v3239, %v3990
    %v3992 = vpop.f32.mrf.mxu0
    %3993 = vmatprep.mubr.bf16.mxu0 0
    %3994 = vmatmul.mubr.bf16.gmra.mxu0 %v3455
    %v3995 = vpop.f32.mrf.mxu0
    %v3996 = vadd.f32 %v3239, %v3995
    %v3997 = vpop.f32.mrf.mxu0
    %v3998 = vpop.f32.mrf.mxu0
    %v3999 = vadd.f32 %v3239, %v3998
    %v4000 = vpop.f32.mrf.mxu0
    %4001 = vdwg.mxu0
    %4002 = vst [vmem:[#allocation7] sm:$0xff] %v3492
    %4003 = vst [vmem:[#allocation7 + $0x8] sm:$0xff] %v3495
    %4004 = vst [vmem:[#allocation7 + $0x10] sm:$0xff] %v3500
    %4005 = vst [vmem:[#allocation7 + $0x18] sm:$0xff] %v3503
    %4006 = vst [vmem:[#allocation7 + $0x20] sm:$0xff] %v3508
    %4007 = vst [vmem:[#allocation7 + $0x28] sm:$0xff] %v3511
    %4008 = vst [vmem:[#allocation7 + $0x30] sm:$0xff] %v3516
    %4009 = vst [vmem:[#allocation7 + $0x38] sm:$0xff] %v3519
    %4010 = vst [vmem:[#allocation7 + $0x40] sm:$0xff] %v3524
    %4011 = vst [vmem:[#allocation7 + $0x48] sm:$0xff] %v3527
    %4012 = vst [vmem:[#allocation7 + $0x50] sm:$0xff] %v3532
    %4013 = vst [vmem:[#allocation7 + $0x58] sm:$0xff] %v3535
    %4014 = vst [vmem:[#allocation7 + $0x60] sm:$0xff] %v3540
    %4015 = vst [vmem:[#allocation7 + $0x68] sm:$0xff] %v3543
    %4016 = vst [vmem:[#allocation7 + $0x70] sm:$0xff] %v3548
    %4017 = vst [vmem:[#allocation7 + $0x78] sm:$0xff] %v3551
    %4018 = vst [vmem:[#allocation7 + $0x80] sm:$0xff] %v3556
    %4019 = vst [vmem:[#allocation7 + $0x88] sm:$0xff] %v3559
    %4020 = vst [vmem:[#allocation7 + $0x90] sm:$0xff] %v3564
    %4021 = vst [vmem:[#allocation7 + $0x98] sm:$0xff] %v3567
    %4022 = vst [vmem:[#allocation7 + $0xa0] sm:$0xff] %v3572
    %4023 = vst [vmem:[#allocation7 + $0xa8] sm:$0xff] %v3575
    %4024 = vst [vmem:[#allocation7 + $0xb0] sm:$0xff] %v3580
    %4025 = vst [vmem:[#allocation7 + $0xb8] sm:$0xff] %v3583
    %4026 = vst [vmem:[#allocation7 + $0xc0] sm:$0xff] %v3588
    %4027 = vst [vmem:[#allocation7 + $0xc8] sm:$0xff] %v3591
    %4028 = vst [vmem:[#allocation7 + $0xd0] sm:$0xff] %v3596
    %4029 = vst [vmem:[#allocation7 + $0xd8] sm:$0xff] %v3599
    %4030 = vst [vmem:[#allocation7 + $0xe0] sm:$0xff] %v3604
    %4031 = vst [vmem:[#allocation7 + $0xe8] sm:$0xff] %v3607
    %4032 = vst [vmem:[#allocation7 + $0xf0] sm:$0xff] %v3612
    %4033 = vst [vmem:[#allocation7 + $0xf8] sm:$0xff] %v3615
    %4034 = vst [vmem:[#allocation7 + $0x100] sm:$0xff] %v3620
    %4035 = vst [vmem:[#allocation7 + $0x108] sm:$0xff] %v3623
    %4036 = vst [vmem:[#allocation7 + $0x110] sm:$0xff] %v3628
    %4037 = vst [vmem:[#allocation7 + $0x118] sm:$0xff] %v3631
    %4038 = vst [vmem:[#allocation7 + $0x120] sm:$0xff] %v3636
    %4039 = vst [vmem:[#allocation7 + $0x128] sm:$0xff] %v3639
    %4040 = vst [vmem:[#allocation7 + $0x130] sm:$0xff] %v3644
    %4041 = vst [vmem:[#allocation7 + $0x138] sm:$0xff] %v3647
    %4042 = vst [vmem:[#allocation7 + $0x140] sm:$0xff] %v3652
    %4043 = vst [vmem:[#allocation7 + $0x148] sm:$0xff] %v3655
    %4044 = vst [vmem:[#allocation7 + $0x150] sm:$0xff] %v3660
    %4045 = vst [vmem:[#allocation7 + $0x158] sm:$0xff] %v3663
    %4046 = vst [vmem:[#allocation7 + $0x160] sm:$0xff] %v3668
    %4047 = vst [vmem:[#allocation7 + $0x168] sm:$0xff] %v3671
    %4048 = vst [vmem:[#allocation7 + $0x170] sm:$0xff] %v3676
    %4049 = vst [vmem:[#allocation7 + $0x178] sm:$0xff] %v3679
    %4050 = vst [vmem:[#allocation7 + $0x180] sm:$0xff] %v3684
    %4051 = vst [vmem:[#allocation7 + $0x188] sm:$0xff] %v3687
    %4052 = vst [vmem:[#allocation7 + $0x190] sm:$0xff] %v3692
    %4053 = vst [vmem:[#allocation7 + $0x198] sm:$0xff] %v3695
    %4054 = vst [vmem:[#allocation7 + $0x1a0] sm:$0xff] %v3700
    %4055 = vst [vmem:[#allocation7 + $0x1a8] sm:$0xff] %v3703
    %4056 = vst [vmem:[#allocation7 + $0x1b0] sm:$0xff] %v3708
    %4057 = vst [vmem:[#allocation7 + $0x1b8] sm:$0xff] %v3711
    %4058 = vst [vmem:[#allocation7 + $0x1c0] sm:$0xff] %v3716
    %4059 = vst [vmem:[#allocation7 + $0x1c8] sm:$0xff] %v3719
    %4060 = vst [vmem:[#allocation7 + $0x1d0] sm:$0xff] %v3724
    %4061 = vst [vmem:[#allocation7 + $0x1d8] sm:$0xff] %v3727
    %4062 = vst [vmem:[#allocation7 + $0x1e0] sm:$0xff] %v3732
    %4063 = vst [vmem:[#allocation7 + $0x1e8] sm:$0xff] %v3735
    %4064 = vst [vmem:[#allocation7 + $0x1f0] sm:$0xff] %v3740
    %4065 = vst [vmem:[#allocation7 + $0x1f8] sm:$0xff] %v3743
    %4066 = vst [vmem:[#allocation7 + $0x200] sm:$0xff] %v3748
    %4067 = vst [vmem:[#allocation7 + $0x208] sm:$0xff] %v3751
    %4068 = vst [vmem:[#allocation7 + $0x210] sm:$0xff] %v3756
    %4069 = vst [vmem:[#allocation7 + $0x218] sm:$0xff] %v3759
    %4070 = vst [vmem:[#allocation7 + $0x220] sm:$0xff] %v3764
    %4071 = vst [vmem:[#allocation7 + $0x228] sm:$0xff] %v3767
    %4072 = vst [vmem:[#allocation7 + $0x230] sm:$0xff] %v3772
    %4073 = vst [vmem:[#allocation7 + $0x238] sm:$0xff] %v3775
    %4074 = vst [vmem:[#allocation7 + $0x240] sm:$0xff] %v3780
    %4075 = vst [vmem:[#allocation7 + $0x248] sm:$0xff] %v3783
    %4076 = vst [vmem:[#allocation7 + $0x250] sm:$0xff] %v3788
    %4077 = vst [vmem:[#allocation7 + $0x258] sm:$0xff] %v3791
    %4078 = vst [vmem:[#allocation7 + $0x260] sm:$0xff] %v3796
    %4079 = vst [vmem:[#allocation7 + $0x268] sm:$0xff] %v3799
    %4080 = vst [vmem:[#allocation7 + $0x270] sm:$0xff] %v3804
    %4081 = vst [vmem:[#allocation7 + $0x278] sm:$0xff] %v3807
    %4082 = vst [vmem:[#allocation7 + $0x280] sm:$0xff] %v3812
    %4083 = vst [vmem:[#allocation7 + $0x288] sm:$0xff] %v3815
    %4084 = vst [vmem:[#allocation7 + $0x290] sm:$0xff] %v3820
    %4085 = vst [vmem:[#allocation7 + $0x298] sm:$0xff] %v3823
    %4086 = vst [vmem:[#allocation7 + $0x2a0] sm:$0xff] %v3828
    %4087 = vst [vmem:[#allocation7 + $0x2a8] sm:$0xff] %v3831
    %4088 = vst [vmem:[#allocation7 + $0x2b0] sm:$0xff] %v3836
    %4089 = vst [vmem:[#allocation7 + $0x2b8] sm:$0xff] %v3839
    %4090 = vst [vmem:[#allocation7 + $0x2c0] sm:$0xff] %v3844
    %4091 = vst [vmem:[#allocation7 + $0x2c8] sm:$0xff] %v3847
    %4092 = vst [vmem:[#allocation7 + $0x2d0] sm:$0xff] %v3852
    %4093 = vst [vmem:[#allocation7 + $0x2d8] sm:$0xff] %v3855
    %4094 = vst [vmem:[#allocation7 + $0x2e0] sm:$0xff] %v3860
    %4095 = vst [vmem:[#allocation7 + $0x2e8] sm:$0xff] %v3863
    %4096 = vst [vmem:[#allocation7 + $0x2f0] sm:$0xff] %v3868
    %4097 = vst [vmem:[#allocation7 + $0x2f8] sm:$0xff] %v3871
    %4098 = vst [vmem:[#allocation7 + $0x300] sm:$0xff] %v3876
    %4099 = vst [vmem:[#allocation7 + $0x308] sm:$0xff] %v3879
    %4100 = vst [vmem:[#allocation7 + $0x310] sm:$0xff] %v3884
    %4101 = vst [vmem:[#allocation7 + $0x318] sm:$0xff] %v3887
    %4102 = vst [vmem:[#allocation7 + $0x320] sm:$0xff] %v3892
    %4103 = vst [vmem:[#allocation7 + $0x328] sm:$0xff] %v3895
    %4104 = vst [vmem:[#allocation7 + $0x330] sm:$0xff] %v3900
    %4105 = vst [vmem:[#allocation7 + $0x338] sm:$0xff] %v3903
    %4106 = vst [vmem:[#allocation7 + $0x340] sm:$0xff] %v3908
    %4107 = vst [vmem:[#allocation7 + $0x348] sm:$0xff] %v3911
    %4108 = vst [vmem:[#allocation7 + $0x350] sm:$0xff] %v3916
    %4109 = vst [vmem:[#allocation7 + $0x358] sm:$0xff] %v3919
    %4110 = vst [vmem:[#allocation7 + $0x360] sm:$0xff] %v3924
    %4111 = vst [vmem:[#allocation7 + $0x368] sm:$0xff] %v3927
    %4112 = vst [vmem:[#allocation7 + $0x370] sm:$0xff] %v3932
    %4113 = vst [vmem:[#allocation7 + $0x378] sm:$0xff] %v3935
    %4114 = vst [vmem:[#allocation7 + $0x380] sm:$0xff] %v3940
    %4115 = vst [vmem:[#allocation7 + $0x388] sm:$0xff] %v3943
    %4116 = vst [vmem:[#allocation7 + $0x390] sm:$0xff] %v3948
    %4117 = vst [vmem:[#allocation7 + $0x398] sm:$0xff] %v3951
    %4118 = vst [vmem:[#allocation7 + $0x3a0] sm:$0xff] %v3956
    %4119 = vst [vmem:[#allocation7 + $0x3a8] sm:$0xff] %v3959
    %4120 = vst [vmem:[#allocation7 + $0x3b0] sm:$0xff] %v3964
    %4121 = vst [vmem:[#allocation7 + $0x3b8] sm:$0xff] %v3967
    %4122 = vst [vmem:[#allocation7 + $0x3c0] sm:$0xff] %v3972
    %4123 = vst [vmem:[#allocation7 + $0x3c8] sm:$0xff] %v3975
    %4124 = vst [vmem:[#allocation7 + $0x3d0] sm:$0xff] %v3980
    %4125 = vst [vmem:[#allocation7 + $0x3d8] sm:$0xff] %v3983
    %4126 = vst [vmem:[#allocation7 + $0x3e0] sm:$0xff] %v3988
    %4127 = vst [vmem:[#allocation7 + $0x3e8] sm:$0xff] %v3991
    %4128 = vst [vmem:[#allocation7 + $0x3f0] sm:$0xff] %v3996
    %4129 = vst [vmem:[#allocation7 + $0x3f8] sm:$0xff] %v3999
    // Predicated region
    $region50: #{tpu_custom_call.1} parent=1 // pred_check
      _
    $region51: #{tpu_custom_call.1} parent=1 // pred_check_branch
      %4131 = sbr.rel (0) target = $region53
    $region52: #{tpu_custom_call.1} parent=1 // pred_region
      %s4133 = ssub.s32 128, 128
      %4134 = vsyncadd [#allocation5], %s4133
      %s4136 = sshll.u32 [#allocation6], 4
      %s4137 = int_to_ptr.vmem [resolvable:$true] %s4136
      %4139 = dma.vmem_to_hbm [thread:$0]  %s4137, 128, %s11, [#allocation5]
    $region53: #{tpu_custom_call.1} parent=1 // pred_fallthru
      _
    // Predicated region
    $region54: #{tpu_custom_call.1} parent=1 // pred_check
      _
    $region55: #{tpu_custom_call.1} parent=1 // pred_check_branch
      %4141 = sbr.rel (0) target = $region57
    $region56: #{tpu_custom_call.1} parent=1 // pred_region
      %s4143 = ssub.s32 16384, 16384
      %4144 = vsyncadd [#allocation8], %s4143
      %s4145 = sshll.u32 [#allocation7], 4
      %s4146 = int_to_ptr.vmem [resolvable:$true] %s4145
      %4151 = dma.vmem_to_hbm [thread:$0]  %s4146, 16384, %s12, [#allocation8], 128, 128, 8
    $region57: #{tpu_custom_call.1} parent=1 // pred_fallthru
      _
    // Predicated region
    $region58: #{tpu_custom_call.1} parent=1 // pred_check
      _
    $region59: #{tpu_custom_call.1} parent=1 // pred_check_branch
      %4153 = sbr.rel (0) target = $region61
    $region60: #{tpu_custom_call.1} parent=1 // pred_region
      %4154 = dma.done [#allocation5], 128
    $region61: #{tpu_custom_call.1} parent=1 // pred_fallthru
      _
    // Predicated region
    $region62: #{tpu_custom_call.1} parent=1 // pred_check
      _
    $region63: #{tpu_custom_call.1} parent=1 // pred_check_branch
      %4156 = sbr.rel (0) target = $region65
    $region64: #{tpu_custom_call.1} parent=1 // pred_region
      %4157 = dma.done [#allocation8], 16384
    $region65: #{tpu_custom_call.1} parent=1 // pred_fallthru
      _
    %4158 = vsyncpa [#allocation4], 1
    %4159 = vsyncpa [#allocation5], 1
    %4160 = vsyncpa [#allocation8], 1

</llo_original>
